<compile_context>
chip_gen: v7x
topology: tpu7x:2x2x1
jax: 0.10.0
libtpu: 0.0.40
codegen_flags: <defaults>
</compile_context>

<pallas_src>
import functools

import jax
import jax.numpy as jnp
from jax.experimental import pallas as pl
from jax.experimental.pallas import tpu as pltpu


# ----------------------------- configuration -----------------------------
FINAL_DIM = 8      # stage in/out channels
INTERM_DIM = 32    # DilatedResidualLayer channels
NUM_LAYERS = 10    # dilations 1, 2, 4, ..., 2**9
BATCH = 2
SEQ_LEN = 16       # T


# ------------------------------ Pallas kernel -----------------------------
def refinement_kernel(x_ref, win_ref, bin_ref,
                      wdn_ref, bdn_ref, w1n_ref, b1n_ref,
                      wdf_ref, bdf_ref, w1f_ref, b1f_ref,
                      wout_ref, bout_ref, o_ref, *,
                      seq_len, interm_dim, near_dilations, num_far):
    """Whole problem in one invocation; time-minor layout (channels, B*T).

    Shapes seen by the kernel (weights bf16, everything else f32):
      x_ref    : (FINAL, rows)
      win_ref  : (INTERM, FINAL)            bin_ref : (INTERM, 1)
      wdn_ref  : (Ln, 3*INTERM, INTERM)     bdn_ref : (Ln, INTERM, 1)
      w1n_ref  : (Ln, INTERM, INTERM)       b1n_ref : (Ln, INTERM, 1)
      wdf_ref  : (Lf, INTERM, INTERM)       bdf_ref : (Lf, INTERM, 1)
      w1f_ref  : (Lf, INTERM, INTERM)       b1f_ref : (Lf, INTERM, 1)
      wout_ref : (FINAL, INTERM)            bout_ref: (FINAL, 1)
      o_ref    : (FINAL, rows)
    """
    rows = x_ref.shape[1]
    bf16 = jnp.bfloat16
    # Position of each lane inside its own sequence. Batch boundaries coincide
    # with sequence boundaries in the folded (C, B*T) layout, so one lane mask
    # handles both the conv zero padding and cross-batch isolation of rolls.
    t_idx = jax.lax.broadcasted_iota(jnp.int32, (1, rows), 1) % seq_len

    # conv_1x1 input projection (1x1 conv == channel matmul).
    f = jnp.dot(win_ref[...], x_ref[...].astype(bf16),
                preferred_element_type=jnp.float32) + bin_ref[...]

    # ---- DilatedResidualLayer blocks with dilation < T (all three taps) ----
    for li, d in enumerate(near_dilations):
        # One fused matmul for taps [t-d, t, t+d]: (96, 32) @ (32, rows).
        p = jnp.dot(wdn_ref[li], f.astype(bf16),
                    preferred_element_type=jnp.float32)
        p_l = p[:interm_dim]
        p_c = p[interm_dim:2 * interm_dim]
        p_r = p[2 * interm_dim:]
        # conv[t] = Wl@f[t-d] + Wc@f[t] + Wr@f[t+d]: shift the *outputs* along
        # the lane axis with XLU rolls and zero lanes that crossed a sequence
        # boundary.
        left = jnp.where(t_idx >= d,
                         pltpu.roll(p_l, shift=d, axis=1), 0.0)
        right = jnp.where(t_idx < seq_len - d,
                          pltpu.roll(p_r, shift=rows - d, axis=1), 0.0)
        h = jnp.maximum(p_c + left + right + bdn_ref[li], 0.0)      # ReLU
        out = jnp.dot(w1n_ref[li], h.astype(bf16),
                      preferred_element_type=jnp.float32) + b1n_ref[li]
        f = f + out     # Dropout (eval) == identity; residual connection.

    # ---- blocks with dilation >= T: side taps only ever see zero padding ----
    for li in range(num_far):
        h = jnp.maximum(
            jnp.dot(wdf_ref[li], f.astype(bf16),
                    preferred_element_type=jnp.float32) + bdf_ref[li], 0.0)
        out = jnp.dot(w1f_ref[li], h.astype(bf16),
                      preferred_element_type=jnp.float32) + b1f_ref[li]
        f = f + out

    # conv_out output projection.
    y = jnp.dot(wout_ref[...], f.astype(bf16),
                preferred_element_type=jnp.float32) + bout_ref[...]
    o_ref[...] = y.astype(o_ref.dtype)


# ------------------------------- wrapper ----------------------------------
def refinement_pallas(x_nct, params):
    """x_nct: (B, C=FINAL_DIM, T), PyTorch Conv1d input layout."""
    b, c, t = x_nct.shape
    assert c == FINAL_DIM and t == SEQ_LEN
    rows = b * t
    # Lane-dense, time-minor layout: (B, C, T) -> (C, B*T); lane = b*T + t,
    # so batch boundaries align with sequence boundaries (required by the
    # in-kernel roll masks).
    x2d = jnp.transpose(x_nct, (1, 0, 2)).reshape(c, rows)

    win, bin_, wd, bd, w1, b1, wout, bout = params
    n_near = sum(1 for i in range(NUM_LAYERS) if 2 ** i < t)
    near_dilations = tuple(2 ** i for i in range(n_near))
    n_far = NUM_LAYERS - n_near

    bf16 = jnp.bfloat16
    # Near layers: fuse the 3 taps into one (3*OUT, IN) weight per layer.
    wd_near = jnp.concatenate(
        [wd[:n_near, 0], wd[:n_near, 1], wd[:n_near, 2]], axis=1).astype(bf16)
    # Far layers (dilation >= T): only the center tap ever touches data,
    # so left/right tap weights are never copied to VMEM.
    wd_far = wd[n_near:, 1].astype(bf16)

    kern = functools.partial(
        refinement_kernel, seq_len=t, interm_dim=INTERM_DIM,
        near_dilations=near_dilations, num_far=n_far)

    vmem = pl.BlockSpec(memory_space=pltpu.MemorySpace.VMEM)

    # Single invocation, everything (~100 KB) resident in VMEM: no grid.
    # TODO(synk): at realistic MS-TCN T (1000s), add a "parallel" grid axis
    # over B*T lane tiles (tile along batch, or with a halo of the max near
    # dilation, so rolls never cross a tile boundary), keep weights resident
    # via constant-index BlockSpecs, size the tile plus
    # pltpu.CompilerParams(vmem_limit_bytes=...) against v7x's 64 MiB VMEM,
    # and raise pipeline depth (pl.Buffered(3)) if activation DMA is exposed.
    out2d = pl.pallas_call(
        kern,
        out_shape=jax.ShapeDtypeStruct((FINAL_DIM, rows), jnp.float32),
        in_specs=[vmem] * 13,
        out_specs=vmem,
    )(x2d, win.astype(bf16), bin_, wd_near, bd[:n_near],
      w1[:n_near].astype(bf16), b1[:n_near],
      wd_far, bd[n_near:], w1[n_near:].astype(bf16), b1[n_near:],
      wout.astype(bf16), bout)

    # (C, B*T) -> (B, C, T)
    return jnp.transpose(out2d.reshape(c, b, t), (1, 0, 2))


# ------------------------- parameter construction -------------------------
def make_params(key):
    """Deterministic synthetic parameters in the torch-like (out, in) layout."""
    ks = jax.random.split(key, 8)
    scale = 0.1
    # conv_1x1 (input projection): torch weight (INTERM, FINAL, 1) -> (INTERM, FINAL)
    win = scale * jax.random.normal(ks[0], (INTERM_DIM, FINAL_DIM), jnp.float32)
    bin_ = scale * jax.random.normal(ks[1], (INTERM_DIM, 1), jnp.float32)
    # dilated convs: torch weight (OUT, IN, 3) -> (L, tap, OUT, IN)
    wd = scale * jax.random.normal(
        ks[2], (NUM_LAYERS, 3, INTERM_DIM, INTERM_DIM), jnp.float32)
    bd = scale * jax.random.normal(ks[3], (NUM_LAYERS, INTERM_DIM, 1), jnp.float32)
    # per-layer 1x1 convs: (OUT, IN, 1) -> (L, OUT, IN)
    w1 = scale * jax.random.normal(
        ks[4], (NUM_LAYERS, INTERM_DIM, INTERM_DIM), jnp.float32)
    b1 = scale * jax.random.normal(ks[5], (NUM_LAYERS, INTERM_DIM, 1), jnp.float32)
    # conv_out: (FINAL, INTERM, 1) -> (FINAL, INTERM)
    wout = scale * jax.random.normal(ks[6], (FINAL_DIM, INTERM_DIM), jnp.float32)
    bout = scale * jax.random.normal(ks[7], (FINAL_DIM, 1), jnp.float32)
    return win, bin_, wd, bd, w1, b1, wout, bout


# --------------------------- pure-JAX reference ----------------------------
def conv1d_ref(x_btc, w_kio, b_c1, dilation, padding):
    """x: (B, T, Cin); w: (k, Cin, Cout); b: (Cout, 1). Replicates torch Conv1d."""
    y = jax.lax.conv_general_dilated(
        x_btc, w_kio, window_strides=(1,), padding=[(padding, padding)],
        rhs_dilation=(dilation,), dimension_numbers=("NWC", "WIO", "NWC"))
    return y + b_c1[:, 0]


def refinement_ref(x_nct, params):
    win, bin_, wd, bd, w1, b1, wout, bout = params
    x = jnp.transpose(x_nct, (0, 2, 1))  # (B, T, C)
    f = conv1d_ref(x, jnp.transpose(win)[None], bin_, dilation=1, padding=0)
    for i in range(NUM_LAYERS):
        d = 2 ** i
        # DilatedResidualLayer.forward: x + dropout(conv_1x1(relu(conv_dilated(x))))
        h = jax.nn.relu(conv1d_ref(f, jnp.transpose(wd[i], (0, 2, 1)), bd[i],
                                   dilation=d, padding=d))
        out = conv1d_ref(h, jnp.transpose(w1[i])[None], b1[i],
                         dilation=1, padding=0)
        f = f + out
    y = conv1d_ref(f, jnp.transpose(wout)[None], bout, dilation=1, padding=0)
    return jnp.transpose(y, (0, 2, 1))


# --------------------------------- main ------------------------------------
if __name__ == "__main__":
    key = jax.random.PRNGKey(0)
    k_x, k_p = jax.random.split(key)
    # PyTorch Conv1d input layout: (N, C, T)
    x = jax.random.normal(k_x, (BATCH, FINAL_DIM, SEQ_LEN), jnp.float32)
    params = make_params(k_p)

    out = jax.block_until_ready(refinement_pallas(x, params))
    ref = jax.block_until_ready(refinement_ref(x, params))

    assert out.shape == (BATCH, FINAL_DIM, SEQ_LEN)
    # bf16 MXU operands (f32 accumulation) => loosened tolerance vs f32 ref.
    max_err = float(jnp.max(jnp.abs(out - ref)))
    assert jnp.allclose(out, ref, atol=2e-2, rtol=2e-2), max_err

    print("KERNEL_OK")
</pallas_src>

<mosaic_0001>
module attributes {stable_mosaic.version = 11 : i64} {
  func.func @refinement_kernel(%arg0: memref<8x32xf32, #tpu.memory_space<vmem>>, %arg1: memref<32x8xbf16, #tpu.memory_space<vmem>>, %arg2: memref<32x1xf32, #tpu.memory_space<vmem>>, %arg3: memref<4x96x32xbf16, #tpu.memory_space<vmem>>, %arg4: memref<4x32x1xf32, #tpu.memory_space<vmem>>, %arg5: memref<4x32x32xbf16, #tpu.memory_space<vmem>>, %arg6: memref<4x32x1xf32, #tpu.memory_space<vmem>>, %arg7: memref<6x32x32xbf16, #tpu.memory_space<vmem>>, %arg8: memref<6x32x1xf32, #tpu.memory_space<vmem>>, %arg9: memref<6x32x32xbf16, #tpu.memory_space<vmem>>, %arg10: memref<6x32x1xf32, #tpu.memory_space<vmem>>, %arg11: memref<8x32xbf16, #tpu.memory_space<vmem>>, %arg12: memref<8x1xf32, #tpu.memory_space<vmem>>, %arg13: memref<8x32xf32, #tpu.memory_space<vmem>>) attributes {dimension_semantics = [], scalar_prefetch = 0 : i64, scratch_operands = 0 : i64, tpu.core_type = #tpu.core_type<tc>} {
    %0 = tpu.iota {dimensions = array<i32: 1>} : vector<1x32xi32>
    %c16_i32 = arith.constant 16 : i32
    %c0_i32 = arith.constant 0 : i32
    %1 = arith.cmpi eq, %c16_i32, %c0_i32 : i32
    %c1_i32 = arith.constant 1 : i32
    %2 = arith.select %1, %c1_i32, %c16_i32 : i32
    %3 = vector.broadcast %2 : i32 to vector<1x32xi32>
    %4 = arith.remsi %0, %3 : vector<1x32xi32>
    %c0_i32_0 = arith.constant 0 : i32
    %5 = vector.broadcast %c0_i32_0 : i32 to vector<1x32xi32>
    %6 = arith.cmpi ne, %4, %5 : vector<1x32xi32>
    %c0_i32_1 = arith.constant 0 : i32
    %7 = vector.broadcast %c0_i32_1 : i32 to vector<1x32xi32>
    %8 = arith.cmpi slt, %4, %7 : vector<1x32xi32>
    %c0_i32_2 = arith.constant 0 : i32
    %9 = arith.cmpi slt, %2, %c0_i32_2 : i32
    %10 = vector.broadcast %9 : i1 to vector<1x32xi1>
    %11 = vector.broadcast %10 : vector<1x32xi1> to vector<1x32xi1>
    %12 = arith.xori %8, %11 : vector<1x32xi1>
    %13 = arith.andi %12, %6 : vector<1x32xi1>
    %14 = vector.broadcast %2 : i32 to vector<1x32xi32>
    %15 = arith.addi %4, %14 : vector<1x32xi32>
    %16 = arith.select %13, %15, %4 : vector<1x32xi1>, vector<1x32xi32>
    %c0 = arith.constant 0 : index
    %c0_3 = arith.constant 0 : index
    %17 = vector.load %arg1[%c0, %c0_3] : memref<32x8xbf16, #tpu.memory_space<vmem>>, vector<32x8xbf16>
    %c0_4 = arith.constant 0 : index
    %c0_5 = arith.constant 0 : index
    %18 = vector.load %arg0[%c0_4, %c0_5] : memref<8x32xf32, #tpu.memory_space<vmem>>, vector<8x32xf32>
    %19 = arith.truncf %18 : vector<8x32xf32> to vector<8x32xbf16>
    %cst = arith.constant dense<0.000000e+00> : vector<32x32xf32>
    %20 = tpu.matmul %17, %19, %cst {dimension_numbers = #tpu.dot_dimension_numbers<[1], [0], [0], [1], [0, 0, 1, 1], [], []>} : vector<32x8xbf16>, vector<8x32xbf16>, vector<32x32xf32> -> vector<32x32xf32>
    %c0_6 = arith.constant 0 : index
    %c0_7 = arith.constant 0 : index
    %21 = vector.load %arg2[%c0_6, %c0_7] : memref<32x1xf32, #tpu.memory_space<vmem>>, vector<32x1xf32>
    %22 = vector.broadcast %21 : vector<32x1xf32> to vector<32x32xf32>
    %23 = arith.addf %20, %22 : vector<32x32xf32>
    %c0_8 = arith.constant 0 : index
    %c0_9 = arith.constant 0 : index
    %c0_10 = arith.constant 0 : index
    %24 = vector.load %arg3[%c0_8, %c0_9, %c0_10] : memref<4x96x32xbf16, #tpu.memory_space<vmem>>, vector<1x96x32xbf16>
    %25 = vector.shape_cast %24 : vector<1x96x32xbf16> to vector<96x32xbf16>
    %26 = arith.truncf %23 : vector<32x32xf32> to vector<32x32xbf16>
    %cst_11 = arith.constant dense<0.000000e+00> : vector<96x32xf32>
    %27 = tpu.matmul %25, %26, %cst_11 {dimension_numbers = #tpu.dot_dimension_numbers<[1], [0], [0], [1], [0, 0, 1, 1], [], []>} : vector<96x32xbf16>, vector<32x32xbf16>, vector<96x32xf32> -> vector<96x32xf32>
    %28 = vector.extract_strided_slice %27 {offsets = [0, 0], sizes = [32, 32], strides = [1, 1]} : vector<96x32xf32> to vector<32x32xf32>
    %29 = vector.extract_strided_slice %27 {offsets = [32, 0], sizes = [32, 32], strides = [1, 1]} : vector<96x32xf32> to vector<32x32xf32>
    %30 = vector.extract_strided_slice %27 {offsets = [64, 0], sizes = [32, 32], strides = [1, 1]} : vector<96x32xf32> to vector<32x32xf32>
    %c1_i32_12 = arith.constant 1 : i32
    %31 = vector.broadcast %c1_i32_12 : i32 to vector<1x32xi32>
    %32 = arith.cmpi sge, %16, %31 : vector<1x32xi32>
    %c1_i32_13 = arith.constant 1 : i32
    %33 = tpu.dynamic_rotate %28 by %c1_i32_13 dim 1 : vector<32x32xf32>, i32 -> vector<32x32xf32>
    %cst_14 = arith.constant 0.000000e+00 : f32
    %34 = vector.shape_cast %32 : vector<1x32xi1> to vector<1x32xi1>
    %35 = vector.broadcast %34 : vector<1x32xi1> to vector<32x32xi1>
    %36 = vector.broadcast %cst_14 : f32 to vector<32x32xf32>
    %37 = arith.select %35, %33, %36 : vector<32x32xi1>, vector<32x32xf32>
    %c15_i32 = arith.constant 15 : i32
    %38 = vector.broadcast %c15_i32 : i32 to vector<1x32xi32>
    %39 = arith.cmpi slt, %16, %38 : vector<1x32xi32>
    %c31_i32 = arith.constant 31 : i32
    %40 = tpu.dynamic_rotate %30 by %c31_i32 dim 1 : vector<32x32xf32>, i32 -> vector<32x32xf32>
    %cst_15 = arith.constant 0.000000e+00 : f32
    %41 = vector.shape_cast %39 : vector<1x32xi1> to vector<1x32xi1>
    %42 = vector.broadcast %41 : vector<1x32xi1> to vector<32x32xi1>
    %43 = vector.broadcast %cst_15 : f32 to vector<32x32xf32>
    %44 = arith.select %42, %40, %43 : vector<32x32xi1>, vector<32x32xf32>
    %45 = arith.addf %29, %37 : vector<32x32xf32>
    %46 = arith.addf %45, %44 : vector<32x32xf32>
    %c0_16 = arith.constant 0 : index
    %c0_17 = arith.constant 0 : index
    %c0_18 = arith.constant 0 : index
    %47 = vector.load %arg4[%c0_16, %c0_17, %c0_18] : memref<4x32x1xf32, #tpu.memory_space<vmem>>, vector<1x32x1xf32>
    %48 = vector.shape_cast %47 : vector<1x32x1xf32> to vector<32x1xf32>
    %49 = vector.broadcast %48 : vector<32x1xf32> to vector<32x32xf32>
    %50 = arith.addf %46, %49 : vector<32x32xf32>
    %cst_19 = arith.constant 0.000000e+00 : f32
    %51 = vector.broadcast %cst_19 : f32 to vector<32x32xf32>
    %52 = arith.maximumf %50, %51 : vector<32x32xf32>
    %c0_20 = arith.constant 0 : index
    %c0_21 = arith.constant 0 : index
    %c0_22 = arith.constant 0 : index
    %53 = vector.load %arg5[%c0_20, %c0_21, %c0_22] : memref<4x32x32xbf16, #tpu.memory_space<vmem>>, vector<1x32x32xbf16>
    %54 = vector.shape_cast %53 : vector<1x32x32xbf16> to vector<32x32xbf16>
    %55 = arith.truncf %52 : vector<32x32xf32> to vector<32x32xbf16>
    %cst_23 = arith.constant dense<0.000000e+00> : vector<32x32xf32>
    %56 = tpu.matmul %54, %55, %cst_23 {dimension_numbers = #tpu.dot_dimension_numbers<[1], [0], [0], [1], [0, 0, 1, 1], [], []>} : vector<32x32xbf16>, vector<32x32xbf16>, vector<32x32xf32> -> vector<32x32xf32>
    %c0_24 = arith.constant 0 : index
    %c0_25 = arith.constant 0 : index
    %c0_26 = arith.constant 0 : index
    %57 = vector.load %arg6[%c0_24, %c0_25, %c0_26] : memref<4x32x1xf32, #tpu.memory_space<vmem>>, vector<1x32x1xf32>
    %58 = vector.shape_cast %57 : vector<1x32x1xf32> to vector<32x1xf32>
    %59 = vector.broadcast %58 : vector<32x1xf32> to vector<32x32xf32>
    %60 = arith.addf %56, %59 : vector<32x32xf32>
    %61 = arith.addf %23, %60 : vector<32x32xf32>
    %c1 = arith.constant 1 : index
    %c0_27 = arith.constant 0 : index
    %c0_28 = arith.constant 0 : index
    %62 = vector.load %arg3[%c1, %c0_27, %c0_28] : memref<4x96x32xbf16, #tpu.memory_space<vmem>>, vector<1x96x32xbf16>
    %63 = vector.shape_cast %62 : vector<1x96x32xbf16> to vector<96x32xbf16>
    %64 = arith.truncf %61 : vector<32x32xf32> to vector<32x32xbf16>
    %cst_29 = arith.constant dense<0.000000e+00> : vector<96x32xf32>
    %65 = tpu.matmul %63, %64, %cst_29 {dimension_numbers = #tpu.dot_dimension_numbers<[1], [0], [0], [1], [0, 0, 1, 1], [], []>} : vector<96x32xbf16>, vector<32x32xbf16>, vector<96x32xf32> -> vector<96x32xf32>
    %66 = vector.extract_strided_slice %65 {offsets = [0, 0], sizes = [32, 32], strides = [1, 1]} : vector<96x32xf32> to vector<32x32xf32>
    %67 = vector.extract_strided_slice %65 {offsets = [32, 0], sizes = [32, 32], strides = [1, 1]} : vector<96x32xf32> to vector<32x32xf32>
    %68 = vector.extract_strided_slice %65 {offsets = [64, 0], sizes = [32, 32], strides = [1, 1]} : vector<96x32xf32> to vector<32x32xf32>
    %c2_i32 = arith.constant 2 : i32
    %69 = vector.broadcast %c2_i32 : i32 to vector<1x32xi32>
    %70 = arith.cmpi sge, %16, %69 : vector<1x32xi32>
    %c2_i32_30 = arith.constant 2 : i32
    %71 = tpu.dynamic_rotate %66 by %c2_i32_30 dim 1 : vector<32x32xf32>, i32 -> vector<32x32xf32>
    %cst_31 = arith.constant 0.000000e+00 : f32
    %72 = vector.shape_cast %70 : vector<1x32xi1> to vector<1x32xi1>
    %73 = vector.broadcast %72 : vector<1x32xi1> to vector<32x32xi1>
    %74 = vector.broadcast %cst_31 : f32 to vector<32x32xf32>
    %75 = arith.select %73, %71, %74 : vector<32x32xi1>, vector<32x32xf32>
    %c14_i32 = arith.constant 14 : i32
    %76 = vector.broadcast %c14_i32 : i32 to vector<1x32xi32>
    %77 = arith.cmpi slt, %16, %76 : vector<1x32xi32>
    %c30_i32 = arith.constant 30 : i32
    %78 = tpu.dynamic_rotate %68 by %c30_i32 dim 1 : vector<32x32xf32>, i32 -> vector<32x32xf32>
    %cst_32 = arith.constant 0.000000e+00 : f32
    %79 = vector.shape_cast %77 : vector<1x32xi1> to vector<1x32xi1>
    %80 = vector.broadcast %79 : vector<1x32xi1> to vector<32x32xi1>
    %81 = vector.broadcast %cst_32 : f32 to vector<32x32xf32>
    %82 = arith.select %80, %78, %81 : vector<32x32xi1>, vector<32x32xf32>
    %83 = arith.addf %67, %75 : vector<32x32xf32>
    %84 = arith.addf %83, %82 : vector<32x32xf32>
    %c1_33 = arith.constant 1 : index
    %c0_34 = arith.constant 0 : index
    %c0_35 = arith.constant 0 : index
    %85 = vector.load %arg4[%c1_33, %c0_34, %c0_35] : memref<4x32x1xf32, #tpu.memory_space<vmem>>, vector<1x32x1xf32>
    %86 = vector.shape_cast %85 : vector<1x32x1xf32> to vector<32x1xf32>
    %87 = vector.broadcast %86 : vector<32x1xf32> to vector<32x32xf32>
    %88 = arith.addf %84, %87 : vector<32x32xf32>
    %cst_36 = arith.constant 0.000000e+00 : f32
    %89 = vector.broadcast %cst_36 : f32 to vector<32x32xf32>
    %90 = arith.maximumf %88, %89 : vector<32x32xf32>
    %c1_37 = arith.constant 1 : index
    %c0_38 = arith.constant 0 : index
    %c0_39 = arith.constant 0 : index
    %91 = vector.load %arg5[%c1_37, %c0_38, %c0_39] : memref<4x32x32xbf16, #tpu.memory_space<vmem>>, vector<1x32x32xbf16>
    %92 = vector.shape_cast %91 : vector<1x32x32xbf16> to vector<32x32xbf16>
    %93 = arith.truncf %90 : vector<32x32xf32> to vector<32x32xbf16>
    %cst_40 = arith.constant dense<0.000000e+00> : vector<32x32xf32>
    %94 = tpu.matmul %92, %93, %cst_40 {dimension_numbers = #tpu.dot_dimension_numbers<[1], [0], [0], [1], [0, 0, 1, 1], [], []>} : vector<32x32xbf16>, vector<32x32xbf16>, vector<32x32xf32> -> vector<32x32xf32>
    %c1_41 = arith.constant 1 : index
    %c0_42 = arith.constant 0 : index
    %c0_43 = arith.constant 0 : index
    %95 = vector.load %arg6[%c1_41, %c0_42, %c0_43] : memref<4x32x1xf32, #tpu.memory_space<vmem>>, vector<1x32x1xf32>
    %96 = vector.shape_cast %95 : vector<1x32x1xf32> to vector<32x1xf32>
    %97 = vector.broadcast %96 : vector<32x1xf32> to vector<32x32xf32>
    %98 = arith.addf %94, %97 : vector<32x32xf32>
    %99 = arith.addf %61, %98 : vector<32x32xf32>
    %c2 = arith.constant 2 : index
    %c0_44 = arith.constant 0 : index
    %c0_45 = arith.constant 0 : index
    %100 = vector.load %arg3[%c2, %c0_44, %c0_45] : memref<4x96x32xbf16, #tpu.memory_space<vmem>>, vector<1x96x32xbf16>
    %101 = vector.shape_cast %100 : vector<1x96x32xbf16> to vector<96x32xbf16>
    %102 = arith.truncf %99 : vector<32x32xf32> to vector<32x32xbf16>
    %cst_46 = arith.constant dense<0.000000e+00> : vector<96x32xf32>
    %103 = tpu.matmul %101, %102, %cst_46 {dimension_numbers = #tpu.dot_dimension_numbers<[1], [0], [0], [1], [0, 0, 1, 1], [], []>} : vector<96x32xbf16>, vector<32x32xbf16>, vector<96x32xf32> -> vector<96x32xf32>
    %104 = vector.extract_strided_slice %103 {offsets = [0, 0], sizes = [32, 32], strides = [1, 1]} : vector<96x32xf32> to vector<32x32xf32>
    %105 = vector.extract_strided_slice %103 {offsets = [32, 0], sizes = [32, 32], strides = [1, 1]} : vector<96x32xf32> to vector<32x32xf32>
    %106 = vector.extract_strided_slice %103 {offsets = [64, 0], sizes = [32, 32], strides = [1, 1]} : vector<96x32xf32> to vector<32x32xf32>
    %c4_i32 = arith.constant 4 : i32
    %107 = vector.broadcast %c4_i32 : i32 to vector<1x32xi32>
    %108 = arith.cmpi sge, %16, %107 : vector<1x32xi32>
    %c4_i32_47 = arith.constant 4 : i32
    %109 = tpu.dynamic_rotate %104 by %c4_i32_47 dim 1 : vector<32x32xf32>, i32 -> vector<32x32xf32>
    %cst_48 = arith.constant 0.000000e+00 : f32
    %110 = vector.shape_cast %108 : vector<1x32xi1> to vector<1x32xi1>
    %111 = vector.broadcast %110 : vector<1x32xi1> to vector<32x32xi1>
    %112 = vector.broadcast %cst_48 : f32 to vector<32x32xf32>
    %113 = arith.select %111, %109, %112 : vector<32x32xi1>, vector<32x32xf32>
    %c12_i32 = arith.constant 12 : i32
    %114 = vector.broadcast %c12_i32 : i32 to vector<1x32xi32>
    %115 = arith.cmpi slt, %16, %114 : vector<1x32xi32>
    %c28_i32 = arith.constant 28 : i32
    %116 = tpu.dynamic_rotate %106 by %c28_i32 dim 1 : vector<32x32xf32>, i32 -> vector<32x32xf32>
    %cst_49 = arith.constant 0.000000e+00 : f32
    %117 = vector.shape_cast %115 : vector<1x32xi1> to vector<1x32xi1>
    %118 = vector.broadcast %117 : vector<1x32xi1> to vector<32x32xi1>
    %119 = vector.broadcast %cst_49 : f32 to vector<32x32xf32>
    %120 = arith.select %118, %116, %119 : vector<32x32xi1>, vector<32x32xf32>
    %121 = arith.addf %105, %113 : vector<32x32xf32>
    %122 = arith.addf %121, %120 : vector<32x32xf32>
    %c2_50 = arith.constant 2 : index
    %c0_51 = arith.constant 0 : index
    %c0_52 = arith.constant 0 : index
    %123 = vector.load %arg4[%c2_50, %c0_51, %c0_52] : memref<4x32x1xf32, #tpu.memory_space<vmem>>, vector<1x32x1xf32>
    %124 = vector.shape_cast %123 : vector<1x32x1xf32> to vector<32x1xf32>
    %125 = vector.broadcast %124 : vector<32x1xf32> to vector<32x32xf32>
    %126 = arith.addf %122, %125 : vector<32x32xf32>
    %cst_53 = arith.constant 0.000000e+00 : f32
    %127 = vector.broadcast %cst_53 : f32 to vector<32x32xf32>
    %128 = arith.maximumf %126, %127 : vector<32x32xf32>
    %c2_54 = arith.constant 2 : index
    %c0_55 = arith.constant 0 : index
    %c0_56 = arith.constant 0 : index
    %129 = vector.load %arg5[%c2_54, %c0_55, %c0_56] : memref<4x32x32xbf16, #tpu.memory_space<vmem>>, vector<1x32x32xbf16>
    %130 = vector.shape_cast %129 : vector<1x32x32xbf16> to vector<32x32xbf16>
    %131 = arith.truncf %128 : vector<32x32xf32> to vector<32x32xbf16>
    %cst_57 = arith.constant dense<0.000000e+00> : vector<32x32xf32>
    %132 = tpu.matmul %130, %131, %cst_57 {dimension_numbers = #tpu.dot_dimension_numbers<[1], [0], [0], [1], [0, 0, 1, 1], [], []>} : vector<32x32xbf16>, vector<32x32xbf16>, vector<32x32xf32> -> vector<32x32xf32>
    %c2_58 = arith.constant 2 : index
    %c0_59 = arith.constant 0 : index
    %c0_60 = arith.constant 0 : index
    %133 = vector.load %arg6[%c2_58, %c0_59, %c0_60] : memref<4x32x1xf32, #tpu.memory_space<vmem>>, vector<1x32x1xf32>
    %134 = vector.shape_cast %133 : vector<1x32x1xf32> to vector<32x1xf32>
    %135 = vector.broadcast %134 : vector<32x1xf32> to vector<32x32xf32>
    %136 = arith.addf %132, %135 : vector<32x32xf32>
    %137 = arith.addf %99, %136 : vector<32x32xf32>
    %c3 = arith.constant 3 : index
    %c0_61 = arith.constant 0 : index
    %c0_62 = arith.constant 0 : index
    %138 = vector.load %arg3[%c3, %c0_61, %c0_62] : memref<4x96x32xbf16, #tpu.memory_space<vmem>>, vector<1x96x32xbf16>
    %139 = vector.shape_cast %138 : vector<1x96x32xbf16> to vector<96x32xbf16>
    %140 = arith.truncf %137 : vector<32x32xf32> to vector<32x32xbf16>
    %cst_63 = arith.constant dense<0.000000e+00> : vector<96x32xf32>
    %141 = tpu.matmul %139, %140, %cst_63 {dimension_numbers = #tpu.dot_dimension_numbers<[1], [0], [0], [1], [0, 0, 1, 1], [], []>} : vector<96x32xbf16>, vector<32x32xbf16>, vector<96x32xf32> -> vector<96x32xf32>
    %142 = vector.extract_strided_slice %141 {offsets = [0, 0], sizes = [32, 32], strides = [1, 1]} : vector<96x32xf32> to vector<32x32xf32>
    %143 = vector.extract_strided_slice %141 {offsets = [32, 0], sizes = [32, 32], strides = [1, 1]} : vector<96x32xf32> to vector<32x32xf32>
    %144 = vector.extract_strided_slice %141 {offsets = [64, 0], sizes = [32, 32], strides = [1, 1]} : vector<96x32xf32> to vector<32x32xf32>
    %c8_i32 = arith.constant 8 : i32
    %145 = vector.broadcast %c8_i32 : i32 to vector<1x32xi32>
    %146 = arith.cmpi sge, %16, %145 : vector<1x32xi32>
    %c8_i32_64 = arith.constant 8 : i32
    %147 = tpu.dynamic_rotate %142 by %c8_i32_64 dim 1 : vector<32x32xf32>, i32 -> vector<32x32xf32>
    %cst_65 = arith.constant 0.000000e+00 : f32
    %148 = vector.shape_cast %146 : vector<1x32xi1> to vector<1x32xi1>
    %149 = vector.broadcast %148 : vector<1x32xi1> to vector<32x32xi1>
    %150 = vector.broadcast %cst_65 : f32 to vector<32x32xf32>
    %151 = arith.select %149, %147, %150 : vector<32x32xi1>, vector<32x32xf32>
    %c8_i32_66 = arith.constant 8 : i32
    %152 = vector.broadcast %c8_i32_66 : i32 to vector<1x32xi32>
    %153 = arith.cmpi slt, %16, %152 : vector<1x32xi32>
    %c24_i32 = arith.constant 24 : i32
    %154 = tpu.dynamic_rotate %144 by %c24_i32 dim 1 : vector<32x32xf32>, i32 -> vector<32x32xf32>
    %cst_67 = arith.constant 0.000000e+00 : f32
    %155 = vector.shape_cast %153 : vector<1x32xi1> to vector<1x32xi1>
    %156 = vector.broadcast %155 : vector<1x32xi1> to vector<32x32xi1>
    %157 = vector.broadcast %cst_67 : f32 to vector<32x32xf32>
    %158 = arith.select %156, %154, %157 : vector<32x32xi1>, vector<32x32xf32>
    %159 = arith.addf %143, %151 : vector<32x32xf32>
    %160 = arith.addf %159, %158 : vector<32x32xf32>
    %c3_68 = arith.constant 3 : index
    %c0_69 = arith.constant 0 : index
    %c0_70 = arith.constant 0 : index
    %161 = vector.load %arg4[%c3_68, %c0_69, %c0_70] : memref<4x32x1xf32, #tpu.memory_space<vmem>>, vector<1x32x1xf32>
    %162 = vector.shape_cast %161 : vector<1x32x1xf32> to vector<32x1xf32>
    %163 = vector.broadcast %162 : vector<32x1xf32> to vector<32x32xf32>
    %164 = arith.addf %160, %163 : vector<32x32xf32>
    %cst_71 = arith.constant 0.000000e+00 : f32
    %165 = vector.broadcast %cst_71 : f32 to vector<32x32xf32>
    %166 = arith.maximumf %164, %165 : vector<32x32xf32>
    %c3_72 = arith.constant 3 : index
    %c0_73 = arith.constant 0 : index
    %c0_74 = arith.constant 0 : index
    %167 = vector.load %arg5[%c3_72, %c0_73, %c0_74] : memref<4x32x32xbf16, #tpu.memory_space<vmem>>, vector<1x32x32xbf16>
    %168 = vector.shape_cast %167 : vector<1x32x32xbf16> to vector<32x32xbf16>
    %169 = arith.truncf %166 : vector<32x32xf32> to vector<32x32xbf16>
    %cst_75 = arith.constant dense<0.000000e+00> : vector<32x32xf32>
    %170 = tpu.matmul %168, %169, %cst_75 {dimension_numbers = #tpu.dot_dimension_numbers<[1], [0], [0], [1], [0, 0, 1, 1], [], []>} : vector<32x32xbf16>, vector<32x32xbf16>, vector<32x32xf32> -> vector<32x32xf32>
    %c3_76 = arith.constant 3 : index
    %c0_77 = arith.constant 0 : index
    %c0_78 = arith.constant 0 : index
    %171 = vector.load %arg6[%c3_76, %c0_77, %c0_78] : memref<4x32x1xf32, #tpu.memory_space<vmem>>, vector<1x32x1xf32>
    %172 = vector.shape_cast %171 : vector<1x32x1xf32> to vector<32x1xf32>
    %173 = vector.broadcast %172 : vector<32x1xf32> to vector<32x32xf32>
    %174 = arith.addf %170, %173 : vector<32x32xf32>
    %175 = arith.addf %137, %174 : vector<32x32xf32>
    %c0_79 = arith.constant 0 : index
    %c0_80 = arith.constant 0 : index
    %c0_81 = arith.constant 0 : index
    %176 = vector.load %arg7[%c0_79, %c0_80, %c0_81] : memref<6x32x32xbf16, #tpu.memory_space<vmem>>, vector<1x32x32xbf16>
    %177 = vector.shape_cast %176 : vector<1x32x32xbf16> to vector<32x32xbf16>
    %178 = arith.truncf %175 : vector<32x32xf32> to vector<32x32xbf16>
    %cst_82 = arith.constant dense<0.000000e+00> : vector<32x32xf32>
    %179 = tpu.matmul %177, %178, %cst_82 {dimension_numbers = #tpu.dot_dimension_numbers<[1], [0], [0], [1], [0, 0, 1, 1], [], []>} : vector<32x32xbf16>, vector<32x32xbf16>, vector<32x32xf32> -> vector<32x32xf32>
    %c0_83 = arith.constant 0 : index
    %c0_84 = arith.constant 0 : index
    %c0_85 = arith.constant 0 : index
    %180 = vector.load %arg8[%c0_83, %c0_84, %c0_85] : memref<6x32x1xf32, #tpu.memory_space<vmem>>, vector<1x32x1xf32>
    %181 = vector.shape_cast %180 : vector<1x32x1xf32> to vector<32x1xf32>
    %182 = vector.broadcast %181 : vector<32x1xf32> to vector<32x32xf32>
    %183 = arith.addf %179, %182 : vector<32x32xf32>
    %cst_86 = arith.constant 0.000000e+00 : f32
    %184 = vector.broadcast %cst_86 : f32 to vector<32x32xf32>
    %185 = arith.maximumf %183, %184 : vector<32x32xf32>
    %c0_87 = arith.constant 0 : index
    %c0_88 = arith.constant 0 : index
    %c0_89 = arith.constant 0 : index
    %186 = vector.load %arg9[%c0_87, %c0_88, %c0_89] : memref<6x32x32xbf16, #tpu.memory_space<vmem>>, vector<1x32x32xbf16>
    %187 = vector.shape_cast %186 : vector<1x32x32xbf16> to vector<32x32xbf16>
    %188 = arith.truncf %185 : vector<32x32xf32> to vector<32x32xbf16>
    %cst_90 = arith.constant dense<0.000000e+00> : vector<32x32xf32>
    %189 = tpu.matmul %187, %188, %cst_90 {dimension_numbers = #tpu.dot_dimension_numbers<[1], [0], [0], [1], [0, 0, 1, 1], [], []>} : vector<32x32xbf16>, vector<32x32xbf16>, vector<32x32xf32> -> vector<32x32xf32>
    %c0_91 = arith.constant 0 : index
    %c0_92 = arith.constant 0 : index
    %c0_93 = arith.constant 0 : index
    %190 = vector.load %arg10[%c0_91, %c0_92, %c0_93] : memref<6x32x1xf32, #tpu.memory_space<vmem>>, vector<1x32x1xf32>
    %191 = vector.shape_cast %190 : vector<1x32x1xf32> to vector<32x1xf32>
    %192 = vector.broadcast %191 : vector<32x1xf32> to vector<32x32xf32>
    %193 = arith.addf %189, %192 : vector<32x32xf32>
    %194 = arith.addf %175, %193 : vector<32x32xf32>
    %c1_94 = arith.constant 1 : index
    %c0_95 = arith.constant 0 : index
    %c0_96 = arith.constant 0 : index
    %195 = vector.load %arg7[%c1_94, %c0_95, %c0_96] : memref<6x32x32xbf16, #tpu.memory_space<vmem>>, vector<1x32x32xbf16>
    %196 = vector.shape_cast %195 : vector<1x32x32xbf16> to vector<32x32xbf16>
    %197 = arith.truncf %194 : vector<32x32xf32> to vector<32x32xbf16>
    %cst_97 = arith.constant dense<0.000000e+00> : vector<32x32xf32>
    %198 = tpu.matmul %196, %197, %cst_97 {dimension_numbers = #tpu.dot_dimension_numbers<[1], [0], [0], [1], [0, 0, 1, 1], [], []>} : vector<32x32xbf16>, vector<32x32xbf16>, vector<32x32xf32> -> vector<32x32xf32>
    %c1_98 = arith.constant 1 : index
    %c0_99 = arith.constant 0 : index
    %c0_100 = arith.constant 0 : index
    %199 = vector.load %arg8[%c1_98, %c0_99, %c0_100] : memref<6x32x1xf32, #tpu.memory_space<vmem>>, vector<1x32x1xf32>
    %200 = vector.shape_cast %199 : vector<1x32x1xf32> to vector<32x1xf32>
    %201 = vector.broadcast %200 : vector<32x1xf32> to vector<32x32xf32>
    %202 = arith.addf %198, %201 : vector<32x32xf32>
    %cst_101 = arith.constant 0.000000e+00 : f32
    %203 = vector.broadcast %cst_101 : f32 to vector<32x32xf32>
    %204 = arith.maximumf %202, %203 : vector<32x32xf32>
    %c1_102 = arith.constant 1 : index
    %c0_103 = arith.constant 0 : index
    %c0_104 = arith.constant 0 : index
    %205 = vector.load %arg9[%c1_102, %c0_103, %c0_104] : memref<6x32x32xbf16, #tpu.memory_space<vmem>>, vector<1x32x32xbf16>
    %206 = vector.shape_cast %205 : vector<1x32x32xbf16> to vector<32x32xbf16>
    %207 = arith.truncf %204 : vector<32x32xf32> to vector<32x32xbf16>
    %cst_105 = arith.constant dense<0.000000e+00> : vector<32x32xf32>
    %208 = tpu.matmul %206, %207, %cst_105 {dimension_numbers = #tpu.dot_dimension_numbers<[1], [0], [0], [1], [0, 0, 1, 1], [], []>} : vector<32x32xbf16>, vector<32x32xbf16>, vector<32x32xf32> -> vector<32x32xf32>
    %c1_106 = arith.constant 1 : index
    %c0_107 = arith.constant 0 : index
    %c0_108 = arith.constant 0 : index
    %209 = vector.load %arg10[%c1_106, %c0_107, %c0_108] : memref<6x32x1xf32, #tpu.memory_space<vmem>>, vector<1x32x1xf32>
    %210 = vector.shape_cast %209 : vector<1x32x1xf32> to vector<32x1xf32>
    %211 = vector.broadcast %210 : vector<32x1xf32> to vector<32x32xf32>
    %212 = arith.addf %208, %211 : vector<32x32xf32>
    %213 = arith.addf %194, %212 : vector<32x32xf32>
    %c2_109 = arith.constant 2 : index
    %c0_110 = arith.constant 0 : index
    %c0_111 = arith.constant 0 : index
    %214 = vector.load %arg7[%c2_109, %c0_110, %c0_111] : memref<6x32x32xbf16, #tpu.memory_space<vmem>>, vector<1x32x32xbf16>
    %215 = vector.shape_cast %214 : vector<1x32x32xbf16> to vector<32x32xbf16>
    %216 = arith.truncf %213 : vector<32x32xf32> to vector<32x32xbf16>
    %cst_112 = arith.constant dense<0.000000e+00> : vector<32x32xf32>
    %217 = tpu.matmul %215, %216, %cst_112 {dimension_numbers = #tpu.dot_dimension_numbers<[1], [0], [0], [1], [0, 0, 1, 1], [], []>} : vector<32x32xbf16>, vector<32x32xbf16>, vector<32x32xf32> -> vector<32x32xf32>
    %c2_113 = arith.constant 2 : index
    %c0_114 = arith.constant 0 : index
    %c0_115 = arith.constant 0 : index
    %218 = vector.load %arg8[%c2_113, %c0_114, %c0_115] : memref<6x32x1xf32, #tpu.memory_space<vmem>>, vector<1x32x1xf32>
    %219 = vector.shape_cast %218 : vector<1x32x1xf32> to vector<32x1xf32>
    %220 = vector.broadcast %219 : vector<32x1xf32> to vector<32x32xf32>
    %221 = arith.addf %217, %220 : vector<32x32xf32>
    %cst_116 = arith.constant 0.000000e+00 : f32
    %222 = vector.broadcast %cst_116 : f32 to vector<32x32xf32>
    %223 = arith.maximumf %221, %222 : vector<32x32xf32>
    %c2_117 = arith.constant 2 : index
    %c0_118 = arith.constant 0 : index
    %c0_119 = arith.constant 0 : index
    %224 = vector.load %arg9[%c2_117, %c0_118, %c0_119] : memref<6x32x32xbf16, #tpu.memory_space<vmem>>, vector<1x32x32xbf16>
    %225 = vector.shape_cast %224 : vector<1x32x32xbf16> to vector<32x32xbf16>
    %226 = arith.truncf %223 : vector<32x32xf32> to vector<32x32xbf16>
    %cst_120 = arith.constant dense<0.000000e+00> : vector<32x32xf32>
    %227 = tpu.matmul %225, %226, %cst_120 {dimension_numbers = #tpu.dot_dimension_numbers<[1], [0], [0], [1], [0, 0, 1, 1], [], []>} : vector<32x32xbf16>, vector<32x32xbf16>, vector<32x32xf32> -> vector<32x32xf32>
    %c2_121 = arith.constant 2 : index
    %c0_122 = arith.constant 0 : index
    %c0_123 = arith.constant 0 : index
    %228 = vector.load %arg10[%c2_121, %c0_122, %c0_123] : memref<6x32x1xf32, #tpu.memory_space<vmem>>, vector<1x32x1xf32>
    %229 = vector.shape_cast %228 : vector<1x32x1xf32> to vector<32x1xf32>
    %230 = vector.broadcast %229 : vector<32x1xf32> to vector<32x32xf32>
    %231 = arith.addf %227, %230 : vector<32x32xf32>
    %232 = arith.addf %213, %231 : vector<32x32xf32>
    %c3_124 = arith.constant 3 : index
    %c0_125 = arith.constant 0 : index
    %c0_126 = arith.constant 0 : index
    %233 = vector.load %arg7[%c3_124, %c0_125, %c0_126] : memref<6x32x32xbf16, #tpu.memory_space<vmem>>, vector<1x32x32xbf16>
    %234 = vector.shape_cast %233 : vector<1x32x32xbf16> to vector<32x32xbf16>
    %235 = arith.truncf %232 : vector<32x32xf32> to vector<32x32xbf16>
    %cst_127 = arith.constant dense<0.000000e+00> : vector<32x32xf32>
    %236 = tpu.matmul %234, %235, %cst_127 {dimension_numbers = #tpu.dot_dimension_numbers<[1], [0], [0], [1], [0, 0, 1, 1], [], []>} : vector<32x32xbf16>, vector<32x32xbf16>, vector<32x32xf32> -> vector<32x32xf32>
    %c3_128 = arith.constant 3 : index
    %c0_129 = arith.constant 0 : index
    %c0_130 = arith.constant 0 : index
    %237 = vector.load %arg8[%c3_128, %c0_129, %c0_130] : memref<6x32x1xf32, #tpu.memory_space<vmem>>, vector<1x32x1xf32>
    %238 = vector.shape_cast %237 : vector<1x32x1xf32> to vector<32x1xf32>
    %239 = vector.broadcast %238 : vector<32x1xf32> to vector<32x32xf32>
    %240 = arith.addf %236, %239 : vector<32x32xf32>
    %cst_131 = arith.constant 0.000000e+00 : f32
    %241 = vector.broadcast %cst_131 : f32 to vector<32x32xf32>
    %242 = arith.maximumf %240, %241 : vector<32x32xf32>
    %c3_132 = arith.constant 3 : index
    %c0_133 = arith.constant 0 : index
    %c0_134 = arith.constant 0 : index
    %243 = vector.load %arg9[%c3_132, %c0_133, %c0_134] : memref<6x32x32xbf16, #tpu.memory_space<vmem>>, vector<1x32x32xbf16>
    %244 = vector.shape_cast %243 : vector<1x32x32xbf16> to vector<32x32xbf16>
    %245 = arith.truncf %242 : vector<32x32xf32> to vector<32x32xbf16>
    %cst_135 = arith.constant dense<0.000000e+00> : vector<32x32xf32>
    %246 = tpu.matmul %244, %245, %cst_135 {dimension_numbers = #tpu.dot_dimension_numbers<[1], [0], [0], [1], [0, 0, 1, 1], [], []>} : vector<32x32xbf16>, vector<32x32xbf16>, vector<32x32xf32> -> vector<32x32xf32>
    %c3_136 = arith.constant 3 : index
    %c0_137 = arith.constant 0 : index
    %c0_138 = arith.constant 0 : index
    %247 = vector.load %arg10[%c3_136, %c0_137, %c0_138] : memref<6x32x1xf32, #tpu.memory_space<vmem>>, vector<1x32x1xf32>
    %248 = vector.shape_cast %247 : vector<1x32x1xf32> to vector<32x1xf32>
    %249 = vector.broadcast %248 : vector<32x1xf32> to vector<32x32xf32>
    %250 = arith.addf %246, %249 : vector<32x32xf32>
    %251 = arith.addf %232, %250 : vector<32x32xf32>
    %c4 = arith.constant 4 : index
    %c0_139 = arith.constant 0 : index
    %c0_140 = arith.constant 0 : index
    %252 = vector.load %arg7[%c4, %c0_139, %c0_140] : memref<6x32x32xbf16, #tpu.memory_space<vmem>>, vector<1x32x32xbf16>
    %253 = vector.shape_cast %252 : vector<1x32x32xbf16> to vector<32x32xbf16>
    %254 = arith.truncf %251 : vector<32x32xf32> to vector<32x32xbf16>
    %cst_141 = arith.constant dense<0.000000e+00> : vector<32x32xf32>
    %255 = tpu.matmul %253, %254, %cst_141 {dimension_numbers = #tpu.dot_dimension_numbers<[1], [0], [0], [1], [0, 0, 1, 1], [], []>} : vector<32x32xbf16>, vector<32x32xbf16>, vector<32x32xf32> -> vector<32x32xf32>
    %c4_142 = arith.constant 4 : index
    %c0_143 = arith.constant 0 : index
    %c0_144 = arith.constant 0 : index
    %256 = vector.load %arg8[%c4_142, %c0_143, %c0_144] : memref<6x32x1xf32, #tpu.memory_space<vmem>>, vector<1x32x1xf32>
    %257 = vector.shape_cast %256 : vector<1x32x1xf32> to vector<32x1xf32>
    %258 = vector.broadcast %257 : vector<32x1xf32> to vector<32x32xf32>
    %259 = arith.addf %255, %258 : vector<32x32xf32>
    %cst_145 = arith.constant 0.000000e+00 : f32
    %260 = vector.broadcast %cst_145 : f32 to vector<32x32xf32>
    %261 = arith.maximumf %259, %260 : vector<32x32xf32>
    %c4_146 = arith.constant 4 : index
    %c0_147 = arith.constant 0 : index
    %c0_148 = arith.constant 0 : index
    %262 = vector.load %arg9[%c4_146, %c0_147, %c0_148] : memref<6x32x32xbf16, #tpu.memory_space<vmem>>, vector<1x32x32xbf16>
    %263 = vector.shape_cast %262 : vector<1x32x32xbf16> to vector<32x32xbf16>
    %264 = arith.truncf %261 : vector<32x32xf32> to vector<32x32xbf16>
    %cst_149 = arith.constant dense<0.000000e+00> : vector<32x32xf32>
    %265 = tpu.matmul %263, %264, %cst_149 {dimension_numbers = #tpu.dot_dimension_numbers<[1], [0], [0], [1], [0, 0, 1, 1], [], []>} : vector<32x32xbf16>, vector<32x32xbf16>, vector<32x32xf32> -> vector<32x32xf32>
    %c4_150 = arith.constant 4 : index
    %c0_151 = arith.constant 0 : index
    %c0_152 = arith.constant 0 : index
    %266 = vector.load %arg10[%c4_150, %c0_151, %c0_152] : memref<6x32x1xf32, #tpu.memory_space<vmem>>, vector<1x32x1xf32>
    %267 = vector.shape_cast %266 : vector<1x32x1xf32> to vector<32x1xf32>
    %268 = vector.broadcast %267 : vector<32x1xf32> to vector<32x32xf32>
    %269 = arith.addf %265, %268 : vector<32x32xf32>
    %270 = arith.addf %251, %269 : vector<32x32xf32>
    %c5 = arith.constant 5 : index
    %c0_153 = arith.constant 0 : index
    %c0_154 = arith.constant 0 : index
    %271 = vector.load %arg7[%c5, %c0_153, %c0_154] : memref<6x32x32xbf16, #tpu.memory_space<vmem>>, vector<1x32x32xbf16>
    %272 = vector.shape_cast %271 : vector<1x32x32xbf16> to vector<32x32xbf16>
    %273 = arith.truncf %270 : vector<32x32xf32> to vector<32x32xbf16>
    %cst_155 = arith.constant dense<0.000000e+00> : vector<32x32xf32>
    %274 = tpu.matmul %272, %273, %cst_155 {dimension_numbers = #tpu.dot_dimension_numbers<[1], [0], [0], [1], [0, 0, 1, 1], [], []>} : vector<32x32xbf16>, vector<32x32xbf16>, vector<32x32xf32> -> vector<32x32xf32>
    %c5_156 = arith.constant 5 : index
    %c0_157 = arith.constant 0 : index
    %c0_158 = arith.constant 0 : index
    %275 = vector.load %arg8[%c5_156, %c0_157, %c0_158] : memref<6x32x1xf32, #tpu.memory_space<vmem>>, vector<1x32x1xf32>
    %276 = vector.shape_cast %275 : vector<1x32x1xf32> to vector<32x1xf32>
    %277 = vector.broadcast %276 : vector<32x1xf32> to vector<32x32xf32>
    %278 = arith.addf %274, %277 : vector<32x32xf32>
    %cst_159 = arith.constant 0.000000e+00 : f32
    %279 = vector.broadcast %cst_159 : f32 to vector<32x32xf32>
    %280 = arith.maximumf %278, %279 : vector<32x32xf32>
    %c5_160 = arith.constant 5 : index
    %c0_161 = arith.constant 0 : index
    %c0_162 = arith.constant 0 : index
    %281 = vector.load %arg9[%c5_160, %c0_161, %c0_162] : memref<6x32x32xbf16, #tpu.memory_space<vmem>>, vector<1x32x32xbf16>
    %282 = vector.shape_cast %281 : vector<1x32x32xbf16> to vector<32x32xbf16>
    %283 = arith.truncf %280 : vector<32x32xf32> to vector<32x32xbf16>
    %cst_163 = arith.constant dense<0.000000e+00> : vector<32x32xf32>
    %284 = tpu.matmul %282, %283, %cst_163 {dimension_numbers = #tpu.dot_dimension_numbers<[1], [0], [0], [1], [0, 0, 1, 1], [], []>} : vector<32x32xbf16>, vector<32x32xbf16>, vector<32x32xf32> -> vector<32x32xf32>
    %c5_164 = arith.constant 5 : index
    %c0_165 = arith.constant 0 : index
    %c0_166 = arith.constant 0 : index
    %285 = vector.load %arg10[%c5_164, %c0_165, %c0_166] : memref<6x32x1xf32, #tpu.memory_space<vmem>>, vector<1x32x1xf32>
    %286 = vector.shape_cast %285 : vector<1x32x1xf32> to vector<32x1xf32>
    %287 = vector.broadcast %286 : vector<32x1xf32> to vector<32x32xf32>
    %288 = arith.addf %284, %287 : vector<32x32xf32>
    %289 = arith.addf %270, %288 : vector<32x32xf32>
    %c0_167 = arith.constant 0 : index
    %c0_168 = arith.constant 0 : index
    %290 = vector.load %arg11[%c0_167, %c0_168] : memref<8x32xbf16, #tpu.memory_space<vmem>>, vector<8x32xbf16>
    %291 = arith.truncf %289 : vector<32x32xf32> to vector<32x32xbf16>
    %cst_169 = arith.constant dense<0.000000e+00> : vector<8x32xf32>
    %292 = tpu.matmul %290, %291, %cst_169 {dimension_numbers = #tpu.dot_dimension_numbers<[1], [0], [0], [1], [0, 0, 1, 1], [], []>} : vector<8x32xbf16>, vector<32x32xbf16>, vector<8x32xf32> -> vector<8x32xf32>
    %c0_170 = arith.constant 0 : index
    %c0_171 = arith.constant 0 : index
    %293 = vector.load %arg12[%c0_170, %c0_171] : memref<8x1xf32, #tpu.memory_space<vmem>>, vector<8x1xf32>
    %294 = vector.broadcast %293 : vector<8x1xf32> to vector<8x32xf32>
    %295 = arith.addf %292, %294 : vector<8x32xf32>
    %c0_172 = arith.constant 0 : index
    %c0_173 = arith.constant 0 : index
    %296 = vector.load %arg13[%c0_172, %c0_173] : memref<8x32xf32, #tpu.memory_space<vmem>>, vector<8x32xf32>
    tpu.vector_store %arg13[%c0_172, %c0_173], %295 {strides = array<i32>} : memref<8x32xf32, #tpu.memory_space<vmem>>, vector<8x32xf32>,
    return
  }
}

</mosaic_0001>

<llo_original>
// kernel: tpu_custom_call.1
$region0: #{tpu_custom_call.1}
  #allocation0 [shape = 'u32[]', space=smem, size = 0x4, offset = 0x4, fixed_abs, tag = 'smem constant byte address 0x4 - core index']
  #allocation1 [shape = 'u32[144,128]{1,0:T(1,128)}', space=vmem, size = 0x12000, scoped, tag = 'internal scratch']
  %s0 = inlined_call_operand.vmem [shape: f32[8,32], index: 0, kind: input, shape index: {}]
  %s1 = inlined_call_operand.vmem [shape: bf16[32,8], index: 1, kind: input, shape index: {}]
  %s2 = inlined_call_operand.vmem [shape: f32[32,1], index: 2, kind: input, shape index: {}]
  %s3 = inlined_call_operand.vmem [shape: bf16[4,96,32], index: 3, kind: input, shape index: {}]
  %s4 = inlined_call_operand.vmem [shape: f32[4,32,1], index: 4, kind: input, shape index: {}]
  %s5 = inlined_call_operand.vmem [shape: bf16[4,32,32], index: 5, kind: input, shape index: {}]
  %s6 = inlined_call_operand.vmem [shape: f32[4,32,1], index: 6, kind: input, shape index: {}]
  %s7 = inlined_call_operand.vmem [shape: bf16[6,32,32], index: 7, kind: input, shape index: {}]
  %s8 = inlined_call_operand.vmem [shape: f32[6,32,1], index: 8, kind: input, shape index: {}]
  %s9 = inlined_call_operand.vmem [shape: bf16[6,32,32], index: 9, kind: input, shape index: {}]
  %s10 = inlined_call_operand.vmem [shape: f32[6,32,1], index: 10, kind: input, shape index: {}]
  %s11 = inlined_call_operand.vmem [shape: bf16[8,32], index: 11, kind: input, shape index: {}]
  %s12 = inlined_call_operand.vmem [shape: f32[8,1], index: 12, kind: input, shape index: {}]
  %s13 = inlined_call_operand.hbm [shape: f32[8,32], index: 13, kind: output, shape index: {}]
  %s14 = sld [smem:[#allocation0]]
  $region62: #{tpu_custom_call.1} parent=0
    _
  %s16 = ssub.s32 1, %s14
  %s17 = scalar_select 0, %s16, %s14
  $region1: #{tpu_custom_call.1} parent=0
    #allocation2 [shape = 'u8[4096]{0}', space=vmem, size = 0x1000, scoped, tag = 'output window, operand 0, single buffered']
    #allocation3 [shape = 's32[1]{0}', space=sflag, size = 0x4, scoped, tag = 'scoped memory for tpu_custom_call.1']
    %18 = vsyncpa [#allocation3], 0
    // Predicated region
    $region2: #{tpu_custom_call.1} parent=1 // pred_check
      _
    $region3: #{tpu_custom_call.1} parent=1 // pred_check_branch
      %20 = sbr.rel (0) target = $region5
    $region4: #{tpu_custom_call.1} parent=1 // pred_region
      _
    $region5: #{tpu_custom_call.1} parent=1 // pred_fallthru
      _
    // Predicated region
    $region6: #{tpu_custom_call.1} parent=1 // pred_check
      _
    $region7: #{tpu_custom_call.1} parent=1 // pred_check_branch
      %22 = sbr.rel (0) target = $region9
    $region8: #{tpu_custom_call.1} parent=1 // pred_region
      _
    $region9: #{tpu_custom_call.1} parent=1 // pred_fallthru
      _
    // Predicated region
    $region10: #{tpu_custom_call.1} parent=1 // pred_check
      _
    $region11: #{tpu_custom_call.1} parent=1 // pred_check_branch
      %24 = sbr.rel (0) target = $region13
    $region12: #{tpu_custom_call.1} parent=1 // pred_region
      _
    $region13: #{tpu_custom_call.1} parent=1 // pred_fallthru
      _
    // Predicated region
    $region14: #{tpu_custom_call.1} parent=1 // pred_check
      _
    $region15: #{tpu_custom_call.1} parent=1 // pred_check_branch
      %26 = sbr.rel (0) target = $region17
    $region16: #{tpu_custom_call.1} parent=1 // pred_region
      _
    $region17: #{tpu_custom_call.1} parent=1 // pred_fallthru
      _
    // Predicated region
    $region18: #{tpu_custom_call.1} parent=1 // pred_check
      _
    $region19: #{tpu_custom_call.1} parent=1 // pred_check_branch
      %28 = sbr.rel (0) target = $region21
    $region20: #{tpu_custom_call.1} parent=1 // pred_region
      _
    $region21: #{tpu_custom_call.1} parent=1 // pred_fallthru
      _
    // Predicated region
    $region22: #{tpu_custom_call.1} parent=1 // pred_check
      _
    $region23: #{tpu_custom_call.1} parent=1 // pred_check_branch
      %30 = sbr.rel (0) target = $region25
    $region24: #{tpu_custom_call.1} parent=1 // pred_region
      _
    $region25: #{tpu_custom_call.1} parent=1 // pred_fallthru
      _
    // Predicated region
    $region26: #{tpu_custom_call.1} parent=1 // pred_check
      _
    $region27: #{tpu_custom_call.1} parent=1 // pred_check_branch
      %32 = sbr.rel (0) target = $region29
    $region28: #{tpu_custom_call.1} parent=1 // pred_region
      _
    $region29: #{tpu_custom_call.1} parent=1 // pred_fallthru
      _
    // Predicated region
    $region30: #{tpu_custom_call.1} parent=1 // pred_check
      _
    $region31: #{tpu_custom_call.1} parent=1 // pred_check_branch
      %34 = sbr.rel (0) target = $region33
    $region32: #{tpu_custom_call.1} parent=1 // pred_region
      _
    $region33: #{tpu_custom_call.1} parent=1 // pred_fallthru
      _
    // Predicated region
    $region34: #{tpu_custom_call.1} parent=1 // pred_check
      _
    $region35: #{tpu_custom_call.1} parent=1 // pred_check_branch
      %36 = sbr.rel (0) target = $region37
    $region36: #{tpu_custom_call.1} parent=1 // pred_region
      _
    $region37: #{tpu_custom_call.1} parent=1 // pred_fallthru
      _
    // Predicated region
    $region38: #{tpu_custom_call.1} parent=1 // pred_check
      _
    $region39: #{tpu_custom_call.1} parent=1 // pred_check_branch
      %38 = sbr.rel (0) target = $region41
    $region40: #{tpu_custom_call.1} parent=1 // pred_region
      _
    $region41: #{tpu_custom_call.1} parent=1 // pred_fallthru
      _
    // Predicated region
    $region42: #{tpu_custom_call.1} parent=1 // pred_check
      _
    $region43: #{tpu_custom_call.1} parent=1 // pred_check_branch
      %40 = sbr.rel (0) target = $region45
    $region44: #{tpu_custom_call.1} parent=1 // pred_region
      _
    $region45: #{tpu_custom_call.1} parent=1 // pred_fallthru
      _
    // Predicated region
    $region46: #{tpu_custom_call.1} parent=1 // pred_check
      _
    $region47: #{tpu_custom_call.1} parent=1 // pred_check_branch
      %42 = sbr.rel (0) target = $region49
    $region48: #{tpu_custom_call.1} parent=1 // pred_region
      _
    $region49: #{tpu_custom_call.1} parent=1 // pred_fallthru
      _
    // Predicated region
    $region50: #{tpu_custom_call.1} parent=1 // pred_check
      _
    $region51: #{tpu_custom_call.1} parent=1 // pred_check_branch
      %44 = sbr.rel (0) target = $region53
    $region52: #{tpu_custom_call.1} parent=1 // pred_region
      _
    $region53: #{tpu_custom_call.1} parent=1 // pred_fallthru
      _
    %v46 = vlaneseq
    %v47 = vand.u32 %v46, 127
    %vm48 = vcmp.lt.s32.totalorder %v47, 0
    %v49 = vsub.s32 0, %v47
    %v50 = vsel %vm48, %v49, %v47
    %v51 = vshrl.u32 %v50, 4
    %v52 = vand.u32 %v50, 15
    %v53 = vsub.s32 0, %v52
    %v54 = vsel %vm48, %v53, %v52
    %vm55 = vcmp.ne.s32.totalorder %v54, 0
    %vm56 = vcmp.lt.s32.totalorder %v54, 0
    %vm57 = vmand %vm56, %vm55
    %v58 = vadd.s32 %v54, 16
    %v59 = vsel %vm57, %v58, %v54
    %v60 = vld [vmem:[%s1] sm:$0xf]
    %v61 = vld [vmem:[%s1 + $0x4] sm:$0xf]
    %v62 = vld [vmem:[%s1 + $0x8] sm:$0xf]
    %v63 = vld [vmem:[%s1 + $0xc] sm:$0xf]
    %v64 = vld [vmem:[%s0] sm:$0xff]
    %v65 = vpack.c.bf16 %v64, %v64
    %v66 = vld [vmem:[%s2] sm:$0xff]
    %v67 = vld [vmem:[%s2 + $0x8] sm:$0xff]
    %v68 = vld [vmem:[%s2 + $0x10] sm:$0xff]
    %v69 = vld [vmem:[%s2 + $0x18] sm:$0xff]
    %71 = vset.pattern.permute.xlu0 0
    %72 = vperm.xlu0 %71, %v66
    %v73 = vpop.permute.xlu0 %72
    %76 = vset.pattern.permute.xlu0 0
    %77 = vperm.xlu0 %76, %v67
    %v78 = vpop.permute.xlu0 %77
    %81 = vset.pattern.permute.xlu0 0
    %82 = vperm.xlu0 %81, %v68
    %v83 = vpop.permute.xlu0 %82
    %86 = vset.pattern.permute.xlu0 0
    %87 = vperm.xlu0 %86, %v69
    %v88 = vpop.permute.xlu0 %87
    %v94 = vunpack.c.l.b16 %v60
    %v95 = vunpack.c.l.b16 %v61
    %v96 = vunpack.c.l.b16 %v62
    %v97 = vunpack.c.l.b16 %v63
    %v98 = vpack.c.b16 %v95, %v94
    %v99 = vpack.c.b16 %v97, %v96
    %vm100 = vcmask 64512
    %v102 = vsel %vm100, %v98, 0
    %v105 = vsel %vm100, %v99, 0
    %vm107 = vcmask 1043456
    %v109 = vsel %vm107, %v65, 0
    %111 = vmatprep.subr.bf16.mxu0 0
    %112 = vmatpush1.bf16.msra.mxu0 %v109
    %113 = vmatprep.subr.bf16.mxu0 0
    %114 = vmatpush1.bf16.msra.mxu0 0
    %115 = vmatprep.subr.bf16.mxu0 0
    %116 = vmatpush1.bf16.msra.mxu0 0
    %117 = vmatprep.subr.bf16.mxu0 0
    %118 = vmatpush1.bf16.msra.mxu0 0
    %119 = vmatprep.subr.bf16.mxu0 0
    %120 = vmatpush1.bf16.msra.mxu0 0
    %121 = vmatprep.subr.bf16.mxu0 0
    %122 = vmatpush1.bf16.msra.mxu0 0
    %123 = vmatprep.subr.bf16.mxu0 0
    %124 = vmatpush1.bf16.msra.mxu0 0
    %125 = vmatprep.subr.bf16.mxu0 0
    %126 = vmatpush1.bf16.msra.mxu0 0
    %127 = vmatprep.subr.bf16.mxu0 0
    %128 = vmatpush1.bf16.msra.mxu0 0
    %129 = vmatprep.subr.bf16.mxu0 0
    %130 = vmatpush1.bf16.msra.mxu0 0
    %131 = vmatprep.subr.bf16.mxu0 0
    %132 = vmatpush1.bf16.msra.mxu0 0
    %133 = vmatprep.subr.bf16.mxu0 0
    %134 = vmatpush1.bf16.msra.mxu0 0
    %135 = vmatprep.subr.bf16.mxu0 0
    %136 = vmatpush1.bf16.msra.mxu0 0
    %137 = vmatprep.subr.bf16.mxu0 0
    %138 = vmatpush1.bf16.msra.mxu0 0
    %139 = vmatprep.subr.bf16.mxu0 0
    %140 = vmatpush1.bf16.msra.mxu0 0
    %141 = vmatprep.subr.bf16.mxu0 0
    %142 = vmatpush1.bf16.msra.mxu0 0
    %143 = vmatprep.mubr.bf16.mxu0 0
    %144 = vmatmul.mubr.bf16.gmra.mrb[0].mxu0 %v102
    %v145 = vpop.f32.mrb[0].mxu0
    %v146 = vadd.f32 %v73, %v145
    %v147 = vpop.f32.mrb[0].mxu0
    %v148 = vpop.f32.mrb[0].mxu0
    %v149 = vadd.f32 %v78, %v148
    %v150 = vpop.f32.mrb[0].mxu0
    %151 = vmatprep.mubr.bf16.mxu0 0
    %152 = vmatmul.mubr.bf16.gmra.mrb[0].mxu0 %v105
    %v153 = vpop.f32.mrb[0].mxu0
    %v154 = vadd.f32 %v83, %v153
    %v155 = vpop.f32.mrb[0].mxu0
    %v156 = vpop.f32.mrb[0].mxu0
    %v157 = vadd.f32 %v88, %v156
    %v158 = vpop.f32.mrb[0].mxu0
    %159 = vdwg.mxu0
    %v160 = vld [vmem:[%s3] sm:$0xf]
    %v161 = vld [vmem:[%s3 + $0x4] sm:$0xf]
    %v162 = vld [vmem:[%s3 + $0x8] sm:$0xf]
    %v163 = vld [vmem:[%s3 + $0xc] sm:$0xf]
    %v164 = vld [vmem:[%s3 + $0x10] sm:$0xf]
    %v165 = vld [vmem:[%s3 + $0x14] sm:$0xf]
    %v166 = vld [vmem:[%s3 + $0x18] sm:$0xf]
    %v167 = vld [vmem:[%s3 + $0x1c] sm:$0xf]
    %v168 = vld [vmem:[%s3 + $0x20] sm:$0xf]
    %v169 = vld [vmem:[%s3 + $0x24] sm:$0xf]
    %v170 = vld [vmem:[%s3 + $0x28] sm:$0xf]
    %v171 = vld [vmem:[%s3 + $0x2c] sm:$0xf]
    %v172 = vpack.c.bf16 %v149, %v146
    %v173 = vpack.c.bf16 %v157, %v154
    %v186 = vunpack.c.l.b16 %v160
    %v187 = vunpack.c.l.b16 %v161
    %v188 = vunpack.c.l.b16 %v162
    %v189 = vunpack.c.l.b16 %v163
    %v190 = vunpack.c.l.b16 %v164
    %v191 = vunpack.c.l.b16 %v165
    %v192 = vunpack.c.l.b16 %v166
    %v193 = vunpack.c.l.b16 %v167
    %v194 = vunpack.c.l.b16 %v168
    %v195 = vunpack.c.l.b16 %v169
    %v196 = vunpack.c.l.b16 %v170
    %v197 = vunpack.c.l.b16 %v171
    %v198 = vpack.c.b16 %v187, %v186
    %v199 = vpack.c.b16 %v189, %v188
    %v200 = vpack.c.b16 %v191, %v190
    %v201 = vpack.c.b16 %v193, %v192
    %v202 = vpack.c.b16 %v195, %v194
    %v203 = vpack.c.b16 %v197, %v196
    %vm204 = vcmask 261120
    %v206 = vsel %vm204, %v198, 0
    %v209 = vsel %vm204, %v199, 0
    %v212 = vsel %vm204, %v200, 0
    %v215 = vsel %vm204, %v201, 0
    %v218 = vsel %vm204, %v202, 0
    %v221 = vsel %vm204, %v203, 0
    %223 = vmatprep.subr.bf16.mxu0 0
    %224 = vmatpush1.bf16.msra.mxu0 %v172
    %225 = vmatprep.subr.bf16.mxu0 0
    %226 = vmatpush1.bf16.msra.mxu0 %v173
    %227 = vmatprep.subr.bf16.mxu0 0
    %228 = vmatpush1.bf16.msra.mxu0 0
    %229 = vmatprep.subr.bf16.mxu0 0
    %230 = vmatpush1.bf16.msra.mxu0 0
    %231 = vmatprep.subr.bf16.mxu0 0
    %232 = vmatpush1.bf16.msra.mxu0 0
    %233 = vmatprep.subr.bf16.mxu0 0
    %234 = vmatpush1.bf16.msra.mxu0 0
    %235 = vmatprep.subr.bf16.mxu0 0
    %236 = vmatpush1.bf16.msra.mxu0 0
    %237 = vmatprep.subr.bf16.mxu0 0
    %238 = vmatpush1.bf16.msra.mxu0 0
    %239 = vmatprep.subr.bf16.mxu0 0
    %240 = vmatpush1.bf16.msra.mxu0 0
    %241 = vmatprep.subr.bf16.mxu0 0
    %242 = vmatpush1.bf16.msra.mxu0 0
    %243 = vmatprep.subr.bf16.mxu0 0
    %244 = vmatpush1.bf16.msra.mxu0 0
    %245 = vmatprep.subr.bf16.mxu0 0
    %246 = vmatpush1.bf16.msra.mxu0 0
    %247 = vmatprep.subr.bf16.mxu0 0
    %248 = vmatpush1.bf16.msra.mxu0 0
    %249 = vmatprep.subr.bf16.mxu0 0
    %250 = vmatpush1.bf16.msra.mxu0 0
    %251 = vmatprep.subr.bf16.mxu0 0
    %252 = vmatpush1.bf16.msra.mxu0 0
    %253 = vmatprep.subr.bf16.mxu0 0
    %254 = vmatpush1.bf16.msra.mxu0 0
    %255 = vmatprep.mubr.bf16.mxu0 0
    %256 = vmatmul.mubr.bf16.gmra.mrb[0].mxu0 %v206
    %v257 = vpop.f32.mrb[0].mxu0
    %v258 = vadd.f32 0.0, %v257
    %v259 = vpop.f32.mrb[0].mxu0
    %v260 = vpop.f32.mrb[0].mxu0
    %v261 = vadd.f32 0.0, %v260
    %v262 = vpop.f32.mrb[0].mxu0
    %263 = vmatprep.mubr.bf16.mxu0 0
    %264 = vmatmul.mubr.bf16.gmra.mrb[0].mxu0 %v209
    %v265 = vpop.f32.mrb[0].mxu0
    %v266 = vadd.f32 0.0, %v265
    %v267 = vpop.f32.mrb[0].mxu0
    %v268 = vpop.f32.mrb[0].mxu0
    %v269 = vadd.f32 0.0, %v268
    %v270 = vpop.f32.mrb[0].mxu0
    %271 = vmatprep.mubr.bf16.mxu0 0
    %272 = vmatmul.mubr.bf16.gmra.mrb[0].mxu0 %v212
    %v273 = vpop.f32.mrb[0].mxu0
    %v274 = vadd.f32 0.0, %v273
    %v275 = vpop.f32.mrb[0].mxu0
    %v276 = vpop.f32.mrb[0].mxu0
    %v277 = vadd.f32 0.0, %v276
    %v278 = vpop.f32.mrb[0].mxu0
    %279 = vmatprep.mubr.bf16.mxu0 0
    %280 = vmatmul.mubr.bf16.gmra.mrb[0].mxu0 %v215
    %v281 = vpop.f32.mrb[0].mxu0
    %v282 = vadd.f32 0.0, %v281
    %v283 = vpop.f32.mrb[0].mxu0
    %v284 = vpop.f32.mrb[0].mxu0
    %v285 = vadd.f32 0.0, %v284
    %v286 = vpop.f32.mrb[0].mxu0
    %287 = vmatprep.mubr.bf16.mxu0 0
    %288 = vmatmul.mubr.bf16.gmra.mrb[0].mxu0 %v218
    %v289 = vpop.f32.mrb[0].mxu0
    %v290 = vadd.f32 0.0, %v289
    %v291 = vpop.f32.mrb[0].mxu0
    %v292 = vpop.f32.mrb[0].mxu0
    %v293 = vadd.f32 0.0, %v292
    %v294 = vpop.f32.mrb[0].mxu0
    %295 = vmatprep.mubr.bf16.mxu0 0
    %296 = vmatmul.mubr.bf16.gmra.mrb[0].mxu0 %v221
    %v297 = vpop.f32.mrb[0].mxu0
    %v298 = vadd.f32 0.0, %v297
    %v299 = vpop.f32.mrb[0].mxu0
    %v300 = vpop.f32.mrb[0].mxu0
    %v301 = vadd.f32 0.0, %v300
    %v302 = vpop.f32.mrb[0].mxu0
    %303 = vdwg.mxu0
    %vm304 = vcmp.ge.s32.totalorder %v59, 1
    %vm305 = vcmask 1047808
    %306 = vrot.lane.b32.xlu0 %v258, 32
    %v307 = vpop.permute.xlu0 %306
    %v308 = vsel %vm305, %v307, %v258
    %309 = vrot.lane.b32.xlu0 %v261, 32
    %v310 = vpop.permute.xlu0 %309
    %v311 = vsel %vm305, %v310, %v261
    %312 = vrot.lane.b32.xlu0 %v266, 32
    %v313 = vpop.permute.xlu0 %312
    %v314 = vsel %vm305, %v313, %v266
    %315 = vrot.lane.b32.xlu0 %v269, 32
    %v316 = vpop.permute.xlu0 %315
    %v317 = vsel %vm305, %v316, %v269
    %318 = vrot.lane.b32.xlu0 %v308, 32
    %v319 = vpop.permute.xlu0 %318
    %320 = vrot.lane.b32.xlu0 %v311, 32
    %v321 = vpop.permute.xlu0 %320
    %322 = vrot.lane.b32.xlu0 %v314, 32
    %v323 = vpop.permute.xlu0 %322
    %324 = vrot.lane.b32.xlu0 %v317, 32
    %v325 = vpop.permute.xlu0 %324
    %v326 = vsel %vm305, %v319, %v258
    %v327 = vsel %vm305, %v321, %v261
    %v328 = vsel %vm305, %v323, %v266
    %v329 = vsel %vm305, %v325, %v269
    %v330 = vsel %vm304, 1, 0
    %vm331 = vcmp.eq.s32.totalorder %v330, 1
    %336 = vrot.lane.b32.xlu0 %v326, 97
    %v337 = vpop.permute.xlu0 %336
    %338 = vrot.lane.b32.xlu0 %v327, 97
    %v339 = vpop.permute.xlu0 %338
    %340 = vrot.lane.b32.xlu0 %v328, 97
    %v341 = vpop.permute.xlu0 %340
    %342 = vrot.lane.b32.xlu0 %v329, 97
    %v343 = vpop.permute.xlu0 %342
    %v348 = vsel %vm331, %v337, 0.0
    %v349 = vsel %vm331, %v339, 0.0
    %v350 = vsel %vm331, %v341, 0.0
    %v351 = vsel %vm331, %v343, 0.0
    %vm352 = vcmp.lt.s32.totalorder %v59, 15
    %353 = vrot.lane.b32.xlu0 %v290, 32
    %v354 = vpop.permute.xlu0 %353
    %v355 = vsel %vm305, %v354, %v290
    %356 = vrot.lane.b32.xlu0 %v293, 32
    %v357 = vpop.permute.xlu0 %356
    %v358 = vsel %vm305, %v357, %v293
    %359 = vrot.lane.b32.xlu0 %v298, 32
    %v360 = vpop.permute.xlu0 %359
    %v361 = vsel %vm305, %v360, %v298
    %362 = vrot.lane.b32.xlu0 %v301, 32
    %v363 = vpop.permute.xlu0 %362
    %v364 = vsel %vm305, %v363, %v301
    %365 = vrot.lane.b32.xlu0 %v355, 32
    %v366 = vpop.permute.xlu0 %365
    %367 = vrot.lane.b32.xlu0 %v358, 32
    %v368 = vpop.permute.xlu0 %367
    %369 = vrot.lane.b32.xlu0 %v361, 32
    %v370 = vpop.permute.xlu0 %369
    %371 = vrot.lane.b32.xlu0 %v364, 32
    %v372 = vpop.permute.xlu0 %371
    %v373 = vsel %vm305, %v366, %v290
    %v374 = vsel %vm305, %v368, %v293
    %v375 = vsel %vm305, %v370, %v298
    %v376 = vsel %vm305, %v372, %v301
    %v377 = vsel %vm352, 1, 0
    %vm378 = vcmp.eq.s32.totalorder %v377, 1
    %383 = vrot.lane.b32.xlu0 %v373, 127
    %v384 = vpop.permute.xlu0 %383
    %385 = vrot.lane.b32.xlu0 %v374, 127
    %v386 = vpop.permute.xlu0 %385
    %387 = vrot.lane.b32.xlu0 %v375, 127
    %v388 = vpop.permute.xlu0 %387
    %389 = vrot.lane.b32.xlu0 %v376, 127
    %v390 = vpop.permute.xlu0 %389
    %v395 = vsel %vm378, %v384, 0.0
    %v396 = vsel %vm378, %v386, 0.0
    %v397 = vsel %vm378, %v388, 0.0
    %v398 = vsel %vm378, %v390, 0.0
    %v399 = vadd.f32 %v274, %v348
    %v400 = vadd.f32 %v277, %v349
    %v401 = vadd.f32 %v282, %v350
    %v402 = vadd.f32 %v285, %v351
    %v403 = vadd.f32 %v399, %v395
    %v404 = vadd.f32 %v400, %v396
    %v405 = vadd.f32 %v401, %v397
    %v406 = vadd.f32 %v402, %v398
    %v407 = vld [vmem:[%s4] sm:$0xff]
    %v408 = vld [vmem:[%s4 + $0x8] sm:$0xff]
    %v409 = vld [vmem:[%s4 + $0x10] sm:$0xff]
    %v410 = vld [vmem:[%s4 + $0x18] sm:$0xff]
    %412 = vset.pattern.permute.xlu0 0
    %413 = vperm.xlu0 %412, %v407
    %v414 = vpop.permute.xlu0 %413
    %417 = vset.pattern.permute.xlu0 0
    %418 = vperm.xlu0 %417, %v408
    %v419 = vpop.permute.xlu0 %418
    %422 = vset.pattern.permute.xlu0 0
    %423 = vperm.xlu0 %422, %v409
    %v424 = vpop.permute.xlu0 %423
    %427 = vset.pattern.permute.xlu0 0
    %428 = vperm.xlu0 %427, %v410
    %v429 = vpop.permute.xlu0 %428
    %v431 = vadd.f32 %v403, %v414
    %v432 = vadd.f32 %v404, %v419
    %v433 = vadd.f32 %v405, %v424
    %v434 = vadd.f32 %v406, %v429
    %v435 = vmax.f32 %v431, 0.0
    %v436 = vmax.f32 %v432, 0.0
    %v437 = vmax.f32 %v433, 0.0
    %v438 = vmax.f32 %v434, 0.0
    %v439 = vld [vmem:[%s5] sm:$0xf]
    %v440 = vld [vmem:[%s5 + $0x4] sm:$0xf]
    %v441 = vld [vmem:[%s5 + $0x8] sm:$0xf]
    %v442 = vld [vmem:[%s5 + $0xc] sm:$0xf]
    %v443 = vpack.c.bf16 %v436, %v435
    %v444 = vpack.c.bf16 %v438, %v437
    %v445 = vld [vmem:[%s6] sm:$0xff]
    %v446 = vld [vmem:[%s6 + $0x8] sm:$0xff]
    %v447 = vld [vmem:[%s6 + $0x10] sm:$0xff]
    %v448 = vld [vmem:[%s6 + $0x18] sm:$0xff]
    %450 = vset.pattern.permute.xlu0 0
    %451 = vperm.xlu0 %450, %v445
    %v452 = vpop.permute.xlu0 %451
    %455 = vset.pattern.permute.xlu0 0
    %456 = vperm.xlu0 %455, %v446
    %v457 = vpop.permute.xlu0 %456
    %460 = vset.pattern.permute.xlu0 0
    %461 = vperm.xlu0 %460, %v447
    %v462 = vpop.permute.xlu0 %461
    %465 = vset.pattern.permute.xlu0 0
    %466 = vperm.xlu0 %465, %v448
    %v467 = vpop.permute.xlu0 %466
    %v473 = vunpack.c.l.b16 %v439
    %v474 = vunpack.c.l.b16 %v440
    %v475 = vunpack.c.l.b16 %v441
    %v476 = vunpack.c.l.b16 %v442
    %v477 = vpack.c.b16 %v474, %v473
    %v478 = vpack.c.b16 %v476, %v475
    %v480 = vsel %vm204, %v477, 0
    %v483 = vsel %vm204, %v478, 0
    %485 = vmatprep.subr.bf16.mxu0 0
    %486 = vmatpush1.bf16.msra.mxu0 %v443
    %487 = vmatprep.subr.bf16.mxu0 0
    %488 = vmatpush1.bf16.msra.mxu0 %v444
    %489 = vmatprep.subr.bf16.mxu0 0
    %490 = vmatpush1.bf16.msra.mxu0 0
    %491 = vmatprep.subr.bf16.mxu0 0
    %492 = vmatpush1.bf16.msra.mxu0 0
    %493 = vmatprep.subr.bf16.mxu0 0
    %494 = vmatpush1.bf16.msra.mxu0 0
    %495 = vmatprep.subr.bf16.mxu0 0
    %496 = vmatpush1.bf16.msra.mxu0 0
    %497 = vmatprep.subr.bf16.mxu0 0
    %498 = vmatpush1.bf16.msra.mxu0 0
    %499 = vmatprep.subr.bf16.mxu0 0
    %500 = vmatpush1.bf16.msra.mxu0 0
    %501 = vmatprep.subr.bf16.mxu0 0
    %502 = vmatpush1.bf16.msra.mxu0 0
    %503 = vmatprep.subr.bf16.mxu0 0
    %504 = vmatpush1.bf16.msra.mxu0 0
    %505 = vmatprep.subr.bf16.mxu0 0
    %506 = vmatpush1.bf16.msra.mxu0 0
    %507 = vmatprep.subr.bf16.mxu0 0
    %508 = vmatpush1.bf16.msra.mxu0 0
    %509 = vmatprep.subr.bf16.mxu0 0
    %510 = vmatpush1.bf16.msra.mxu0 0
    %511 = vmatprep.subr.bf16.mxu0 0
    %512 = vmatpush1.bf16.msra.mxu0 0
    %513 = vmatprep.subr.bf16.mxu0 0
    %514 = vmatpush1.bf16.msra.mxu0 0
    %515 = vmatprep.subr.bf16.mxu0 0
    %516 = vmatpush1.bf16.msra.mxu0 0
    %517 = vmatprep.mubr.bf16.mxu0 0
    %518 = vmatmul.mubr.bf16.gmra.mrb[0].mxu0 %v480
    %v519 = vpop.f32.mrb[0].mxu0
    %v520 = vadd.f32 %v452, %v519
    %v521 = vpop.f32.mrb[0].mxu0
    %v522 = vpop.f32.mrb[0].mxu0
    %v523 = vadd.f32 %v457, %v522
    %v524 = vpop.f32.mrb[0].mxu0
    %525 = vmatprep.mubr.bf16.mxu0 0
    %526 = vmatmul.mubr.bf16.gmra.mrb[0].mxu0 %v483
    %v527 = vpop.f32.mrb[0].mxu0
    %v528 = vadd.f32 %v462, %v527
    %v529 = vpop.f32.mrb[0].mxu0
    %v530 = vpop.f32.mrb[0].mxu0
    %v531 = vadd.f32 %v467, %v530
    %v532 = vpop.f32.mrb[0].mxu0
    %533 = vdwg.mxu0
    %v534 = vadd.f32 %v146, %v520
    %v535 = vadd.f32 %v149, %v523
    %v536 = vadd.f32 %v154, %v528
    %v537 = vadd.f32 %v157, %v531
    %s538 = scalar_lea.vmem %s3, 48
    %v539 = vld [vmem:[%s538] sm:$0xf]
    %v540 = vld [vmem:[%s538 + $0x4] sm:$0xf]
    %v541 = vld [vmem:[%s538 + $0x8] sm:$0xf]
    %v542 = vld [vmem:[%s538 + $0xc] sm:$0xf]
    %v543 = vld [vmem:[%s538 + $0x10] sm:$0xf]
    %v544 = vld [vmem:[%s538 + $0x14] sm:$0xf]
    %v545 = vld [vmem:[%s538 + $0x18] sm:$0xf]
    %v546 = vld [vmem:[%s538 + $0x1c] sm:$0xf]
    %v547 = vld [vmem:[%s538 + $0x20] sm:$0xf]
    %v548 = vld [vmem:[%s538 + $0x24] sm:$0xf]
    %v549 = vld [vmem:[%s538 + $0x28] sm:$0xf]
    %v550 = vld [vmem:[%s538 + $0x2c] sm:$0xf]
    %v551 = vpack.c.bf16 %v535, %v534
    %v552 = vpack.c.bf16 %v537, %v536
    %v565 = vunpack.c.l.b16 %v539
    %v566 = vunpack.c.l.b16 %v540
    %v567 = vunpack.c.l.b16 %v541
    %v568 = vunpack.c.l.b16 %v542
    %v569 = vunpack.c.l.b16 %v543
    %v570 = vunpack.c.l.b16 %v544
    %v571 = vunpack.c.l.b16 %v545
    %v572 = vunpack.c.l.b16 %v546
    %v573 = vunpack.c.l.b16 %v547
    %v574 = vunpack.c.l.b16 %v548
    %v575 = vunpack.c.l.b16 %v549
    %v576 = vunpack.c.l.b16 %v550
    %v577 = vpack.c.b16 %v566, %v565
    %v578 = vpack.c.b16 %v568, %v567
    %v579 = vpack.c.b16 %v570, %v569
    %v580 = vpack.c.b16 %v572, %v571
    %v581 = vpack.c.b16 %v574, %v573
    %v582 = vpack.c.b16 %v576, %v575
    %v584 = vsel %vm204, %v577, 0
    %v587 = vsel %vm204, %v578, 0
    %v590 = vsel %vm204, %v579, 0
    %v593 = vsel %vm204, %v580, 0
    %v596 = vsel %vm204, %v581, 0
    %v599 = vsel %vm204, %v582, 0
    %601 = vmatprep.subr.bf16.mxu0 0
    %602 = vmatpush1.bf16.msra.mxu0 %v551
    %603 = vmatprep.subr.bf16.mxu0 0
    %604 = vmatpush1.bf16.msra.mxu0 %v552
    %605 = vmatprep.subr.bf16.mxu0 0
    %606 = vmatpush1.bf16.msra.mxu0 0
    %607 = vmatprep.subr.bf16.mxu0 0
    %608 = vmatpush1.bf16.msra.mxu0 0
    %609 = vmatprep.subr.bf16.mxu0 0
    %610 = vmatpush1.bf16.msra.mxu0 0
    %611 = vmatprep.subr.bf16.mxu0 0
    %612 = vmatpush1.bf16.msra.mxu0 0
    %613 = vmatprep.subr.bf16.mxu0 0
    %614 = vmatpush1.bf16.msra.mxu0 0
    %615 = vmatprep.subr.bf16.mxu0 0
    %616 = vmatpush1.bf16.msra.mxu0 0
    %617 = vmatprep.subr.bf16.mxu0 0
    %618 = vmatpush1.bf16.msra.mxu0 0
    %619 = vmatprep.subr.bf16.mxu0 0
    %620 = vmatpush1.bf16.msra.mxu0 0
    %621 = vmatprep.subr.bf16.mxu0 0
    %622 = vmatpush1.bf16.msra.mxu0 0
    %623 = vmatprep.subr.bf16.mxu0 0
    %624 = vmatpush1.bf16.msra.mxu0 0
    %625 = vmatprep.subr.bf16.mxu0 0
    %626 = vmatpush1.bf16.msra.mxu0 0
    %627 = vmatprep.subr.bf16.mxu0 0
    %628 = vmatpush1.bf16.msra.mxu0 0
    %629 = vmatprep.subr.bf16.mxu0 0
    %630 = vmatpush1.bf16.msra.mxu0 0
    %631 = vmatprep.subr.bf16.mxu0 0
    %632 = vmatpush1.bf16.msra.mxu0 0
    %633 = vmatprep.mubr.bf16.mxu0 0
    %634 = vmatmul.mubr.bf16.gmra.mrb[0].mxu0 %v584
    %v635 = vpop.f32.mrb[0].mxu0
    %v636 = vadd.f32 0.0, %v635
    %v637 = vpop.f32.mrb[0].mxu0
    %v638 = vpop.f32.mrb[0].mxu0
    %v639 = vadd.f32 0.0, %v638
    %v640 = vpop.f32.mrb[0].mxu0
    %641 = vmatprep.mubr.bf16.mxu0 0
    %642 = vmatmul.mubr.bf16.gmra.mrb[0].mxu0 %v587
    %v643 = vpop.f32.mrb[0].mxu0
    %v644 = vadd.f32 0.0, %v643
    %v645 = vpop.f32.mrb[0].mxu0
    %v646 = vpop.f32.mrb[0].mxu0
    %v647 = vadd.f32 0.0, %v646
    %v648 = vpop.f32.mrb[0].mxu0
    %649 = vmatprep.mubr.bf16.mxu0 0
    %650 = vmatmul.mubr.bf16.gmra.mrb[0].mxu0 %v590
    %v651 = vpop.f32.mrb[0].mxu0
    %v652 = vadd.f32 0.0, %v651
    %v653 = vpop.f32.mrb[0].mxu0
    %v654 = vpop.f32.mrb[0].mxu0
    %v655 = vadd.f32 0.0, %v654
    %v656 = vpop.f32.mrb[0].mxu0
    %657 = vmatprep.mubr.bf16.mxu0 0
    %658 = vmatmul.mubr.bf16.gmra.mrb[0].mxu0 %v593
    %v659 = vpop.f32.mrb[0].mxu0
    %v660 = vadd.f32 0.0, %v659
    %v661 = vpop.f32.mrb[0].mxu0
    %v662 = vpop.f32.mrb[0].mxu0
    %v663 = vadd.f32 0.0, %v662
    %v664 = vpop.f32.mrb[0].mxu0
    %665 = vmatprep.mubr.bf16.mxu0 0
    %666 = vmatmul.mubr.bf16.gmra.mrb[0].mxu0 %v596
    %v667 = vpop.f32.mrb[0].mxu0
    %v668 = vadd.f32 0.0, %v667
    %v669 = vpop.f32.mrb[0].mxu0
    %v670 = vpop.f32.mrb[0].mxu0
    %v671 = vadd.f32 0.0, %v670
    %v672 = vpop.f32.mrb[0].mxu0
    %673 = vmatprep.mubr.bf16.mxu0 0
    %674 = vmatmul.mubr.bf16.gmra.mrb[0].mxu0 %v599
    %v675 = vpop.f32.mrb[0].mxu0
    %v676 = vadd.f32 0.0, %v675
    %v677 = vpop.f32.mrb[0].mxu0
    %v678 = vpop.f32.mrb[0].mxu0
    %v679 = vadd.f32 0.0, %v678
    %v680 = vpop.f32.mrb[0].mxu0
    %681 = vdwg.mxu0
    %vm682 = vcmp.ge.s32.totalorder %v59, 2
    %683 = vrot.lane.b32.xlu0 %v636, 32
    %v684 = vpop.permute.xlu0 %683
    %v685 = vsel %vm305, %v684, %v636
    %686 = vrot.lane.b32.xlu0 %v639, 32
    %v687 = vpop.permute.xlu0 %686
    %v688 = vsel %vm305, %v687, %v639
    %689 = vrot.lane.b32.xlu0 %v644, 32
    %v690 = vpop.permute.xlu0 %689
    %v691 = vsel %vm305, %v690, %v644
    %692 = vrot.lane.b32.xlu0 %v647, 32
    %v693 = vpop.permute.xlu0 %692
    %v694 = vsel %vm305, %v693, %v647
    %695 = vrot.lane.b32.xlu0 %v685, 32
    %v696 = vpop.permute.xlu0 %695
    %697 = vrot.lane.b32.xlu0 %v688, 32
    %v698 = vpop.permute.xlu0 %697
    %699 = vrot.lane.b32.xlu0 %v691, 32
    %v700 = vpop.permute.xlu0 %699
    %701 = vrot.lane.b32.xlu0 %v694, 32
    %v702 = vpop.permute.xlu0 %701
    %v703 = vsel %vm305, %v696, %v636
    %v704 = vsel %vm305, %v698, %v639
    %v705 = vsel %vm305, %v700, %v644
    %v706 = vsel %vm305, %v702, %v647
    %v707 = vsel %vm682, 1, 0
    %vm708 = vcmp.eq.s32.totalorder %v707, 1
    %713 = vrot.lane.b32.xlu0 %v703, 98
    %v714 = vpop.permute.xlu0 %713
    %715 = vrot.lane.b32.xlu0 %v704, 98
    %v716 = vpop.permute.xlu0 %715
    %717 = vrot.lane.b32.xlu0 %v705, 98
    %v718 = vpop.permute.xlu0 %717
    %719 = vrot.lane.b32.xlu0 %v706, 98
    %v720 = vpop.permute.xlu0 %719
    %v725 = vsel %vm708, %v714, 0.0
    %v726 = vsel %vm708, %v716, 0.0
    %v727 = vsel %vm708, %v718, 0.0
    %v728 = vsel %vm708, %v720, 0.0
    %vm729 = vcmp.lt.s32.totalorder %v59, 14
    %730 = vrot.lane.b32.xlu0 %v668, 32
    %v731 = vpop.permute.xlu0 %730
    %v732 = vsel %vm305, %v731, %v668
    %733 = vrot.lane.b32.xlu0 %v671, 32
    %v734 = vpop.permute.xlu0 %733
    %v735 = vsel %vm305, %v734, %v671
    %736 = vrot.lane.b32.xlu0 %v676, 32
    %v737 = vpop.permute.xlu0 %736
    %v738 = vsel %vm305, %v737, %v676
    %739 = vrot.lane.b32.xlu0 %v679, 32
    %v740 = vpop.permute.xlu0 %739
    %v741 = vsel %vm305, %v740, %v679
    %742 = vrot.lane.b32.xlu0 %v732, 32
    %v743 = vpop.permute.xlu0 %742
    %744 = vrot.lane.b32.xlu0 %v735, 32
    %v745 = vpop.permute.xlu0 %744
    %746 = vrot.lane.b32.xlu0 %v738, 32
    %v747 = vpop.permute.xlu0 %746
    %748 = vrot.lane.b32.xlu0 %v741, 32
    %v749 = vpop.permute.xlu0 %748
    %v750 = vsel %vm305, %v743, %v668
    %v751 = vsel %vm305, %v745, %v671
    %v752 = vsel %vm305, %v747, %v676
    %v753 = vsel %vm305, %v749, %v679
    %v754 = vsel %vm729, 1, 0
    %vm755 = vcmp.eq.s32.totalorder %v754, 1
    %760 = vrot.lane.b32.xlu0 %v750, 126
    %v761 = vpop.permute.xlu0 %760
    %762 = vrot.lane.b32.xlu0 %v751, 126
    %v763 = vpop.permute.xlu0 %762
    %764 = vrot.lane.b32.xlu0 %v752, 126
    %v765 = vpop.permute.xlu0 %764
    %766 = vrot.lane.b32.xlu0 %v753, 126
    %v767 = vpop.permute.xlu0 %766
    %v772 = vsel %vm755, %v761, 0.0
    %v773 = vsel %vm755, %v763, 0.0
    %v774 = vsel %vm755, %v765, 0.0
    %v775 = vsel %vm755, %v767, 0.0
    %v776 = vadd.f32 %v652, %v725
    %v777 = vadd.f32 %v655, %v726
    %v778 = vadd.f32 %v660, %v727
    %v779 = vadd.f32 %v663, %v728
    %v780 = vadd.f32 %v776, %v772
    %v781 = vadd.f32 %v777, %v773
    %v782 = vadd.f32 %v778, %v774
    %v783 = vadd.f32 %v779, %v775
    %s784 = scalar_lea.vmem %s4, 32
    %v785 = vld [vmem:[%s784] sm:$0xff]
    %v786 = vld [vmem:[%s784 + $0x8] sm:$0xff]
    %v787 = vld [vmem:[%s784 + $0x10] sm:$0xff]
    %v788 = vld [vmem:[%s784 + $0x18] sm:$0xff]
    %790 = vset.pattern.permute.xlu0 0
    %791 = vperm.xlu0 %790, %v785
    %v792 = vpop.permute.xlu0 %791
    %795 = vset.pattern.permute.xlu0 0
    %796 = vperm.xlu0 %795, %v786
    %v797 = vpop.permute.xlu0 %796
    %800 = vset.pattern.permute.xlu0 0
    %801 = vperm.xlu0 %800, %v787
    %v802 = vpop.permute.xlu0 %801
    %805 = vset.pattern.permute.xlu0 0
    %806 = vperm.xlu0 %805, %v788
    %v807 = vpop.permute.xlu0 %806
    %v809 = vadd.f32 %v780, %v792
    %v810 = vadd.f32 %v781, %v797
    %v811 = vadd.f32 %v782, %v802
    %v812 = vadd.f32 %v783, %v807
    %v813 = vmax.f32 %v809, 0.0
    %v814 = vmax.f32 %v810, 0.0
    %v815 = vmax.f32 %v811, 0.0
    %v816 = vmax.f32 %v812, 0.0
    %s817 = scalar_lea.vmem %s5, 16
    %v818 = vld [vmem:[%s817] sm:$0xf]
    %v819 = vld [vmem:[%s817 + $0x4] sm:$0xf]
    %v820 = vld [vmem:[%s817 + $0x8] sm:$0xf]
    %v821 = vld [vmem:[%s817 + $0xc] sm:$0xf]
    %v822 = vpack.c.bf16 %v814, %v813
    %v823 = vpack.c.bf16 %v816, %v815
    %s824 = scalar_lea.vmem %s6, 32
    %v825 = vld [vmem:[%s824] sm:$0xff]
    %v826 = vld [vmem:[%s824 + $0x8] sm:$0xff]
    %v827 = vld [vmem:[%s824 + $0x10] sm:$0xff]
    %v828 = vld [vmem:[%s824 + $0x18] sm:$0xff]
    %830 = vset.pattern.permute.xlu0 0
    %831 = vperm.xlu0 %830, %v825
    %v832 = vpop.permute.xlu0 %831
    %835 = vset.pattern.permute.xlu0 0
    %836 = vperm.xlu0 %835, %v826
    %v837 = vpop.permute.xlu0 %836
    %840 = vset.pattern.permute.xlu0 0
    %841 = vperm.xlu0 %840, %v827
    %v842 = vpop.permute.xlu0 %841
    %845 = vset.pattern.permute.xlu0 0
    %846 = vperm.xlu0 %845, %v828
    %v847 = vpop.permute.xlu0 %846
    %v853 = vunpack.c.l.b16 %v818
    %v854 = vunpack.c.l.b16 %v819
    %v855 = vunpack.c.l.b16 %v820
    %v856 = vunpack.c.l.b16 %v821
    %v857 = vpack.c.b16 %v854, %v853
    %v858 = vpack.c.b16 %v856, %v855
    %v860 = vsel %vm204, %v857, 0
    %v863 = vsel %vm204, %v858, 0
    %865 = vmatprep.subr.bf16.mxu0 0
    %866 = vmatpush1.bf16.msra.mxu0 %v822
    %867 = vmatprep.subr.bf16.mxu0 0
    %868 = vmatpush1.bf16.msra.mxu0 %v823
    %869 = vmatprep.subr.bf16.mxu0 0
    %870 = vmatpush1.bf16.msra.mxu0 0
    %871 = vmatprep.subr.bf16.mxu0 0
    %872 = vmatpush1.bf16.msra.mxu0 0
    %873 = vmatprep.subr.bf16.mxu0 0
    %874 = vmatpush1.bf16.msra.mxu0 0
    %875 = vmatprep.subr.bf16.mxu0 0
    %876 = vmatpush1.bf16.msra.mxu0 0
    %877 = vmatprep.subr.bf16.mxu0 0
    %878 = vmatpush1.bf16.msra.mxu0 0
    %879 = vmatprep.subr.bf16.mxu0 0
    %880 = vmatpush1.bf16.msra.mxu0 0
    %881 = vmatprep.subr.bf16.mxu0 0
    %882 = vmatpush1.bf16.msra.mxu0 0
    %883 = vmatprep.subr.bf16.mxu0 0
    %884 = vmatpush1.bf16.msra.mxu0 0
    %885 = vmatprep.subr.bf16.mxu0 0
    %886 = vmatpush1.bf16.msra.mxu0 0
    %887 = vmatprep.subr.bf16.mxu0 0
    %888 = vmatpush1.bf16.msra.mxu0 0
    %889 = vmatprep.subr.bf16.mxu0 0
    %890 = vmatpush1.bf16.msra.mxu0 0
    %891 = vmatprep.subr.bf16.mxu0 0
    %892 = vmatpush1.bf16.msra.mxu0 0
    %893 = vmatprep.subr.bf16.mxu0 0
    %894 = vmatpush1.bf16.msra.mxu0 0
    %895 = vmatprep.subr.bf16.mxu0 0
    %896 = vmatpush1.bf16.msra.mxu0 0
    %897 = vmatprep.mubr.bf16.mxu0 0
    %898 = vmatmul.mubr.bf16.gmra.mrb[0].mxu0 %v860
    %v899 = vpop.f32.mrb[0].mxu0
    %v900 = vadd.f32 %v832, %v899
    %v901 = vpop.f32.mrb[0].mxu0
    %v902 = vpop.f32.mrb[0].mxu0
    %v903 = vadd.f32 %v837, %v902
    %v904 = vpop.f32.mrb[0].mxu0
    %905 = vmatprep.mubr.bf16.mxu0 0
    %906 = vmatmul.mubr.bf16.gmra.mrb[0].mxu0 %v863
    %v907 = vpop.f32.mrb[0].mxu0
    %v908 = vadd.f32 %v842, %v907
    %v909 = vpop.f32.mrb[0].mxu0
    %v910 = vpop.f32.mrb[0].mxu0
    %v911 = vadd.f32 %v847, %v910
    %v912 = vpop.f32.mrb[0].mxu0
    %913 = vdwg.mxu0
    %v914 = vadd.f32 %v534, %v900
    %v915 = vadd.f32 %v535, %v903
    %v916 = vadd.f32 %v536, %v908
    %v917 = vadd.f32 %v537, %v911
    %s918 = scalar_lea.vmem %s3, 96
    %v919 = vld [vmem:[%s918] sm:$0xf]
    %v920 = vld [vmem:[%s918 + $0x4] sm:$0xf]
    %v921 = vld [vmem:[%s918 + $0x8] sm:$0xf]
    %v922 = vld [vmem:[%s918 + $0xc] sm:$0xf]
    %v923 = vld [vmem:[%s918 + $0x10] sm:$0xf]
    %v924 = vld [vmem:[%s918 + $0x14] sm:$0xf]
    %v925 = vld [vmem:[%s918 + $0x18] sm:$0xf]
    %v926 = vld [vmem:[%s918 + $0x1c] sm:$0xf]
    %v927 = vld [vmem:[%s918 + $0x20] sm:$0xf]
    %v928 = vld [vmem:[%s918 + $0x24] sm:$0xf]
    %v929 = vld [vmem:[%s918 + $0x28] sm:$0xf]
    %v930 = vld [vmem:[%s918 + $0x2c] sm:$0xf]
    %v931 = vpack.c.bf16 %v915, %v914
    %v932 = vpack.c.bf16 %v917, %v916
    %v945 = vunpack.c.l.b16 %v919
    %v946 = vunpack.c.l.b16 %v920
    %v947 = vunpack.c.l.b16 %v921
    %v948 = vunpack.c.l.b16 %v922
    %v949 = vunpack.c.l.b16 %v923
    %v950 = vunpack.c.l.b16 %v924
    %v951 = vunpack.c.l.b16 %v925
    %v952 = vunpack.c.l.b16 %v926
    %v953 = vunpack.c.l.b16 %v927
    %v954 = vunpack.c.l.b16 %v928
    %v955 = vunpack.c.l.b16 %v929
    %v956 = vunpack.c.l.b16 %v930
    %v957 = vpack.c.b16 %v946, %v945
    %v958 = vpack.c.b16 %v948, %v947
    %v959 = vpack.c.b16 %v950, %v949
    %v960 = vpack.c.b16 %v952, %v951
    %v961 = vpack.c.b16 %v954, %v953
    %v962 = vpack.c.b16 %v956, %v955
    %v964 = vsel %vm204, %v957, 0
    %v967 = vsel %vm204, %v958, 0
    %v970 = vsel %vm204, %v959, 0
    %v973 = vsel %vm204, %v960, 0
    %v976 = vsel %vm204, %v961, 0
    %v979 = vsel %vm204, %v962, 0
    %981 = vmatprep.subr.bf16.mxu0 0
    %982 = vmatpush1.bf16.msra.mxu0 %v931
    %983 = vmatprep.subr.bf16.mxu0 0
    %984 = vmatpush1.bf16.msra.mxu0 %v932
    %985 = vmatprep.subr.bf16.mxu0 0
    %986 = vmatpush1.bf16.msra.mxu0 0
    %987 = vmatprep.subr.bf16.mxu0 0
    %988 = vmatpush1.bf16.msra.mxu0 0
    %989 = vmatprep.subr.bf16.mxu0 0
    %990 = vmatpush1.bf16.msra.mxu0 0
    %991 = vmatprep.subr.bf16.mxu0 0
    %992 = vmatpush1.bf16.msra.mxu0 0
    %993 = vmatprep.subr.bf16.mxu0 0
    %994 = vmatpush1.bf16.msra.mxu0 0
    %995 = vmatprep.subr.bf16.mxu0 0
    %996 = vmatpush1.bf16.msra.mxu0 0
    %997 = vmatprep.subr.bf16.mxu0 0
    %998 = vmatpush1.bf16.msra.mxu0 0
    %999 = vmatprep.subr.bf16.mxu0 0
    %1000 = vmatpush1.bf16.msra.mxu0 0
    %1001 = vmatprep.subr.bf16.mxu0 0
    %1002 = vmatpush1.bf16.msra.mxu0 0
    %1003 = vmatprep.subr.bf16.mxu0 0
    %1004 = vmatpush1.bf16.msra.mxu0 0
    %1005 = vmatprep.subr.bf16.mxu0 0
    %1006 = vmatpush1.bf16.msra.mxu0 0
    %1007 = vmatprep.subr.bf16.mxu0 0
    %1008 = vmatpush1.bf16.msra.mxu0 0
    %1009 = vmatprep.subr.bf16.mxu0 0
    %1010 = vmatpush1.bf16.msra.mxu0 0
    %1011 = vmatprep.subr.bf16.mxu0 0
    %1012 = vmatpush1.bf16.msra.mxu0 0
    %1013 = vmatprep.mubr.bf16.mxu0 0
    %1014 = vmatmul.mubr.bf16.gmra.mrb[0].mxu0 %v964
    %v1015 = vpop.f32.mrb[0].mxu0
    %v1016 = vadd.f32 0.0, %v1015
    %v1017 = vpop.f32.mrb[0].mxu0
    %v1018 = vpop.f32.mrb[0].mxu0
    %v1019 = vadd.f32 0.0, %v1018
    %v1020 = vpop.f32.mrb[0].mxu0
    %1021 = vmatprep.mubr.bf16.mxu0 0
    %1022 = vmatmul.mubr.bf16.gmra.mrb[0].mxu0 %v967
    %v1023 = vpop.f32.mrb[0].mxu0
    %v1024 = vadd.f32 0.0, %v1023
    %v1025 = vpop.f32.mrb[0].mxu0
    %v1026 = vpop.f32.mrb[0].mxu0
    %v1027 = vadd.f32 0.0, %v1026
    %v1028 = vpop.f32.mrb[0].mxu0
    %1029 = vmatprep.mubr.bf16.mxu0 0
    %1030 = vmatmul.mubr.bf16.gmra.mrb[0].mxu0 %v970
    %v1031 = vpop.f32.mrb[0].mxu0
    %v1032 = vadd.f32 0.0, %v1031
    %v1033 = vpop.f32.mrb[0].mxu0
    %v1034 = vpop.f32.mrb[0].mxu0
    %v1035 = vadd.f32 0.0, %v1034
    %v1036 = vpop.f32.mrb[0].mxu0
    %1037 = vmatprep.mubr.bf16.mxu0 0
    %1038 = vmatmul.mubr.bf16.gmra.mrb[0].mxu0 %v973
    %v1039 = vpop.f32.mrb[0].mxu0
    %v1040 = vadd.f32 0.0, %v1039
    %v1041 = vpop.f32.mrb[0].mxu0
    %v1042 = vpop.f32.mrb[0].mxu0
    %v1043 = vadd.f32 0.0, %v1042
    %v1044 = vpop.f32.mrb[0].mxu0
    %1045 = vmatprep.mubr.bf16.mxu0 0
    %1046 = vmatmul.mubr.bf16.gmra.mrb[0].mxu0 %v976
    %v1047 = vpop.f32.mrb[0].mxu0
    %v1048 = vadd.f32 0.0, %v1047
    %v1049 = vpop.f32.mrb[0].mxu0
    %v1050 = vpop.f32.mrb[0].mxu0
    %v1051 = vadd.f32 0.0, %v1050
    %v1052 = vpop.f32.mrb[0].mxu0
    %1053 = vmatprep.mubr.bf16.mxu0 0
    %1054 = vmatmul.mubr.bf16.gmra.mrb[0].mxu0 %v979
    %v1055 = vpop.f32.mrb[0].mxu0
    %v1056 = vadd.f32 0.0, %v1055
    %v1057 = vpop.f32.mrb[0].mxu0
    %v1058 = vpop.f32.mrb[0].mxu0
    %v1059 = vadd.f32 0.0, %v1058
    %v1060 = vpop.f32.mrb[0].mxu0
    %1061 = vdwg.mxu0
    %vm1062 = vcmp.ge.s32.totalorder %v59, 4
    %1063 = vrot.lane.b32.xlu0 %v1016, 32
    %v1064 = vpop.permute.xlu0 %1063
    %v1065 = vsel %vm305, %v1064, %v1016
    %1066 = vrot.lane.b32.xlu0 %v1019, 32
    %v1067 = vpop.permute.xlu0 %1066
    %v1068 = vsel %vm305, %v1067, %v1019
    %1069 = vrot.lane.b32.xlu0 %v1024, 32
    %v1070 = vpop.permute.xlu0 %1069
    %v1071 = vsel %vm305, %v1070, %v1024
    %1072 = vrot.lane.b32.xlu0 %v1027, 32
    %v1073 = vpop.permute.xlu0 %1072
    %v1074 = vsel %vm305, %v1073, %v1027
    %1075 = vrot.lane.b32.xlu0 %v1065, 32
    %v1076 = vpop.permute.xlu0 %1075
    %1077 = vrot.lane.b32.xlu0 %v1068, 32
    %v1078 = vpop.permute.xlu0 %1077
    %1079 = vrot.lane.b32.xlu0 %v1071, 32
    %v1080 = vpop.permute.xlu0 %1079
    %1081 = vrot.lane.b32.xlu0 %v1074, 32
    %v1082 = vpop.permute.xlu0 %1081
    %v1083 = vsel %vm305, %v1076, %v1016
    %v1084 = vsel %vm305, %v1078, %v1019
    %v1085 = vsel %vm305, %v1080, %v1024
    %v1086 = vsel %vm305, %v1082, %v1027
    %v1087 = vsel %vm1062, 1, 0
    %vm1088 = vcmp.eq.s32.totalorder %v1087, 1
    %1093 = vrot.lane.b32.xlu0 %v1083, 100
    %v1094 = vpop.permute.xlu0 %1093
    %1095 = vrot.lane.b32.xlu0 %v1084, 100
    %v1096 = vpop.permute.xlu0 %1095
    %1097 = vrot.lane.b32.xlu0 %v1085, 100
    %v1098 = vpop.permute.xlu0 %1097
    %1099 = vrot.lane.b32.xlu0 %v1086, 100
    %v1100 = vpop.permute.xlu0 %1099
    %v1105 = vsel %vm1088, %v1094, 0.0
    %v1106 = vsel %vm1088, %v1096, 0.0
    %v1107 = vsel %vm1088, %v1098, 0.0
    %v1108 = vsel %vm1088, %v1100, 0.0
    %vm1109 = vcmp.lt.s32.totalorder %v59, 12
    %1110 = vrot.lane.b32.xlu0 %v1048, 32
    %v1111 = vpop.permute.xlu0 %1110
    %v1112 = vsel %vm305, %v1111, %v1048
    %1113 = vrot.lane.b32.xlu0 %v1051, 32
    %v1114 = vpop.permute.xlu0 %1113
    %v1115 = vsel %vm305, %v1114, %v1051
    %1116 = vrot.lane.b32.xlu0 %v1056, 32
    %v1117 = vpop.permute.xlu0 %1116
    %v1118 = vsel %vm305, %v1117, %v1056
    %1119 = vrot.lane.b32.xlu0 %v1059, 32
    %v1120 = vpop.permute.xlu0 %1119
    %v1121 = vsel %vm305, %v1120, %v1059
    %1122 = vrot.lane.b32.xlu0 %v1112, 32
    %v1123 = vpop.permute.xlu0 %1122
    %1124 = vrot.lane.b32.xlu0 %v1115, 32
    %v1125 = vpop.permute.xlu0 %1124
    %1126 = vrot.lane.b32.xlu0 %v1118, 32
    %v1127 = vpop.permute.xlu0 %1126
    %1128 = vrot.lane.b32.xlu0 %v1121, 32
    %v1129 = vpop.permute.xlu0 %1128
    %v1130 = vsel %vm305, %v1123, %v1048
    %v1131 = vsel %vm305, %v1125, %v1051
    %v1132 = vsel %vm305, %v1127, %v1056
    %v1133 = vsel %vm305, %v1129, %v1059
    %v1134 = vsel %vm1109, 1, 0
    %vm1135 = vcmp.eq.s32.totalorder %v1134, 1
    %1140 = vrot.lane.b32.xlu0 %v1130, 124
    %v1141 = vpop.permute.xlu0 %1140
    %1142 = vrot.lane.b32.xlu0 %v1131, 124
    %v1143 = vpop.permute.xlu0 %1142
    %1144 = vrot.lane.b32.xlu0 %v1132, 124
    %v1145 = vpop.permute.xlu0 %1144
    %1146 = vrot.lane.b32.xlu0 %v1133, 124
    %v1147 = vpop.permute.xlu0 %1146
    %v1152 = vsel %vm1135, %v1141, 0.0
    %v1153 = vsel %vm1135, %v1143, 0.0
    %v1154 = vsel %vm1135, %v1145, 0.0
    %v1155 = vsel %vm1135, %v1147, 0.0
    %v1156 = vadd.f32 %v1032, %v1105
    %v1157 = vadd.f32 %v1035, %v1106
    %v1158 = vadd.f32 %v1040, %v1107
    %v1159 = vadd.f32 %v1043, %v1108
    %v1160 = vadd.f32 %v1156, %v1152
    %v1161 = vadd.f32 %v1157, %v1153
    %v1162 = vadd.f32 %v1158, %v1154
    %v1163 = vadd.f32 %v1159, %v1155
    %s1164 = scalar_lea.vmem %s4, 64
    %v1165 = vld [vmem:[%s1164] sm:$0xff]
    %v1166 = vld [vmem:[%s1164 + $0x8] sm:$0xff]
    %v1167 = vld [vmem:[%s1164 + $0x10] sm:$0xff]
    %v1168 = vld [vmem:[%s1164 + $0x18] sm:$0xff]
    %1170 = vset.pattern.permute.xlu0 0
    %1171 = vperm.xlu0 %1170, %v1165
    %v1172 = vpop.permute.xlu0 %1171
    %1175 = vset.pattern.permute.xlu0 0
    %1176 = vperm.xlu0 %1175, %v1166
    %v1177 = vpop.permute.xlu0 %1176
    %1180 = vset.pattern.permute.xlu0 0
    %1181 = vperm.xlu0 %1180, %v1167
    %v1182 = vpop.permute.xlu0 %1181
    %1185 = vset.pattern.permute.xlu0 0
    %1186 = vperm.xlu0 %1185, %v1168
    %v1187 = vpop.permute.xlu0 %1186
    %v1189 = vadd.f32 %v1160, %v1172
    %v1190 = vadd.f32 %v1161, %v1177
    %v1191 = vadd.f32 %v1162, %v1182
    %v1192 = vadd.f32 %v1163, %v1187
    %v1193 = vmax.f32 %v1189, 0.0
    %v1194 = vmax.f32 %v1190, 0.0
    %v1195 = vmax.f32 %v1191, 0.0
    %v1196 = vmax.f32 %v1192, 0.0
    %s1197 = scalar_lea.vmem %s5, 32
    %v1198 = vld [vmem:[%s1197] sm:$0xf]
    %v1199 = vld [vmem:[%s1197 + $0x4] sm:$0xf]
    %v1200 = vld [vmem:[%s1197 + $0x8] sm:$0xf]
    %v1201 = vld [vmem:[%s1197 + $0xc] sm:$0xf]
    %v1202 = vpack.c.bf16 %v1194, %v1193
    %v1203 = vpack.c.bf16 %v1196, %v1195
    %s1204 = scalar_lea.vmem %s6, 64
    %v1205 = vld [vmem:[%s1204] sm:$0xff]
    %v1206 = vld [vmem:[%s1204 + $0x8] sm:$0xff]
    %v1207 = vld [vmem:[%s1204 + $0x10] sm:$0xff]
    %v1208 = vld [vmem:[%s1204 + $0x18] sm:$0xff]
    %1210 = vset.pattern.permute.xlu0 0
    %1211 = vperm.xlu0 %1210, %v1205
    %v1212 = vpop.permute.xlu0 %1211
    %1215 = vset.pattern.permute.xlu0 0
    %1216 = vperm.xlu0 %1215, %v1206
    %v1217 = vpop.permute.xlu0 %1216
    %1220 = vset.pattern.permute.xlu0 0
    %1221 = vperm.xlu0 %1220, %v1207
    %v1222 = vpop.permute.xlu0 %1221
    %1225 = vset.pattern.permute.xlu0 0
    %1226 = vperm.xlu0 %1225, %v1208
    %v1227 = vpop.permute.xlu0 %1226
    %v1233 = vunpack.c.l.b16 %v1198
    %v1234 = vunpack.c.l.b16 %v1199
    %v1235 = vunpack.c.l.b16 %v1200
    %v1236 = vunpack.c.l.b16 %v1201
    %v1237 = vpack.c.b16 %v1234, %v1233
    %v1238 = vpack.c.b16 %v1236, %v1235
    %v1240 = vsel %vm204, %v1237, 0
    %v1243 = vsel %vm204, %v1238, 0
    %1245 = vmatprep.subr.bf16.mxu0 0
    %1246 = vmatpush1.bf16.msra.mxu0 %v1202
    %1247 = vmatprep.subr.bf16.mxu0 0
    %1248 = vmatpush1.bf16.msra.mxu0 %v1203
    %1249 = vmatprep.subr.bf16.mxu0 0
    %1250 = vmatpush1.bf16.msra.mxu0 0
    %1251 = vmatprep.subr.bf16.mxu0 0
    %1252 = vmatpush1.bf16.msra.mxu0 0
    %1253 = vmatprep.subr.bf16.mxu0 0
    %1254 = vmatpush1.bf16.msra.mxu0 0
    %1255 = vmatprep.subr.bf16.mxu0 0
    %1256 = vmatpush1.bf16.msra.mxu0 0
    %1257 = vmatprep.subr.bf16.mxu0 0
    %1258 = vmatpush1.bf16.msra.mxu0 0
    %1259 = vmatprep.subr.bf16.mxu0 0
    %1260 = vmatpush1.bf16.msra.mxu0 0
    %1261 = vmatprep.subr.bf16.mxu0 0
    %1262 = vmatpush1.bf16.msra.mxu0 0
    %1263 = vmatprep.subr.bf16.mxu0 0
    %1264 = vmatpush1.bf16.msra.mxu0 0
    %1265 = vmatprep.subr.bf16.mxu0 0
    %1266 = vmatpush1.bf16.msra.mxu0 0
    %1267 = vmatprep.subr.bf16.mxu0 0
    %1268 = vmatpush1.bf16.msra.mxu0 0
    %1269 = vmatprep.subr.bf16.mxu0 0
    %1270 = vmatpush1.bf16.msra.mxu0 0
    %1271 = vmatprep.subr.bf16.mxu0 0
    %1272 = vmatpush1.bf16.msra.mxu0 0
    %1273 = vmatprep.subr.bf16.mxu0 0
    %1274 = vmatpush1.bf16.msra.mxu0 0
    %1275 = vmatprep.subr.bf16.mxu0 0
    %1276 = vmatpush1.bf16.msra.mxu0 0
    %1277 = vmatprep.mubr.bf16.mxu0 0
    %1278 = vmatmul.mubr.bf16.gmra.mrb[0].mxu0 %v1240
    %v1279 = vpop.f32.mrb[0].mxu0
    %v1280 = vadd.f32 %v1212, %v1279
    %v1281 = vpop.f32.mrb[0].mxu0
    %v1282 = vpop.f32.mrb[0].mxu0
    %v1283 = vadd.f32 %v1217, %v1282
    %v1284 = vpop.f32.mrb[0].mxu0
    %1285 = vmatprep.mubr.bf16.mxu0 0
    %1286 = vmatmul.mubr.bf16.gmra.mrb[0].mxu0 %v1243
    %v1287 = vpop.f32.mrb[0].mxu0
    %v1288 = vadd.f32 %v1222, %v1287
    %v1289 = vpop.f32.mrb[0].mxu0
    %v1290 = vpop.f32.mrb[0].mxu0
    %v1291 = vadd.f32 %v1227, %v1290
    %v1292 = vpop.f32.mrb[0].mxu0
    %1293 = vdwg.mxu0
    %v1294 = vadd.f32 %v914, %v1280
    %v1295 = vadd.f32 %v915, %v1283
    %v1296 = vadd.f32 %v916, %v1288
    %v1297 = vadd.f32 %v917, %v1291
    %s1298 = scalar_lea.vmem %s3, 144
    %v1299 = vld [vmem:[%s1298] sm:$0xf]
    %v1300 = vld [vmem:[%s1298 + $0x4] sm:$0xf]
    %v1301 = vld [vmem:[%s1298 + $0x8] sm:$0xf]
    %v1302 = vld [vmem:[%s1298 + $0xc] sm:$0xf]
    %v1303 = vld [vmem:[%s1298 + $0x10] sm:$0xf]
    %v1304 = vld [vmem:[%s1298 + $0x14] sm:$0xf]
    %v1305 = vld [vmem:[%s1298 + $0x18] sm:$0xf]
    %v1306 = vld [vmem:[%s1298 + $0x1c] sm:$0xf]
    %v1307 = vld [vmem:[%s1298 + $0x20] sm:$0xf]
    %v1308 = vld [vmem:[%s1298 + $0x24] sm:$0xf]
    %v1309 = vld [vmem:[%s1298 + $0x28] sm:$0xf]
    %v1310 = vld [vmem:[%s1298 + $0x2c] sm:$0xf]
    %v1311 = vpack.c.bf16 %v1295, %v1294
    %v1312 = vpack.c.bf16 %v1297, %v1296
    %v1325 = vunpack.c.l.b16 %v1299
    %v1326 = vunpack.c.l.b16 %v1300
    %v1327 = vunpack.c.l.b16 %v1301
    %v1328 = vunpack.c.l.b16 %v1302
    %v1329 = vunpack.c.l.b16 %v1303
    %v1330 = vunpack.c.l.b16 %v1304
    %v1331 = vunpack.c.l.b16 %v1305
    %v1332 = vunpack.c.l.b16 %v1306
    %v1333 = vunpack.c.l.b16 %v1307
    %v1334 = vunpack.c.l.b16 %v1308
    %v1335 = vunpack.c.l.b16 %v1309
    %v1336 = vunpack.c.l.b16 %v1310
    %v1337 = vpack.c.b16 %v1326, %v1325
    %v1338 = vpack.c.b16 %v1328, %v1327
    %v1339 = vpack.c.b16 %v1330, %v1329
    %v1340 = vpack.c.b16 %v1332, %v1331
    %v1341 = vpack.c.b16 %v1334, %v1333
    %v1342 = vpack.c.b16 %v1336, %v1335
    %v1344 = vsel %vm204, %v1337, 0
    %v1347 = vsel %vm204, %v1338, 0
    %v1350 = vsel %vm204, %v1339, 0
    %v1353 = vsel %vm204, %v1340, 0
    %v1356 = vsel %vm204, %v1341, 0
    %v1359 = vsel %vm204, %v1342, 0
    %1361 = vmatprep.subr.bf16.mxu0 0
    %1362 = vmatpush1.bf16.msra.mxu0 %v1311
    %1363 = vmatprep.subr.bf16.mxu0 0
    %1364 = vmatpush1.bf16.msra.mxu0 %v1312
    %1365 = vmatprep.subr.bf16.mxu0 0
    %1366 = vmatpush1.bf16.msra.mxu0 0
    %1367 = vmatprep.subr.bf16.mxu0 0
    %1368 = vmatpush1.bf16.msra.mxu0 0
    %1369 = vmatprep.subr.bf16.mxu0 0
    %1370 = vmatpush1.bf16.msra.mxu0 0
    %1371 = vmatprep.subr.bf16.mxu0 0
    %1372 = vmatpush1.bf16.msra.mxu0 0
    %1373 = vmatprep.subr.bf16.mxu0 0
    %1374 = vmatpush1.bf16.msra.mxu0 0
    %1375 = vmatprep.subr.bf16.mxu0 0
    %1376 = vmatpush1.bf16.msra.mxu0 0
    %1377 = vmatprep.subr.bf16.mxu0 0
    %1378 = vmatpush1.bf16.msra.mxu0 0
    %1379 = vmatprep.subr.bf16.mxu0 0
    %1380 = vmatpush1.bf16.msra.mxu0 0
    %1381 = vmatprep.subr.bf16.mxu0 0
    %1382 = vmatpush1.bf16.msra.mxu0 0
    %1383 = vmatprep.subr.bf16.mxu0 0
    %1384 = vmatpush1.bf16.msra.mxu0 0
    %1385 = vmatprep.subr.bf16.mxu0 0
    %1386 = vmatpush1.bf16.msra.mxu0 0
    %1387 = vmatprep.subr.bf16.mxu0 0
    %1388 = vmatpush1.bf16.msra.mxu0 0
    %1389 = vmatprep.subr.bf16.mxu0 0
    %1390 = vmatpush1.bf16.msra.mxu0 0
    %1391 = vmatprep.subr.bf16.mxu0 0
    %1392 = vmatpush1.bf16.msra.mxu0 0
    %1393 = vmatprep.mubr.bf16.mxu0 0
    %1394 = vmatmul.mubr.bf16.gmra.mrb[0].mxu0 %v1344
    %v1395 = vpop.f32.mrb[0].mxu0
    %v1396 = vadd.f32 0.0, %v1395
    %v1397 = vpop.f32.mrb[0].mxu0
    %v1398 = vpop.f32.mrb[0].mxu0
    %v1399 = vadd.f32 0.0, %v1398
    %v1400 = vpop.f32.mrb[0].mxu0
    %1401 = vmatprep.mubr.bf16.mxu0 0
    %1402 = vmatmul.mubr.bf16.gmra.mrb[0].mxu0 %v1347
    %v1403 = vpop.f32.mrb[0].mxu0
    %v1404 = vadd.f32 0.0, %v1403
    %v1405 = vpop.f32.mrb[0].mxu0
    %v1406 = vpop.f32.mrb[0].mxu0
    %v1407 = vadd.f32 0.0, %v1406
    %v1408 = vpop.f32.mrb[0].mxu0
    %1409 = vmatprep.mubr.bf16.mxu0 0
    %1410 = vmatmul.mubr.bf16.gmra.mrb[0].mxu0 %v1350
    %v1411 = vpop.f32.mrb[0].mxu0
    %v1412 = vadd.f32 0.0, %v1411
    %v1413 = vpop.f32.mrb[0].mxu0
    %v1414 = vpop.f32.mrb[0].mxu0
    %v1415 = vadd.f32 0.0, %v1414
    %v1416 = vpop.f32.mrb[0].mxu0
    %1417 = vmatprep.mubr.bf16.mxu0 0
    %1418 = vmatmul.mubr.bf16.gmra.mrb[0].mxu0 %v1353
    %v1419 = vpop.f32.mrb[0].mxu0
    %v1420 = vadd.f32 0.0, %v1419
    %v1421 = vpop.f32.mrb[0].mxu0
    %v1422 = vpop.f32.mrb[0].mxu0
    %v1423 = vadd.f32 0.0, %v1422
    %v1424 = vpop.f32.mrb[0].mxu0
    %1425 = vmatprep.mubr.bf16.mxu0 0
    %1426 = vmatmul.mubr.bf16.gmra.mrb[0].mxu0 %v1356
    %v1427 = vpop.f32.mrb[0].mxu0
    %v1428 = vadd.f32 0.0, %v1427
    %v1429 = vpop.f32.mrb[0].mxu0
    %v1430 = vpop.f32.mrb[0].mxu0
    %v1431 = vadd.f32 0.0, %v1430
    %v1432 = vpop.f32.mrb[0].mxu0
    %1433 = vmatprep.mubr.bf16.mxu0 0
    %1434 = vmatmul.mubr.bf16.gmra.mrb[0].mxu0 %v1359
    %v1435 = vpop.f32.mrb[0].mxu0
    %v1436 = vadd.f32 0.0, %v1435
    %v1437 = vpop.f32.mrb[0].mxu0
    %v1438 = vpop.f32.mrb[0].mxu0
    %v1439 = vadd.f32 0.0, %v1438
    %v1440 = vpop.f32.mrb[0].mxu0
    %1441 = vdwg.mxu0
    %vm1442 = vcmp.ge.s32.totalorder %v59, 8
    %1443 = vrot.lane.b32.xlu0 %v1396, 32
    %v1444 = vpop.permute.xlu0 %1443
    %v1445 = vsel %vm305, %v1444, %v1396
    %1446 = vrot.lane.b32.xlu0 %v1399, 32
    %v1447 = vpop.permute.xlu0 %1446
    %v1448 = vsel %vm305, %v1447, %v1399
    %1449 = vrot.lane.b32.xlu0 %v1404, 32
    %v1450 = vpop.permute.xlu0 %1449
    %v1451 = vsel %vm305, %v1450, %v1404
    %1452 = vrot.lane.b32.xlu0 %v1407, 32
    %v1453 = vpop.permute.xlu0 %1452
    %v1454 = vsel %vm305, %v1453, %v1407
    %1455 = vrot.lane.b32.xlu0 %v1445, 32
    %v1456 = vpop.permute.xlu0 %1455
    %1457 = vrot.lane.b32.xlu0 %v1448, 32
    %v1458 = vpop.permute.xlu0 %1457
    %1459 = vrot.lane.b32.xlu0 %v1451, 32
    %v1460 = vpop.permute.xlu0 %1459
    %1461 = vrot.lane.b32.xlu0 %v1454, 32
    %v1462 = vpop.permute.xlu0 %1461
    %v1463 = vsel %vm305, %v1456, %v1396
    %v1464 = vsel %vm305, %v1458, %v1399
    %v1465 = vsel %vm305, %v1460, %v1404
    %v1466 = vsel %vm305, %v1462, %v1407
    %v1467 = vsel %vm1442, 1, 0
    %vm1468 = vcmp.eq.s32.totalorder %v1467, 1
    %1473 = vrot.lane.b32.xlu0 %v1463, 104
    %v1474 = vpop.permute.xlu0 %1473
    %1475 = vrot.lane.b32.xlu0 %v1464, 104
    %v1476 = vpop.permute.xlu0 %1475
    %1477 = vrot.lane.b32.xlu0 %v1465, 104
    %v1478 = vpop.permute.xlu0 %1477
    %1479 = vrot.lane.b32.xlu0 %v1466, 104
    %v1480 = vpop.permute.xlu0 %1479
    %v1485 = vsel %vm1468, %v1474, 0.0
    %v1486 = vsel %vm1468, %v1476, 0.0
    %v1487 = vsel %vm1468, %v1478, 0.0
    %v1488 = vsel %vm1468, %v1480, 0.0
    %vm1489 = vcmp.lt.s32.totalorder %v59, 8
    %1490 = vrot.lane.b32.xlu0 %v1428, 32
    %v1491 = vpop.permute.xlu0 %1490
    %v1492 = vsel %vm305, %v1491, %v1428
    %1493 = vrot.lane.b32.xlu0 %v1431, 32
    %v1494 = vpop.permute.xlu0 %1493
    %v1495 = vsel %vm305, %v1494, %v1431
    %1496 = vrot.lane.b32.xlu0 %v1436, 32
    %v1497 = vpop.permute.xlu0 %1496
    %v1498 = vsel %vm305, %v1497, %v1436
    %1499 = vrot.lane.b32.xlu0 %v1439, 32
    %v1500 = vpop.permute.xlu0 %1499
    %v1501 = vsel %vm305, %v1500, %v1439
    %1502 = vrot.lane.b32.xlu0 %v1492, 32
    %v1503 = vpop.permute.xlu0 %1502
    %1504 = vrot.lane.b32.xlu0 %v1495, 32
    %v1505 = vpop.permute.xlu0 %1504
    %1506 = vrot.lane.b32.xlu0 %v1498, 32
    %v1507 = vpop.permute.xlu0 %1506
    %1508 = vrot.lane.b32.xlu0 %v1501, 32
    %v1509 = vpop.permute.xlu0 %1508
    %v1510 = vsel %vm305, %v1503, %v1428
    %v1511 = vsel %vm305, %v1505, %v1431
    %v1512 = vsel %vm305, %v1507, %v1436
    %v1513 = vsel %vm305, %v1509, %v1439
    %v1514 = vsel %vm1489, 1, 0
    %vm1515 = vcmp.eq.s32.totalorder %v1514, 1
    %1520 = vrot.lane.b32.xlu0 %v1510, 120
    %v1521 = vpop.permute.xlu0 %1520
    %1522 = vrot.lane.b32.xlu0 %v1511, 120
    %v1523 = vpop.permute.xlu0 %1522
    %1524 = vrot.lane.b32.xlu0 %v1512, 120
    %v1525 = vpop.permute.xlu0 %1524
    %1526 = vrot.lane.b32.xlu0 %v1513, 120
    %v1527 = vpop.permute.xlu0 %1526
    %v1532 = vsel %vm1515, %v1521, 0.0
    %v1533 = vsel %vm1515, %v1523, 0.0
    %v1534 = vsel %vm1515, %v1525, 0.0
    %v1535 = vsel %vm1515, %v1527, 0.0
    %v1536 = vadd.f32 %v1412, %v1485
    %v1537 = vadd.f32 %v1415, %v1486
    %v1538 = vadd.f32 %v1420, %v1487
    %v1539 = vadd.f32 %v1423, %v1488
    %v1540 = vadd.f32 %v1536, %v1532
    %v1541 = vadd.f32 %v1537, %v1533
    %v1542 = vadd.f32 %v1538, %v1534
    %v1543 = vadd.f32 %v1539, %v1535
    %s1544 = scalar_lea.vmem %s4, 96
    %v1545 = vld [vmem:[%s1544] sm:$0xff]
    %v1546 = vld [vmem:[%s1544 + $0x8] sm:$0xff]
    %v1547 = vld [vmem:[%s1544 + $0x10] sm:$0xff]
    %v1548 = vld [vmem:[%s1544 + $0x18] sm:$0xff]
    %1550 = vset.pattern.permute.xlu0 0
    %1551 = vperm.xlu0 %1550, %v1545
    %v1552 = vpop.permute.xlu0 %1551
    %1555 = vset.pattern.permute.xlu0 0
    %1556 = vperm.xlu0 %1555, %v1546
    %v1557 = vpop.permute.xlu0 %1556
    %1560 = vset.pattern.permute.xlu0 0
    %1561 = vperm.xlu0 %1560, %v1547
    %v1562 = vpop.permute.xlu0 %1561
    %1565 = vset.pattern.permute.xlu0 0
    %1566 = vperm.xlu0 %1565, %v1548
    %v1567 = vpop.permute.xlu0 %1566
    %v1569 = vadd.f32 %v1540, %v1552
    %v1570 = vadd.f32 %v1541, %v1557
    %v1571 = vadd.f32 %v1542, %v1562
    %v1572 = vadd.f32 %v1543, %v1567
    %v1573 = vmax.f32 %v1569, 0.0
    %v1574 = vmax.f32 %v1570, 0.0
    %v1575 = vmax.f32 %v1571, 0.0
    %v1576 = vmax.f32 %v1572, 0.0
    %s1577 = scalar_lea.vmem %s5, 48
    %v1578 = vld [vmem:[%s1577] sm:$0xf]
    %v1579 = vld [vmem:[%s1577 + $0x4] sm:$0xf]
    %v1580 = vld [vmem:[%s1577 + $0x8] sm:$0xf]
    %v1581 = vld [vmem:[%s1577 + $0xc] sm:$0xf]
    %v1582 = vpack.c.bf16 %v1574, %v1573
    %v1583 = vpack.c.bf16 %v1576, %v1575
    %s1584 = scalar_lea.vmem %s6, 96
    %v1585 = vld [vmem:[%s1584] sm:$0xff]
    %v1586 = vld [vmem:[%s1584 + $0x8] sm:$0xff]
    %v1587 = vld [vmem:[%s1584 + $0x10] sm:$0xff]
    %v1588 = vld [vmem:[%s1584 + $0x18] sm:$0xff]
    %1590 = vset.pattern.permute.xlu0 0
    %1591 = vperm.xlu0 %1590, %v1585
    %v1592 = vpop.permute.xlu0 %1591
    %1595 = vset.pattern.permute.xlu0 0
    %1596 = vperm.xlu0 %1595, %v1586
    %v1597 = vpop.permute.xlu0 %1596
    %1600 = vset.pattern.permute.xlu0 0
    %1601 = vperm.xlu0 %1600, %v1587
    %v1602 = vpop.permute.xlu0 %1601
    %1605 = vset.pattern.permute.xlu0 0
    %1606 = vperm.xlu0 %1605, %v1588
    %v1607 = vpop.permute.xlu0 %1606
    %v1613 = vunpack.c.l.b16 %v1578
    %v1614 = vunpack.c.l.b16 %v1579
    %v1615 = vunpack.c.l.b16 %v1580
    %v1616 = vunpack.c.l.b16 %v1581
    %v1617 = vpack.c.b16 %v1614, %v1613
    %v1618 = vpack.c.b16 %v1616, %v1615
    %v1620 = vsel %vm204, %v1617, 0
    %v1623 = vsel %vm204, %v1618, 0
    %1625 = vmatprep.subr.bf16.mxu0 0
    %1626 = vmatpush1.bf16.msra.mxu0 %v1582
    %1627 = vmatprep.subr.bf16.mxu0 0
    %1628 = vmatpush1.bf16.msra.mxu0 %v1583
    %1629 = vmatprep.subr.bf16.mxu0 0
    %1630 = vmatpush1.bf16.msra.mxu0 0
    %1631 = vmatprep.subr.bf16.mxu0 0
    %1632 = vmatpush1.bf16.msra.mxu0 0
    %1633 = vmatprep.subr.bf16.mxu0 0
    %1634 = vmatpush1.bf16.msra.mxu0 0
    %1635 = vmatprep.subr.bf16.mxu0 0
    %1636 = vmatpush1.bf16.msra.mxu0 0
    %1637 = vmatprep.subr.bf16.mxu0 0
    %1638 = vmatpush1.bf16.msra.mxu0 0
    %1639 = vmatprep.subr.bf16.mxu0 0
    %1640 = vmatpush1.bf16.msra.mxu0 0
    %1641 = vmatprep.subr.bf16.mxu0 0
    %1642 = vmatpush1.bf16.msra.mxu0 0
    %1643 = vmatprep.subr.bf16.mxu0 0
    %1644 = vmatpush1.bf16.msra.mxu0 0
    %1645 = vmatprep.subr.bf16.mxu0 0
    %1646 = vmatpush1.bf16.msra.mxu0 0
    %1647 = vmatprep.subr.bf16.mxu0 0
    %1648 = vmatpush1.bf16.msra.mxu0 0
    %1649 = vmatprep.subr.bf16.mxu0 0
    %1650 = vmatpush1.bf16.msra.mxu0 0
    %1651 = vmatprep.subr.bf16.mxu0 0
    %1652 = vmatpush1.bf16.msra.mxu0 0
    %1653 = vmatprep.subr.bf16.mxu0 0
    %1654 = vmatpush1.bf16.msra.mxu0 0
    %1655 = vmatprep.subr.bf16.mxu0 0
    %1656 = vmatpush1.bf16.msra.mxu0 0
    %1657 = vmatprep.mubr.bf16.mxu0 0
    %1658 = vmatmul.mubr.bf16.gmra.mrb[0].mxu0 %v1620
    %v1659 = vpop.f32.mrb[0].mxu0
    %v1660 = vadd.f32 %v1592, %v1659
    %v1661 = vpop.f32.mrb[0].mxu0
    %v1662 = vpop.f32.mrb[0].mxu0
    %v1663 = vadd.f32 %v1597, %v1662
    %v1664 = vpop.f32.mrb[0].mxu0
    %1665 = vmatprep.mubr.bf16.mxu0 0
    %1666 = vmatmul.mubr.bf16.gmra.mrb[0].mxu0 %v1623
    %v1667 = vpop.f32.mrb[0].mxu0
    %v1668 = vadd.f32 %v1602, %v1667
    %v1669 = vpop.f32.mrb[0].mxu0
    %v1670 = vpop.f32.mrb[0].mxu0
    %v1671 = vadd.f32 %v1607, %v1670
    %v1672 = vpop.f32.mrb[0].mxu0
    %1673 = vdwg.mxu0
    %v1674 = vadd.f32 %v1294, %v1660
    %v1675 = vadd.f32 %v1295, %v1663
    %v1676 = vadd.f32 %v1296, %v1668
    %v1677 = vadd.f32 %v1297, %v1671
    %v1678 = vld [vmem:[%s7] sm:$0xf]
    %v1679 = vld [vmem:[%s7 + $0x4] sm:$0xf]
    %v1680 = vld [vmem:[%s7 + $0x8] sm:$0xf]
    %v1681 = vld [vmem:[%s7 + $0xc] sm:$0xf]
    %v1682 = vpack.c.bf16 %v1675, %v1674
    %v1683 = vpack.c.bf16 %v1677, %v1676
    %v1684 = vld [vmem:[%s8] sm:$0xff]
    %v1685 = vld [vmem:[%s8 + $0x8] sm:$0xff]
    %v1686 = vld [vmem:[%s8 + $0x10] sm:$0xff]
    %v1687 = vld [vmem:[%s8 + $0x18] sm:$0xff]
    %1689 = vset.pattern.permute.xlu0 0
    %1690 = vperm.xlu0 %1689, %v1684
    %v1691 = vpop.permute.xlu0 %1690
    %1694 = vset.pattern.permute.xlu0 0
    %1695 = vperm.xlu0 %1694, %v1685
    %v1696 = vpop.permute.xlu0 %1695
    %1699 = vset.pattern.permute.xlu0 0
    %1700 = vperm.xlu0 %1699, %v1686
    %v1701 = vpop.permute.xlu0 %1700
    %1704 = vset.pattern.permute.xlu0 0
    %1705 = vperm.xlu0 %1704, %v1687
    %v1706 = vpop.permute.xlu0 %1705
    %v1712 = vunpack.c.l.b16 %v1678
    %v1713 = vunpack.c.l.b16 %v1679
    %v1714 = vunpack.c.l.b16 %v1680
    %v1715 = vunpack.c.l.b16 %v1681
    %v1716 = vpack.c.b16 %v1713, %v1712
    %v1717 = vpack.c.b16 %v1715, %v1714
    %v1719 = vsel %vm204, %v1716, 0
    %v1722 = vsel %vm204, %v1717, 0
    %1724 = vmatprep.subr.bf16.mxu0 0
    %1725 = vmatpush1.bf16.msra.mxu0 %v1682
    %1726 = vmatprep.subr.bf16.mxu0 0
    %1727 = vmatpush1.bf16.msra.mxu0 %v1683
    %1728 = vmatprep.subr.bf16.mxu0 0
    %1729 = vmatpush1.bf16.msra.mxu0 0
    %1730 = vmatprep.subr.bf16.mxu0 0
    %1731 = vmatpush1.bf16.msra.mxu0 0
    %1732 = vmatprep.subr.bf16.mxu0 0
    %1733 = vmatpush1.bf16.msra.mxu0 0
    %1734 = vmatprep.subr.bf16.mxu0 0
    %1735 = vmatpush1.bf16.msra.mxu0 0
    %1736 = vmatprep.subr.bf16.mxu0 0
    %1737 = vmatpush1.bf16.msra.mxu0 0
    %1738 = vmatprep.subr.bf16.mxu0 0
    %1739 = vmatpush1.bf16.msra.mxu0 0
    %1740 = vmatprep.subr.bf16.mxu0 0
    %1741 = vmatpush1.bf16.msra.mxu0 0
    %1742 = vmatprep.subr.bf16.mxu0 0
    %1743 = vmatpush1.bf16.msra.mxu0 0
    %1744 = vmatprep.subr.bf16.mxu0 0
    %1745 = vmatpush1.bf16.msra.mxu0 0
    %1746 = vmatprep.subr.bf16.mxu0 0
    %1747 = vmatpush1.bf16.msra.mxu0 0
    %1748 = vmatprep.subr.bf16.mxu0 0
    %1749 = vmatpush1.bf16.msra.mxu0 0
    %1750 = vmatprep.subr.bf16.mxu0 0
    %1751 = vmatpush1.bf16.msra.mxu0 0
    %1752 = vmatprep.subr.bf16.mxu0 0
    %1753 = vmatpush1.bf16.msra.mxu0 0
    %1754 = vmatprep.subr.bf16.mxu0 0
    %1755 = vmatpush1.bf16.msra.mxu0 0
    %1756 = vmatprep.mubr.bf16.mxu0 0
    %1757 = vmatmul.mubr.bf16.gmra.mrb[0].mxu0 %v1719
    %v1758 = vpop.f32.mrb[0].mxu0
    %v1759 = vadd.f32 %v1691, %v1758
    %v1760 = vpop.f32.mrb[0].mxu0
    %v1761 = vpop.f32.mrb[0].mxu0
    %v1762 = vadd.f32 %v1696, %v1761
    %v1763 = vpop.f32.mrb[0].mxu0
    %1764 = vmatprep.mubr.bf16.mxu0 0
    %1765 = vmatmul.mubr.bf16.gmra.mrb[0].mxu0 %v1722
    %v1766 = vpop.f32.mrb[0].mxu0
    %v1767 = vadd.f32 %v1701, %v1766
    %v1768 = vpop.f32.mrb[0].mxu0
    %v1769 = vpop.f32.mrb[0].mxu0
    %v1770 = vadd.f32 %v1706, %v1769
    %v1771 = vpop.f32.mrb[0].mxu0
    %1772 = vdwg.mxu0
    %v1773 = vmax.f32 %v1759, 0.0
    %v1774 = vmax.f32 %v1762, 0.0
    %v1775 = vmax.f32 %v1767, 0.0
    %v1776 = vmax.f32 %v1770, 0.0
    %v1777 = vld [vmem:[%s9] sm:$0xf]
    %v1778 = vld [vmem:[%s9 + $0x4] sm:$0xf]
    %v1779 = vld [vmem:[%s9 + $0x8] sm:$0xf]
    %v1780 = vld [vmem:[%s9 + $0xc] sm:$0xf]
    %v1781 = vpack.c.bf16 %v1774, %v1773
    %v1782 = vpack.c.bf16 %v1776, %v1775
    %v1783 = vld [vmem:[%s10] sm:$0xff]
    %v1784 = vld [vmem:[%s10 + $0x8] sm:$0xff]
    %v1785 = vld [vmem:[%s10 + $0x10] sm:$0xff]
    %v1786 = vld [vmem:[%s10 + $0x18] sm:$0xff]
    %1788 = vset.pattern.permute.xlu0 0
    %1789 = vperm.xlu0 %1788, %v1783
    %v1790 = vpop.permute.xlu0 %1789
    %1793 = vset.pattern.permute.xlu0 0
    %1794 = vperm.xlu0 %1793, %v1784
    %v1795 = vpop.permute.xlu0 %1794
    %1798 = vset.pattern.permute.xlu0 0
    %1799 = vperm.xlu0 %1798, %v1785
    %v1800 = vpop.permute.xlu0 %1799
    %1803 = vset.pattern.permute.xlu0 0
    %1804 = vperm.xlu0 %1803, %v1786
    %v1805 = vpop.permute.xlu0 %1804
    %v1811 = vunpack.c.l.b16 %v1777
    %v1812 = vunpack.c.l.b16 %v1778
    %v1813 = vunpack.c.l.b16 %v1779
    %v1814 = vunpack.c.l.b16 %v1780
    %v1815 = vpack.c.b16 %v1812, %v1811
    %v1816 = vpack.c.b16 %v1814, %v1813
    %v1818 = vsel %vm204, %v1815, 0
    %v1821 = vsel %vm204, %v1816, 0
    %1823 = vmatprep.subr.bf16.mxu0 0
    %1824 = vmatpush1.bf16.msra.mxu0 %v1781
    %1825 = vmatprep.subr.bf16.mxu0 0
    %1826 = vmatpush1.bf16.msra.mxu0 %v1782
    %1827 = vmatprep.subr.bf16.mxu0 0
    %1828 = vmatpush1.bf16.msra.mxu0 0
    %1829 = vmatprep.subr.bf16.mxu0 0
    %1830 = vmatpush1.bf16.msra.mxu0 0
    %1831 = vmatprep.subr.bf16.mxu0 0
    %1832 = vmatpush1.bf16.msra.mxu0 0
    %1833 = vmatprep.subr.bf16.mxu0 0
    %1834 = vmatpush1.bf16.msra.mxu0 0
    %1835 = vmatprep.subr.bf16.mxu0 0
    %1836 = vmatpush1.bf16.msra.mxu0 0
    %1837 = vmatprep.subr.bf16.mxu0 0
    %1838 = vmatpush1.bf16.msra.mxu0 0
    %1839 = vmatprep.subr.bf16.mxu0 0
    %1840 = vmatpush1.bf16.msra.mxu0 0
    %1841 = vmatprep.subr.bf16.mxu0 0
    %1842 = vmatpush1.bf16.msra.mxu0 0
    %1843 = vmatprep.subr.bf16.mxu0 0
    %1844 = vmatpush1.bf16.msra.mxu0 0
    %1845 = vmatprep.subr.bf16.mxu0 0
    %1846 = vmatpush1.bf16.msra.mxu0 0
    %1847 = vmatprep.subr.bf16.mxu0 0
    %1848 = vmatpush1.bf16.msra.mxu0 0
    %1849 = vmatprep.subr.bf16.mxu0 0
    %1850 = vmatpush1.bf16.msra.mxu0 0
    %1851 = vmatprep.subr.bf16.mxu0 0
    %1852 = vmatpush1.bf16.msra.mxu0 0
    %1853 = vmatprep.subr.bf16.mxu0 0
    %1854 = vmatpush1.bf16.msra.mxu0 0
    %1855 = vmatprep.mubr.bf16.mxu0 0
    %1856 = vmatmul.mubr.bf16.gmra.mrb[0].mxu0 %v1818
    %v1857 = vpop.f32.mrb[0].mxu0
    %v1858 = vadd.f32 %v1790, %v1857
    %v1859 = vpop.f32.mrb[0].mxu0
    %v1860 = vpop.f32.mrb[0].mxu0
    %v1861 = vadd.f32 %v1795, %v1860
    %v1862 = vpop.f32.mrb[0].mxu0
    %1863 = vmatprep.mubr.bf16.mxu0 0
    %1864 = vmatmul.mubr.bf16.gmra.mrb[0].mxu0 %v1821
    %v1865 = vpop.f32.mrb[0].mxu0
    %v1866 = vadd.f32 %v1800, %v1865
    %v1867 = vpop.f32.mrb[0].mxu0
    %v1868 = vpop.f32.mrb[0].mxu0
    %v1869 = vadd.f32 %v1805, %v1868
    %v1870 = vpop.f32.mrb[0].mxu0
    %1871 = vdwg.mxu0
    %v1872 = vadd.f32 %v1674, %v1858
    %v1873 = vadd.f32 %v1675, %v1861
    %v1874 = vadd.f32 %v1676, %v1866
    %v1875 = vadd.f32 %v1677, %v1869
    %s1876 = scalar_lea.vmem %s7, 16
    %v1877 = vld [vmem:[%s1876] sm:$0xf]
    %v1878 = vld [vmem:[%s1876 + $0x4] sm:$0xf]
    %v1879 = vld [vmem:[%s1876 + $0x8] sm:$0xf]
    %v1880 = vld [vmem:[%s1876 + $0xc] sm:$0xf]
    %v1881 = vpack.c.bf16 %v1873, %v1872
    %v1882 = vpack.c.bf16 %v1875, %v1874
    %s1883 = scalar_lea.vmem %s8, 32
    %v1884 = vld [vmem:[%s1883] sm:$0xff]
    %v1885 = vld [vmem:[%s1883 + $0x8] sm:$0xff]
    %v1886 = vld [vmem:[%s1883 + $0x10] sm:$0xff]
    %v1887 = vld [vmem:[%s1883 + $0x18] sm:$0xff]
    %1889 = vset.pattern.permute.xlu0 0
    %1890 = vperm.xlu0 %1889, %v1884
    %v1891 = vpop.permute.xlu0 %1890
    %1894 = vset.pattern.permute.xlu0 0
    %1895 = vperm.xlu0 %1894, %v1885
    %v1896 = vpop.permute.xlu0 %1895
    %1899 = vset.pattern.permute.xlu0 0
    %1900 = vperm.xlu0 %1899, %v1886
    %v1901 = vpop.permute.xlu0 %1900
    %1904 = vset.pattern.permute.xlu0 0
    %1905 = vperm.xlu0 %1904, %v1887
    %v1906 = vpop.permute.xlu0 %1905
    %v1912 = vunpack.c.l.b16 %v1877
    %v1913 = vunpack.c.l.b16 %v1878
    %v1914 = vunpack.c.l.b16 %v1879
    %v1915 = vunpack.c.l.b16 %v1880
    %v1916 = vpack.c.b16 %v1913, %v1912
    %v1917 = vpack.c.b16 %v1915, %v1914
    %v1919 = vsel %vm204, %v1916, 0
    %v1922 = vsel %vm204, %v1917, 0
    %1924 = vmatprep.subr.bf16.mxu0 0
    %1925 = vmatpush1.bf16.msra.mxu0 %v1881
    %1926 = vmatprep.subr.bf16.mxu0 0
    %1927 = vmatpush1.bf16.msra.mxu0 %v1882
    %1928 = vmatprep.subr.bf16.mxu0 0
    %1929 = vmatpush1.bf16.msra.mxu0 0
    %1930 = vmatprep.subr.bf16.mxu0 0
    %1931 = vmatpush1.bf16.msra.mxu0 0
    %1932 = vmatprep.subr.bf16.mxu0 0
    %1933 = vmatpush1.bf16.msra.mxu0 0
    %1934 = vmatprep.subr.bf16.mxu0 0
    %1935 = vmatpush1.bf16.msra.mxu0 0
    %1936 = vmatprep.subr.bf16.mxu0 0
    %1937 = vmatpush1.bf16.msra.mxu0 0
    %1938 = vmatprep.subr.bf16.mxu0 0
    %1939 = vmatpush1.bf16.msra.mxu0 0
    %1940 = vmatprep.subr.bf16.mxu0 0
    %1941 = vmatpush1.bf16.msra.mxu0 0
    %1942 = vmatprep.subr.bf16.mxu0 0
    %1943 = vmatpush1.bf16.msra.mxu0 0
    %1944 = vmatprep.subr.bf16.mxu0 0
    %1945 = vmatpush1.bf16.msra.mxu0 0
    %1946 = vmatprep.subr.bf16.mxu0 0
    %1947 = vmatpush1.bf16.msra.mxu0 0
    %1948 = vmatprep.subr.bf16.mxu0 0
    %1949 = vmatpush1.bf16.msra.mxu0 0
    %1950 = vmatprep.subr.bf16.mxu0 0
    %1951 = vmatpush1.bf16.msra.mxu0 0
    %1952 = vmatprep.subr.bf16.mxu0 0
    %1953 = vmatpush1.bf16.msra.mxu0 0
    %1954 = vmatprep.subr.bf16.mxu0 0
    %1955 = vmatpush1.bf16.msra.mxu0 0
    %1956 = vmatprep.mubr.bf16.mxu0 0
    %1957 = vmatmul.mubr.bf16.gmra.mrb[0].mxu0 %v1919
    %v1958 = vpop.f32.mrb[0].mxu0
    %v1959 = vadd.f32 %v1891, %v1958
    %v1960 = vpop.f32.mrb[0].mxu0
    %v1961 = vpop.f32.mrb[0].mxu0
    %v1962 = vadd.f32 %v1896, %v1961
    %v1963 = vpop.f32.mrb[0].mxu0
    %1964 = vmatprep.mubr.bf16.mxu0 0
    %1965 = vmatmul.mubr.bf16.gmra.mrb[0].mxu0 %v1922
    %v1966 = vpop.f32.mrb[0].mxu0
    %v1967 = vadd.f32 %v1901, %v1966
    %v1968 = vpop.f32.mrb[0].mxu0
    %v1969 = vpop.f32.mrb[0].mxu0
    %v1970 = vadd.f32 %v1906, %v1969
    %v1971 = vpop.f32.mrb[0].mxu0
    %1972 = vdwg.mxu0
    %v1973 = vmax.f32 %v1959, 0.0
    %v1974 = vmax.f32 %v1962, 0.0
    %v1975 = vmax.f32 %v1967, 0.0
    %v1976 = vmax.f32 %v1970, 0.0
    %s1977 = scalar_lea.vmem %s9, 16
    %v1978 = vld [vmem:[%s1977] sm:$0xf]
    %v1979 = vld [vmem:[%s1977 + $0x4] sm:$0xf]
    %v1980 = vld [vmem:[%s1977 + $0x8] sm:$0xf]
    %v1981 = vld [vmem:[%s1977 + $0xc] sm:$0xf]
    %v1982 = vpack.c.bf16 %v1974, %v1973
    %v1983 = vpack.c.bf16 %v1976, %v1975
    %s1984 = scalar_lea.vmem %s10, 32
    %v1985 = vld [vmem:[%s1984] sm:$0xff]
    %v1986 = vld [vmem:[%s1984 + $0x8] sm:$0xff]
    %v1987 = vld [vmem:[%s1984 + $0x10] sm:$0xff]
    %v1988 = vld [vmem:[%s1984 + $0x18] sm:$0xff]
    %1990 = vset.pattern.permute.xlu0 0
    %1991 = vperm.xlu0 %1990, %v1985
    %v1992 = vpop.permute.xlu0 %1991
    %1995 = vset.pattern.permute.xlu0 0
    %1996 = vperm.xlu0 %1995, %v1986
    %v1997 = vpop.permute.xlu0 %1996
    %2000 = vset.pattern.permute.xlu0 0
    %2001 = vperm.xlu0 %2000, %v1987
    %v2002 = vpop.permute.xlu0 %2001
    %2005 = vset.pattern.permute.xlu0 0
    %2006 = vperm.xlu0 %2005, %v1988
    %v2007 = vpop.permute.xlu0 %2006
    %v2013 = vunpack.c.l.b16 %v1978
    %v2014 = vunpack.c.l.b16 %v1979
    %v2015 = vunpack.c.l.b16 %v1980
    %v2016 = vunpack.c.l.b16 %v1981
    %v2017 = vpack.c.b16 %v2014, %v2013
    %v2018 = vpack.c.b16 %v2016, %v2015
    %v2020 = vsel %vm204, %v2017, 0
    %v2023 = vsel %vm204, %v2018, 0
    %2025 = vmatprep.subr.bf16.mxu0 0
    %2026 = vmatpush1.bf16.msra.mxu0 %v1982
    %2027 = vmatprep.subr.bf16.mxu0 0
    %2028 = vmatpush1.bf16.msra.mxu0 %v1983
    %2029 = vmatprep.subr.bf16.mxu0 0
    %2030 = vmatpush1.bf16.msra.mxu0 0
    %2031 = vmatprep.subr.bf16.mxu0 0
    %2032 = vmatpush1.bf16.msra.mxu0 0
    %2033 = vmatprep.subr.bf16.mxu0 0
    %2034 = vmatpush1.bf16.msra.mxu0 0
    %2035 = vmatprep.subr.bf16.mxu0 0
    %2036 = vmatpush1.bf16.msra.mxu0 0
    %2037 = vmatprep.subr.bf16.mxu0 0
    %2038 = vmatpush1.bf16.msra.mxu0 0
    %2039 = vmatprep.subr.bf16.mxu0 0
    %2040 = vmatpush1.bf16.msra.mxu0 0
    %2041 = vmatprep.subr.bf16.mxu0 0
    %2042 = vmatpush1.bf16.msra.mxu0 0
    %2043 = vmatprep.subr.bf16.mxu0 0
    %2044 = vmatpush1.bf16.msra.mxu0 0
    %2045 = vmatprep.subr.bf16.mxu0 0
    %2046 = vmatpush1.bf16.msra.mxu0 0
    %2047 = vmatprep.subr.bf16.mxu0 0
    %2048 = vmatpush1.bf16.msra.mxu0 0
    %2049 = vmatprep.subr.bf16.mxu0 0
    %2050 = vmatpush1.bf16.msra.mxu0 0
    %2051 = vmatprep.subr.bf16.mxu0 0
    %2052 = vmatpush1.bf16.msra.mxu0 0
    %2053 = vmatprep.subr.bf16.mxu0 0
    %2054 = vmatpush1.bf16.msra.mxu0 0
    %2055 = vmatprep.subr.bf16.mxu0 0
    %2056 = vmatpush1.bf16.msra.mxu0 0
    %2057 = vmatprep.mubr.bf16.mxu0 0
    %2058 = vmatmul.mubr.bf16.gmra.mrb[0].mxu0 %v2020
    %v2059 = vpop.f32.mrb[0].mxu0
    %v2060 = vadd.f32 %v1992, %v2059
    %v2061 = vpop.f32.mrb[0].mxu0
    %v2062 = vpop.f32.mrb[0].mxu0
    %v2063 = vadd.f32 %v1997, %v2062
    %v2064 = vpop.f32.mrb[0].mxu0
    %2065 = vmatprep.mubr.bf16.mxu0 0
    %2066 = vmatmul.mubr.bf16.gmra.mrb[0].mxu0 %v2023
    %v2067 = vpop.f32.mrb[0].mxu0
    %v2068 = vadd.f32 %v2002, %v2067
    %v2069 = vpop.f32.mrb[0].mxu0
    %v2070 = vpop.f32.mrb[0].mxu0
    %v2071 = vadd.f32 %v2007, %v2070
    %v2072 = vpop.f32.mrb[0].mxu0
    %2073 = vdwg.mxu0
    %v2074 = vadd.f32 %v1872, %v2060
    %v2075 = vadd.f32 %v1873, %v2063
    %v2076 = vadd.f32 %v1874, %v2068
    %v2077 = vadd.f32 %v1875, %v2071
    %s2078 = scalar_lea.vmem %s7, 32
    %v2079 = vld [vmem:[%s2078] sm:$0xf]
    %v2080 = vld [vmem:[%s2078 + $0x4] sm:$0xf]
    %v2081 = vld [vmem:[%s2078 + $0x8] sm:$0xf]
    %v2082 = vld [vmem:[%s2078 + $0xc] sm:$0xf]
    %v2083 = vpack.c.bf16 %v2075, %v2074
    %v2084 = vpack.c.bf16 %v2077, %v2076
    %s2085 = scalar_lea.vmem %s8, 64
    %v2086 = vld [vmem:[%s2085] sm:$0xff]
    %v2087 = vld [vmem:[%s2085 + $0x8] sm:$0xff]
    %v2088 = vld [vmem:[%s2085 + $0x10] sm:$0xff]
    %v2089 = vld [vmem:[%s2085 + $0x18] sm:$0xff]
    %2091 = vset.pattern.permute.xlu0 0
    %2092 = vperm.xlu0 %2091, %v2086
    %v2093 = vpop.permute.xlu0 %2092
    %2096 = vset.pattern.permute.xlu0 0
    %2097 = vperm.xlu0 %2096, %v2087
    %v2098 = vpop.permute.xlu0 %2097
    %2101 = vset.pattern.permute.xlu0 0
    %2102 = vperm.xlu0 %2101, %v2088
    %v2103 = vpop.permute.xlu0 %2102
    %2106 = vset.pattern.permute.xlu0 0
    %2107 = vperm.xlu0 %2106, %v2089
    %v2108 = vpop.permute.xlu0 %2107
    %v2114 = vunpack.c.l.b16 %v2079
    %v2115 = vunpack.c.l.b16 %v2080
    %v2116 = vunpack.c.l.b16 %v2081
    %v2117 = vunpack.c.l.b16 %v2082
    %v2118 = vpack.c.b16 %v2115, %v2114
    %v2119 = vpack.c.b16 %v2117, %v2116
    %v2121 = vsel %vm204, %v2118, 0
    %v2124 = vsel %vm204, %v2119, 0
    %2126 = vmatprep.subr.bf16.mxu0 0
    %2127 = vmatpush1.bf16.msra.mxu0 %v2083
    %2128 = vmatprep.subr.bf16.mxu0 0
    %2129 = vmatpush1.bf16.msra.mxu0 %v2084
    %2130 = vmatprep.subr.bf16.mxu0 0
    %2131 = vmatpush1.bf16.msra.mxu0 0
    %2132 = vmatprep.subr.bf16.mxu0 0
    %2133 = vmatpush1.bf16.msra.mxu0 0
    %2134 = vmatprep.subr.bf16.mxu0 0
    %2135 = vmatpush1.bf16.msra.mxu0 0
    %2136 = vmatprep.subr.bf16.mxu0 0
    %2137 = vmatpush1.bf16.msra.mxu0 0
    %2138 = vmatprep.subr.bf16.mxu0 0
    %2139 = vmatpush1.bf16.msra.mxu0 0
    %2140 = vmatprep.subr.bf16.mxu0 0
    %2141 = vmatpush1.bf16.msra.mxu0 0
    %2142 = vmatprep.subr.bf16.mxu0 0
    %2143 = vmatpush1.bf16.msra.mxu0 0
    %2144 = vmatprep.subr.bf16.mxu0 0
    %2145 = vmatpush1.bf16.msra.mxu0 0
    %2146 = vmatprep.subr.bf16.mxu0 0
    %2147 = vmatpush1.bf16.msra.mxu0 0
    %2148 = vmatprep.subr.bf16.mxu0 0
    %2149 = vmatpush1.bf16.msra.mxu0 0
    %2150 = vmatprep.subr.bf16.mxu0 0
    %2151 = vmatpush1.bf16.msra.mxu0 0
    %2152 = vmatprep.subr.bf16.mxu0 0
    %2153 = vmatpush1.bf16.msra.mxu0 0
    %2154 = vmatprep.subr.bf16.mxu0 0
    %2155 = vmatpush1.bf16.msra.mxu0 0
    %2156 = vmatprep.subr.bf16.mxu0 0
    %2157 = vmatpush1.bf16.msra.mxu0 0
    %2158 = vmatprep.mubr.bf16.mxu0 0
    %2159 = vmatmul.mubr.bf16.gmra.mrb[0].mxu0 %v2121
    %v2160 = vpop.f32.mrb[0].mxu0
    %v2161 = vadd.f32 %v2093, %v2160
    %v2162 = vpop.f32.mrb[0].mxu0
    %v2163 = vpop.f32.mrb[0].mxu0
    %v2164 = vadd.f32 %v2098, %v2163
    %v2165 = vpop.f32.mrb[0].mxu0
    %2166 = vmatprep.mubr.bf16.mxu0 0
    %2167 = vmatmul.mubr.bf16.gmra.mrb[0].mxu0 %v2124
    %v2168 = vpop.f32.mrb[0].mxu0
    %v2169 = vadd.f32 %v2103, %v2168
    %v2170 = vpop.f32.mrb[0].mxu0
    %v2171 = vpop.f32.mrb[0].mxu0
    %v2172 = vadd.f32 %v2108, %v2171
    %v2173 = vpop.f32.mrb[0].mxu0
    %2174 = vdwg.mxu0
    %v2175 = vmax.f32 %v2161, 0.0
    %v2176 = vmax.f32 %v2164, 0.0
    %v2177 = vmax.f32 %v2169, 0.0
    %v2178 = vmax.f32 %v2172, 0.0
    %s2179 = scalar_lea.vmem %s9, 32
    %v2180 = vld [vmem:[%s2179] sm:$0xf]
    %v2181 = vld [vmem:[%s2179 + $0x4] sm:$0xf]
    %v2182 = vld [vmem:[%s2179 + $0x8] sm:$0xf]
    %v2183 = vld [vmem:[%s2179 + $0xc] sm:$0xf]
    %v2184 = vpack.c.bf16 %v2176, %v2175
    %v2185 = vpack.c.bf16 %v2178, %v2177
    %s2186 = scalar_lea.vmem %s10, 64
    %v2187 = vld [vmem:[%s2186] sm:$0xff]
    %v2188 = vld [vmem:[%s2186 + $0x8] sm:$0xff]
    %v2189 = vld [vmem:[%s2186 + $0x10] sm:$0xff]
    %v2190 = vld [vmem:[%s2186 + $0x18] sm:$0xff]
    %2192 = vset.pattern.permute.xlu0 0
    %2193 = vperm.xlu0 %2192, %v2187
    %v2194 = vpop.permute.xlu0 %2193
    %2197 = vset.pattern.permute.xlu0 0
    %2198 = vperm.xlu0 %2197, %v2188
    %v2199 = vpop.permute.xlu0 %2198
    %2202 = vset.pattern.permute.xlu0 0
    %2203 = vperm.xlu0 %2202, %v2189
    %v2204 = vpop.permute.xlu0 %2203
    %2207 = vset.pattern.permute.xlu0 0
    %2208 = vperm.xlu0 %2207, %v2190
    %v2209 = vpop.permute.xlu0 %2208
    %v2215 = vunpack.c.l.b16 %v2180
    %v2216 = vunpack.c.l.b16 %v2181
    %v2217 = vunpack.c.l.b16 %v2182
    %v2218 = vunpack.c.l.b16 %v2183
    %v2219 = vpack.c.b16 %v2216, %v2215
    %v2220 = vpack.c.b16 %v2218, %v2217
    %v2222 = vsel %vm204, %v2219, 0
    %v2225 = vsel %vm204, %v2220, 0
    %2227 = vmatprep.subr.bf16.mxu0 0
    %2228 = vmatpush1.bf16.msra.mxu0 %v2184
    %2229 = vmatprep.subr.bf16.mxu0 0
    %2230 = vmatpush1.bf16.msra.mxu0 %v2185
    %2231 = vmatprep.subr.bf16.mxu0 0
    %2232 = vmatpush1.bf16.msra.mxu0 0
    %2233 = vmatprep.subr.bf16.mxu0 0
    %2234 = vmatpush1.bf16.msra.mxu0 0
    %2235 = vmatprep.subr.bf16.mxu0 0
    %2236 = vmatpush1.bf16.msra.mxu0 0
    %2237 = vmatprep.subr.bf16.mxu0 0
    %2238 = vmatpush1.bf16.msra.mxu0 0
    %2239 = vmatprep.subr.bf16.mxu0 0
    %2240 = vmatpush1.bf16.msra.mxu0 0
    %2241 = vmatprep.subr.bf16.mxu0 0
    %2242 = vmatpush1.bf16.msra.mxu0 0
    %2243 = vmatprep.subr.bf16.mxu0 0
    %2244 = vmatpush1.bf16.msra.mxu0 0
    %2245 = vmatprep.subr.bf16.mxu0 0
    %2246 = vmatpush1.bf16.msra.mxu0 0
    %2247 = vmatprep.subr.bf16.mxu0 0
    %2248 = vmatpush1.bf16.msra.mxu0 0
    %2249 = vmatprep.subr.bf16.mxu0 0
    %2250 = vmatpush1.bf16.msra.mxu0 0
    %2251 = vmatprep.subr.bf16.mxu0 0
    %2252 = vmatpush1.bf16.msra.mxu0 0
    %2253 = vmatprep.subr.bf16.mxu0 0
    %2254 = vmatpush1.bf16.msra.mxu0 0
    %2255 = vmatprep.subr.bf16.mxu0 0
    %2256 = vmatpush1.bf16.msra.mxu0 0
    %2257 = vmatprep.subr.bf16.mxu0 0
    %2258 = vmatpush1.bf16.msra.mxu0 0
    %2259 = vmatprep.mubr.bf16.mxu0 0
    %2260 = vmatmul.mubr.bf16.gmra.mrb[0].mxu0 %v2222
    %v2261 = vpop.f32.mrb[0].mxu0
    %v2262 = vadd.f32 %v2194, %v2261
    %v2263 = vpop.f32.mrb[0].mxu0
    %v2264 = vpop.f32.mrb[0].mxu0
    %v2265 = vadd.f32 %v2199, %v2264
    %v2266 = vpop.f32.mrb[0].mxu0
    %2267 = vmatprep.mubr.bf16.mxu0 0
    %2268 = vmatmul.mubr.bf16.gmra.mrb[0].mxu0 %v2225
    %v2269 = vpop.f32.mrb[0].mxu0
    %v2270 = vadd.f32 %v2204, %v2269
    %v2271 = vpop.f32.mrb[0].mxu0
    %v2272 = vpop.f32.mrb[0].mxu0
    %v2273 = vadd.f32 %v2209, %v2272
    %v2274 = vpop.f32.mrb[0].mxu0
    %2275 = vdwg.mxu0
    %v2276 = vadd.f32 %v2074, %v2262
    %v2277 = vadd.f32 %v2075, %v2265
    %v2278 = vadd.f32 %v2076, %v2270
    %v2279 = vadd.f32 %v2077, %v2273
    %s2280 = scalar_lea.vmem %s7, 48
    %v2281 = vld [vmem:[%s2280] sm:$0xf]
    %v2282 = vld [vmem:[%s2280 + $0x4] sm:$0xf]
    %v2283 = vld [vmem:[%s2280 + $0x8] sm:$0xf]
    %v2284 = vld [vmem:[%s2280 + $0xc] sm:$0xf]
    %v2285 = vpack.c.bf16 %v2277, %v2276
    %v2286 = vpack.c.bf16 %v2279, %v2278
    %s2287 = scalar_lea.vmem %s8, 96
    %v2288 = vld [vmem:[%s2287] sm:$0xff]
    %v2289 = vld [vmem:[%s2287 + $0x8] sm:$0xff]
    %v2290 = vld [vmem:[%s2287 + $0x10] sm:$0xff]
    %v2291 = vld [vmem:[%s2287 + $0x18] sm:$0xff]
    %2293 = vset.pattern.permute.xlu0 0
    %2294 = vperm.xlu0 %2293, %v2288
    %v2295 = vpop.permute.xlu0 %2294
    %2298 = vset.pattern.permute.xlu0 0
    %2299 = vperm.xlu0 %2298, %v2289
    %v2300 = vpop.permute.xlu0 %2299
    %2303 = vset.pattern.permute.xlu0 0
    %2304 = vperm.xlu0 %2303, %v2290
    %v2305 = vpop.permute.xlu0 %2304
    %2308 = vset.pattern.permute.xlu0 0
    %2309 = vperm.xlu0 %2308, %v2291
    %v2310 = vpop.permute.xlu0 %2309
    %v2316 = vunpack.c.l.b16 %v2281
    %v2317 = vunpack.c.l.b16 %v2282
    %v2318 = vunpack.c.l.b16 %v2283
    %v2319 = vunpack.c.l.b16 %v2284
    %v2320 = vpack.c.b16 %v2317, %v2316
    %v2321 = vpack.c.b16 %v2319, %v2318
    %v2323 = vsel %vm204, %v2320, 0
    %v2326 = vsel %vm204, %v2321, 0
    %2328 = vmatprep.subr.bf16.mxu0 0
    %2329 = vmatpush1.bf16.msra.mxu0 %v2285
    %2330 = vmatprep.subr.bf16.mxu0 0
    %2331 = vmatpush1.bf16.msra.mxu0 %v2286
    %2332 = vmatprep.subr.bf16.mxu0 0
    %2333 = vmatpush1.bf16.msra.mxu0 0
    %2334 = vmatprep.subr.bf16.mxu0 0
    %2335 = vmatpush1.bf16.msra.mxu0 0
    %2336 = vmatprep.subr.bf16.mxu0 0
    %2337 = vmatpush1.bf16.msra.mxu0 0
    %2338 = vmatprep.subr.bf16.mxu0 0
    %2339 = vmatpush1.bf16.msra.mxu0 0
    %2340 = vmatprep.subr.bf16.mxu0 0
    %2341 = vmatpush1.bf16.msra.mxu0 0
    %2342 = vmatprep.subr.bf16.mxu0 0
    %2343 = vmatpush1.bf16.msra.mxu0 0
    %2344 = vmatprep.subr.bf16.mxu0 0
    %2345 = vmatpush1.bf16.msra.mxu0 0
    %2346 = vmatprep.subr.bf16.mxu0 0
    %2347 = vmatpush1.bf16.msra.mxu0 0
    %2348 = vmatprep.subr.bf16.mxu0 0
    %2349 = vmatpush1.bf16.msra.mxu0 0
    %2350 = vmatprep.subr.bf16.mxu0 0
    %2351 = vmatpush1.bf16.msra.mxu0 0
    %2352 = vmatprep.subr.bf16.mxu0 0
    %2353 = vmatpush1.bf16.msra.mxu0 0
    %2354 = vmatprep.subr.bf16.mxu0 0
    %2355 = vmatpush1.bf16.msra.mxu0 0
    %2356 = vmatprep.subr.bf16.mxu0 0
    %2357 = vmatpush1.bf16.msra.mxu0 0
    %2358 = vmatprep.subr.bf16.mxu0 0
    %2359 = vmatpush1.bf16.msra.mxu0 0
    %2360 = vmatprep.mubr.bf16.mxu0 0
    %2361 = vmatmul.mubr.bf16.gmra.mrb[0].mxu0 %v2323
    %v2362 = vpop.f32.mrb[0].mxu0
    %v2363 = vadd.f32 %v2295, %v2362
    %v2364 = vpop.f32.mrb[0].mxu0
    %v2365 = vpop.f32.mrb[0].mxu0
    %v2366 = vadd.f32 %v2300, %v2365
    %v2367 = vpop.f32.mrb[0].mxu0
    %2368 = vmatprep.mubr.bf16.mxu0 0
    %2369 = vmatmul.mubr.bf16.gmra.mrb[0].mxu0 %v2326
    %v2370 = vpop.f32.mrb[0].mxu0
    %v2371 = vadd.f32 %v2305, %v2370
    %v2372 = vpop.f32.mrb[0].mxu0
    %v2373 = vpop.f32.mrb[0].mxu0
    %v2374 = vadd.f32 %v2310, %v2373
    %v2375 = vpop.f32.mrb[0].mxu0
    %2376 = vdwg.mxu0
    %v2377 = vmax.f32 %v2363, 0.0
    %v2378 = vmax.f32 %v2366, 0.0
    %v2379 = vmax.f32 %v2371, 0.0
    %v2380 = vmax.f32 %v2374, 0.0
    %s2381 = scalar_lea.vmem %s9, 48
    %v2382 = vld [vmem:[%s2381] sm:$0xf]
    %v2383 = vld [vmem:[%s2381 + $0x4] sm:$0xf]
    %v2384 = vld [vmem:[%s2381 + $0x8] sm:$0xf]
    %v2385 = vld [vmem:[%s2381 + $0xc] sm:$0xf]
    %v2386 = vpack.c.bf16 %v2378, %v2377
    %v2387 = vpack.c.bf16 %v2380, %v2379
    %s2388 = scalar_lea.vmem %s10, 96
    %v2389 = vld [vmem:[%s2388] sm:$0xff]
    %v2390 = vld [vmem:[%s2388 + $0x8] sm:$0xff]
    %v2391 = vld [vmem:[%s2388 + $0x10] sm:$0xff]
    %v2392 = vld [vmem:[%s2388 + $0x18] sm:$0xff]
    %2394 = vset.pattern.permute.xlu0 0
    %2395 = vperm.xlu0 %2394, %v2389
    %v2396 = vpop.permute.xlu0 %2395
    %2399 = vset.pattern.permute.xlu0 0
    %2400 = vperm.xlu0 %2399, %v2390
    %v2401 = vpop.permute.xlu0 %2400
    %2404 = vset.pattern.permute.xlu0 0
    %2405 = vperm.xlu0 %2404, %v2391
    %v2406 = vpop.permute.xlu0 %2405
    %2409 = vset.pattern.permute.xlu0 0
    %2410 = vperm.xlu0 %2409, %v2392
    %v2411 = vpop.permute.xlu0 %2410
    %v2417 = vunpack.c.l.b16 %v2382
    %v2418 = vunpack.c.l.b16 %v2383
    %v2419 = vunpack.c.l.b16 %v2384
    %v2420 = vunpack.c.l.b16 %v2385
    %v2421 = vpack.c.b16 %v2418, %v2417
    %v2422 = vpack.c.b16 %v2420, %v2419
    %v2424 = vsel %vm204, %v2421, 0
    %v2427 = vsel %vm204, %v2422, 0
    %2429 = vmatprep.subr.bf16.mxu0 0
    %2430 = vmatpush1.bf16.msra.mxu0 %v2386
    %2431 = vmatprep.subr.bf16.mxu0 0
    %2432 = vmatpush1.bf16.msra.mxu0 %v2387
    %2433 = vmatprep.subr.bf16.mxu0 0
    %2434 = vmatpush1.bf16.msra.mxu0 0
    %2435 = vmatprep.subr.bf16.mxu0 0
    %2436 = vmatpush1.bf16.msra.mxu0 0
    %2437 = vmatprep.subr.bf16.mxu0 0
    %2438 = vmatpush1.bf16.msra.mxu0 0
    %2439 = vmatprep.subr.bf16.mxu0 0
    %2440 = vmatpush1.bf16.msra.mxu0 0
    %2441 = vmatprep.subr.bf16.mxu0 0
    %2442 = vmatpush1.bf16.msra.mxu0 0
    %2443 = vmatprep.subr.bf16.mxu0 0
    %2444 = vmatpush1.bf16.msra.mxu0 0
    %2445 = vmatprep.subr.bf16.mxu0 0
    %2446 = vmatpush1.bf16.msra.mxu0 0
    %2447 = vmatprep.subr.bf16.mxu0 0
    %2448 = vmatpush1.bf16.msra.mxu0 0
    %2449 = vmatprep.subr.bf16.mxu0 0
    %2450 = vmatpush1.bf16.msra.mxu0 0
    %2451 = vmatprep.subr.bf16.mxu0 0
    %2452 = vmatpush1.bf16.msra.mxu0 0
    %2453 = vmatprep.subr.bf16.mxu0 0
    %2454 = vmatpush1.bf16.msra.mxu0 0
    %2455 = vmatprep.subr.bf16.mxu0 0
    %2456 = vmatpush1.bf16.msra.mxu0 0
    %2457 = vmatprep.subr.bf16.mxu0 0
    %2458 = vmatpush1.bf16.msra.mxu0 0
    %2459 = vmatprep.subr.bf16.mxu0 0
    %2460 = vmatpush1.bf16.msra.mxu0 0
    %2461 = vmatprep.mubr.bf16.mxu0 0
    %2462 = vmatmul.mubr.bf16.gmra.mrb[0].mxu0 %v2424
    %v2463 = vpop.f32.mrb[0].mxu0
    %v2464 = vadd.f32 %v2396, %v2463
    %v2465 = vpop.f32.mrb[0].mxu0
    %v2466 = vpop.f32.mrb[0].mxu0
    %v2467 = vadd.f32 %v2401, %v2466
    %v2468 = vpop.f32.mrb[0].mxu0
    %2469 = vmatprep.mubr.bf16.mxu0 0
    %2470 = vmatmul.mubr.bf16.gmra.mrb[0].mxu0 %v2427
    %v2471 = vpop.f32.mrb[0].mxu0
    %v2472 = vadd.f32 %v2406, %v2471
    %v2473 = vpop.f32.mrb[0].mxu0
    %v2474 = vpop.f32.mrb[0].mxu0
    %v2475 = vadd.f32 %v2411, %v2474
    %v2476 = vpop.f32.mrb[0].mxu0
    %2477 = vdwg.mxu0
    %v2478 = vadd.f32 %v2276, %v2464
    %v2479 = vadd.f32 %v2277, %v2467
    %v2480 = vadd.f32 %v2278, %v2472
    %v2481 = vadd.f32 %v2279, %v2475
    %s2482 = scalar_lea.vmem %s7, 64
    %v2483 = vld [vmem:[%s2482] sm:$0xf]
    %v2484 = vld [vmem:[%s2482 + $0x4] sm:$0xf]
    %v2485 = vld [vmem:[%s2482 + $0x8] sm:$0xf]
    %v2486 = vld [vmem:[%s2482 + $0xc] sm:$0xf]
    %v2487 = vpack.c.bf16 %v2479, %v2478
    %v2488 = vpack.c.bf16 %v2481, %v2480
    %s2489 = scalar_lea.vmem %s8, 128
    %v2490 = vld [vmem:[%s2489] sm:$0xff]
    %v2491 = vld [vmem:[%s2489 + $0x8] sm:$0xff]
    %v2492 = vld [vmem:[%s2489 + $0x10] sm:$0xff]
    %v2493 = vld [vmem:[%s2489 + $0x18] sm:$0xff]
    %2495 = vset.pattern.permute.xlu0 0
    %2496 = vperm.xlu0 %2495, %v2490
    %v2497 = vpop.permute.xlu0 %2496
    %2500 = vset.pattern.permute.xlu0 0
    %2501 = vperm.xlu0 %2500, %v2491
    %v2502 = vpop.permute.xlu0 %2501
    %2505 = vset.pattern.permute.xlu0 0
    %2506 = vperm.xlu0 %2505, %v2492
    %v2507 = vpop.permute.xlu0 %2506
    %2510 = vset.pattern.permute.xlu0 0
    %2511 = vperm.xlu0 %2510, %v2493
    %v2512 = vpop.permute.xlu0 %2511
    %v2518 = vunpack.c.l.b16 %v2483
    %v2519 = vunpack.c.l.b16 %v2484
    %v2520 = vunpack.c.l.b16 %v2485
    %v2521 = vunpack.c.l.b16 %v2486
    %v2522 = vpack.c.b16 %v2519, %v2518
    %v2523 = vpack.c.b16 %v2521, %v2520
    %v2525 = vsel %vm204, %v2522, 0
    %v2528 = vsel %vm204, %v2523, 0
    %2530 = vmatprep.subr.bf16.mxu0 0
    %2531 = vmatpush1.bf16.msra.mxu0 %v2487
    %2532 = vmatprep.subr.bf16.mxu0 0
    %2533 = vmatpush1.bf16.msra.mxu0 %v2488
    %2534 = vmatprep.subr.bf16.mxu0 0
    %2535 = vmatpush1.bf16.msra.mxu0 0
    %2536 = vmatprep.subr.bf16.mxu0 0
    %2537 = vmatpush1.bf16.msra.mxu0 0
    %2538 = vmatprep.subr.bf16.mxu0 0
    %2539 = vmatpush1.bf16.msra.mxu0 0
    %2540 = vmatprep.subr.bf16.mxu0 0
    %2541 = vmatpush1.bf16.msra.mxu0 0
    %2542 = vmatprep.subr.bf16.mxu0 0
    %2543 = vmatpush1.bf16.msra.mxu0 0
    %2544 = vmatprep.subr.bf16.mxu0 0
    %2545 = vmatpush1.bf16.msra.mxu0 0
    %2546 = vmatprep.subr.bf16.mxu0 0
    %2547 = vmatpush1.bf16.msra.mxu0 0
    %2548 = vmatprep.subr.bf16.mxu0 0
    %2549 = vmatpush1.bf16.msra.mxu0 0
    %2550 = vmatprep.subr.bf16.mxu0 0
    %2551 = vmatpush1.bf16.msra.mxu0 0
    %2552 = vmatprep.subr.bf16.mxu0 0
    %2553 = vmatpush1.bf16.msra.mxu0 0
    %2554 = vmatprep.subr.bf16.mxu0 0
    %2555 = vmatpush1.bf16.msra.mxu0 0
    %2556 = vmatprep.subr.bf16.mxu0 0
    %2557 = vmatpush1.bf16.msra.mxu0 0
    %2558 = vmatprep.subr.bf16.mxu0 0
    %2559 = vmatpush1.bf16.msra.mxu0 0
    %2560 = vmatprep.subr.bf16.mxu0 0
    %2561 = vmatpush1.bf16.msra.mxu0 0
    %2562 = vmatprep.mubr.bf16.mxu0 0
    %2563 = vmatmul.mubr.bf16.gmra.mrb[0].mxu0 %v2525
    %v2564 = vpop.f32.mrb[0].mxu0
    %v2565 = vadd.f32 %v2497, %v2564
    %v2566 = vpop.f32.mrb[0].mxu0
    %v2567 = vpop.f32.mrb[0].mxu0
    %v2568 = vadd.f32 %v2502, %v2567
    %v2569 = vpop.f32.mrb[0].mxu0
    %2570 = vmatprep.mubr.bf16.mxu0 0
    %2571 = vmatmul.mubr.bf16.gmra.mrb[0].mxu0 %v2528
    %v2572 = vpop.f32.mrb[0].mxu0
    %v2573 = vadd.f32 %v2507, %v2572
    %v2574 = vpop.f32.mrb[0].mxu0
    %v2575 = vpop.f32.mrb[0].mxu0
    %v2576 = vadd.f32 %v2512, %v2575
    %v2577 = vpop.f32.mrb[0].mxu0
    %2578 = vdwg.mxu0
    %v2579 = vmax.f32 %v2565, 0.0
    %v2580 = vmax.f32 %v2568, 0.0
    %v2581 = vmax.f32 %v2573, 0.0
    %v2582 = vmax.f32 %v2576, 0.0
    %s2583 = scalar_lea.vmem %s9, 64
    %v2584 = vld [vmem:[%s2583] sm:$0xf]
    %v2585 = vld [vmem:[%s2583 + $0x4] sm:$0xf]
    %v2586 = vld [vmem:[%s2583 + $0x8] sm:$0xf]
    %v2587 = vld [vmem:[%s2583 + $0xc] sm:$0xf]
    %v2588 = vpack.c.bf16 %v2580, %v2579
    %v2589 = vpack.c.bf16 %v2582, %v2581
    %s2590 = scalar_lea.vmem %s10, 128
    %v2591 = vld [vmem:[%s2590] sm:$0xff]
    %v2592 = vld [vmem:[%s2590 + $0x8] sm:$0xff]
    %v2593 = vld [vmem:[%s2590 + $0x10] sm:$0xff]
    %v2594 = vld [vmem:[%s2590 + $0x18] sm:$0xff]
    %2596 = vset.pattern.permute.xlu0 0
    %2597 = vperm.xlu0 %2596, %v2591
    %v2598 = vpop.permute.xlu0 %2597
    %2601 = vset.pattern.permute.xlu0 0
    %2602 = vperm.xlu0 %2601, %v2592
    %v2603 = vpop.permute.xlu0 %2602
    %2606 = vset.pattern.permute.xlu0 0
    %2607 = vperm.xlu0 %2606, %v2593
    %v2608 = vpop.permute.xlu0 %2607
    %2611 = vset.pattern.permute.xlu0 0
    %2612 = vperm.xlu0 %2611, %v2594
    %v2613 = vpop.permute.xlu0 %2612
    %v2619 = vunpack.c.l.b16 %v2584
    %v2620 = vunpack.c.l.b16 %v2585
    %v2621 = vunpack.c.l.b16 %v2586
    %v2622 = vunpack.c.l.b16 %v2587
    %v2623 = vpack.c.b16 %v2620, %v2619
    %v2624 = vpack.c.b16 %v2622, %v2621
    %v2626 = vsel %vm204, %v2623, 0
    %v2629 = vsel %vm204, %v2624, 0
    %2631 = vmatprep.subr.bf16.mxu0 0
    %2632 = vmatpush1.bf16.msra.mxu0 %v2588
    %2633 = vmatprep.subr.bf16.mxu0 0
    %2634 = vmatpush1.bf16.msra.mxu0 %v2589
    %2635 = vmatprep.subr.bf16.mxu0 0
    %2636 = vmatpush1.bf16.msra.mxu0 0
    %2637 = vmatprep.subr.bf16.mxu0 0
    %2638 = vmatpush1.bf16.msra.mxu0 0
    %2639 = vmatprep.subr.bf16.mxu0 0
    %2640 = vmatpush1.bf16.msra.mxu0 0
    %2641 = vmatprep.subr.bf16.mxu0 0
    %2642 = vmatpush1.bf16.msra.mxu0 0
    %2643 = vmatprep.subr.bf16.mxu0 0
    %2644 = vmatpush1.bf16.msra.mxu0 0
    %2645 = vmatprep.subr.bf16.mxu0 0
    %2646 = vmatpush1.bf16.msra.mxu0 0
    %2647 = vmatprep.subr.bf16.mxu0 0
    %2648 = vmatpush1.bf16.msra.mxu0 0
    %2649 = vmatprep.subr.bf16.mxu0 0
    %2650 = vmatpush1.bf16.msra.mxu0 0
    %2651 = vmatprep.subr.bf16.mxu0 0
    %2652 = vmatpush1.bf16.msra.mxu0 0
    %2653 = vmatprep.subr.bf16.mxu0 0
    %2654 = vmatpush1.bf16.msra.mxu0 0
    %2655 = vmatprep.subr.bf16.mxu0 0
    %2656 = vmatpush1.bf16.msra.mxu0 0
    %2657 = vmatprep.subr.bf16.mxu0 0
    %2658 = vmatpush1.bf16.msra.mxu0 0
    %2659 = vmatprep.subr.bf16.mxu0 0
    %2660 = vmatpush1.bf16.msra.mxu0 0
    %2661 = vmatprep.subr.bf16.mxu0 0
    %2662 = vmatpush1.bf16.msra.mxu0 0
    %2663 = vmatprep.mubr.bf16.mxu0 0
    %2664 = vmatmul.mubr.bf16.gmra.mrb[0].mxu0 %v2626
    %v2665 = vpop.f32.mrb[0].mxu0
    %v2666 = vadd.f32 %v2598, %v2665
    %v2667 = vpop.f32.mrb[0].mxu0
    %v2668 = vpop.f32.mrb[0].mxu0
    %v2669 = vadd.f32 %v2603, %v2668
    %v2670 = vpop.f32.mrb[0].mxu0
    %2671 = vmatprep.mubr.bf16.mxu0 0
    %2672 = vmatmul.mubr.bf16.gmra.mrb[0].mxu0 %v2629
    %v2673 = vpop.f32.mrb[0].mxu0
    %v2674 = vadd.f32 %v2608, %v2673
    %v2675 = vpop.f32.mrb[0].mxu0
    %v2676 = vpop.f32.mrb[0].mxu0
    %v2677 = vadd.f32 %v2613, %v2676
    %v2678 = vpop.f32.mrb[0].mxu0
    %2679 = vdwg.mxu0
    %v2680 = vadd.f32 %v2478, %v2666
    %v2681 = vadd.f32 %v2479, %v2669
    %v2682 = vadd.f32 %v2480, %v2674
    %v2683 = vadd.f32 %v2481, %v2677
    %s2684 = scalar_lea.vmem %s7, 80
    %v2685 = vld [vmem:[%s2684] sm:$0xf]
    %v2686 = vld [vmem:[%s2684 + $0x4] sm:$0xf]
    %v2687 = vld [vmem:[%s2684 + $0x8] sm:$0xf]
    %v2688 = vld [vmem:[%s2684 + $0xc] sm:$0xf]
    %v2689 = vpack.c.bf16 %v2681, %v2680
    %v2690 = vpack.c.bf16 %v2683, %v2682
    %s2691 = scalar_lea.vmem %s8, 160
    %v2692 = vld [vmem:[%s2691] sm:$0xff]
    %v2693 = vld [vmem:[%s2691 + $0x8] sm:$0xff]
    %v2694 = vld [vmem:[%s2691 + $0x10] sm:$0xff]
    %v2695 = vld [vmem:[%s2691 + $0x18] sm:$0xff]
    %2697 = vset.pattern.permute.xlu0 0
    %2698 = vperm.xlu0 %2697, %v2692
    %v2699 = vpop.permute.xlu0 %2698
    %2702 = vset.pattern.permute.xlu0 0
    %2703 = vperm.xlu0 %2702, %v2693
    %v2704 = vpop.permute.xlu0 %2703
    %2707 = vset.pattern.permute.xlu0 0
    %2708 = vperm.xlu0 %2707, %v2694
    %v2709 = vpop.permute.xlu0 %2708
    %2712 = vset.pattern.permute.xlu0 0
    %2713 = vperm.xlu0 %2712, %v2695
    %v2714 = vpop.permute.xlu0 %2713
    %v2720 = vunpack.c.l.b16 %v2685
    %v2721 = vunpack.c.l.b16 %v2686
    %v2722 = vunpack.c.l.b16 %v2687
    %v2723 = vunpack.c.l.b16 %v2688
    %v2724 = vpack.c.b16 %v2721, %v2720
    %v2725 = vpack.c.b16 %v2723, %v2722
    %v2727 = vsel %vm204, %v2724, 0
    %v2730 = vsel %vm204, %v2725, 0
    %2732 = vmatprep.subr.bf16.mxu0 0
    %2733 = vmatpush1.bf16.msra.mxu0 %v2689
    %2734 = vmatprep.subr.bf16.mxu0 0
    %2735 = vmatpush1.bf16.msra.mxu0 %v2690
    %2736 = vmatprep.subr.bf16.mxu0 0
    %2737 = vmatpush1.bf16.msra.mxu0 0
    %2738 = vmatprep.subr.bf16.mxu0 0
    %2739 = vmatpush1.bf16.msra.mxu0 0
    %2740 = vmatprep.subr.bf16.mxu0 0
    %2741 = vmatpush1.bf16.msra.mxu0 0
    %2742 = vmatprep.subr.bf16.mxu0 0
    %2743 = vmatpush1.bf16.msra.mxu0 0
    %2744 = vmatprep.subr.bf16.mxu0 0
    %2745 = vmatpush1.bf16.msra.mxu0 0
    %2746 = vmatprep.subr.bf16.mxu0 0
    %2747 = vmatpush1.bf16.msra.mxu0 0
    %2748 = vmatprep.subr.bf16.mxu0 0
    %2749 = vmatpush1.bf16.msra.mxu0 0
    %2750 = vmatprep.subr.bf16.mxu0 0
    %2751 = vmatpush1.bf16.msra.mxu0 0
    %2752 = vmatprep.subr.bf16.mxu0 0
    %2753 = vmatpush1.bf16.msra.mxu0 0
    %2754 = vmatprep.subr.bf16.mxu0 0
    %2755 = vmatpush1.bf16.msra.mxu0 0
    %2756 = vmatprep.subr.bf16.mxu0 0
    %2757 = vmatpush1.bf16.msra.mxu0 0
    %2758 = vmatprep.subr.bf16.mxu0 0
    %2759 = vmatpush1.bf16.msra.mxu0 0
    %2760 = vmatprep.subr.bf16.mxu0 0
    %2761 = vmatpush1.bf16.msra.mxu0 0
    %2762 = vmatprep.subr.bf16.mxu0 0
    %2763 = vmatpush1.bf16.msra.mxu0 0
    %2764 = vmatprep.mubr.bf16.mxu0 0
    %2765 = vmatmul.mubr.bf16.gmra.mrb[0].mxu0 %v2727
    %v2766 = vpop.f32.mrb[0].mxu0
    %v2767 = vadd.f32 %v2699, %v2766
    %v2768 = vpop.f32.mrb[0].mxu0
    %v2769 = vpop.f32.mrb[0].mxu0
    %v2770 = vadd.f32 %v2704, %v2769
    %v2771 = vpop.f32.mrb[0].mxu0
    %2772 = vmatprep.mubr.bf16.mxu0 0
    %2773 = vmatmul.mubr.bf16.gmra.mrb[0].mxu0 %v2730
    %v2774 = vpop.f32.mrb[0].mxu0
    %v2775 = vadd.f32 %v2709, %v2774
    %v2776 = vpop.f32.mrb[0].mxu0
    %v2777 = vpop.f32.mrb[0].mxu0
    %v2778 = vadd.f32 %v2714, %v2777
    %v2779 = vpop.f32.mrb[0].mxu0
    %2780 = vdwg.mxu0
    %v2781 = vmax.f32 %v2767, 0.0
    %v2782 = vmax.f32 %v2770, 0.0
    %v2783 = vmax.f32 %v2775, 0.0
    %v2784 = vmax.f32 %v2778, 0.0
    %s2785 = scalar_lea.vmem %s9, 80
    %v2786 = vld [vmem:[%s2785] sm:$0xf]
    %v2787 = vld [vmem:[%s2785 + $0x4] sm:$0xf]
    %v2788 = vld [vmem:[%s2785 + $0x8] sm:$0xf]
    %v2789 = vld [vmem:[%s2785 + $0xc] sm:$0xf]
    %v2790 = vpack.c.bf16 %v2782, %v2781
    %v2791 = vpack.c.bf16 %v2784, %v2783
    %s2792 = scalar_lea.vmem %s10, 160
    %v2793 = vld [vmem:[%s2792] sm:$0xff]
    %v2794 = vld [vmem:[%s2792 + $0x8] sm:$0xff]
    %v2795 = vld [vmem:[%s2792 + $0x10] sm:$0xff]
    %v2796 = vld [vmem:[%s2792 + $0x18] sm:$0xff]
    %2798 = vset.pattern.permute.xlu0 0
    %2799 = vperm.xlu0 %2798, %v2793
    %v2800 = vpop.permute.xlu0 %2799
    %2803 = vset.pattern.permute.xlu0 0
    %2804 = vperm.xlu0 %2803, %v2794
    %v2805 = vpop.permute.xlu0 %2804
    %2808 = vset.pattern.permute.xlu0 0
    %2809 = vperm.xlu0 %2808, %v2795
    %v2810 = vpop.permute.xlu0 %2809
    %2813 = vset.pattern.permute.xlu0 0
    %2814 = vperm.xlu0 %2813, %v2796
    %v2815 = vpop.permute.xlu0 %2814
    %v2821 = vunpack.c.l.b16 %v2786
    %v2822 = vunpack.c.l.b16 %v2787
    %v2823 = vunpack.c.l.b16 %v2788
    %v2824 = vunpack.c.l.b16 %v2789
    %v2825 = vpack.c.b16 %v2822, %v2821
    %v2826 = vpack.c.b16 %v2824, %v2823
    %v2828 = vsel %vm204, %v2825, 0
    %v2831 = vsel %vm204, %v2826, 0
    %2833 = vmatprep.subr.bf16.mxu0 0
    %2834 = vmatpush1.bf16.msra.mxu0 %v2790
    %2835 = vmatprep.subr.bf16.mxu0 0
    %2836 = vmatpush1.bf16.msra.mxu0 %v2791
    %2837 = vmatprep.subr.bf16.mxu0 0
    %2838 = vmatpush1.bf16.msra.mxu0 0
    %2839 = vmatprep.subr.bf16.mxu0 0
    %2840 = vmatpush1.bf16.msra.mxu0 0
    %2841 = vmatprep.subr.bf16.mxu0 0
    %2842 = vmatpush1.bf16.msra.mxu0 0
    %2843 = vmatprep.subr.bf16.mxu0 0
    %2844 = vmatpush1.bf16.msra.mxu0 0
    %2845 = vmatprep.subr.bf16.mxu0 0
    %2846 = vmatpush1.bf16.msra.mxu0 0
    %2847 = vmatprep.subr.bf16.mxu0 0
    %2848 = vmatpush1.bf16.msra.mxu0 0
    %2849 = vmatprep.subr.bf16.mxu0 0
    %2850 = vmatpush1.bf16.msra.mxu0 0
    %2851 = vmatprep.subr.bf16.mxu0 0
    %2852 = vmatpush1.bf16.msra.mxu0 0
    %2853 = vmatprep.subr.bf16.mxu0 0
    %2854 = vmatpush1.bf16.msra.mxu0 0
    %2855 = vmatprep.subr.bf16.mxu0 0
    %2856 = vmatpush1.bf16.msra.mxu0 0
    %2857 = vmatprep.subr.bf16.mxu0 0
    %2858 = vmatpush1.bf16.msra.mxu0 0
    %2859 = vmatprep.subr.bf16.mxu0 0
    %2860 = vmatpush1.bf16.msra.mxu0 0
    %2861 = vmatprep.subr.bf16.mxu0 0
    %2862 = vmatpush1.bf16.msra.mxu0 0
    %2863 = vmatprep.subr.bf16.mxu0 0
    %2864 = vmatpush1.bf16.msra.mxu0 0
    %2865 = vmatprep.mubr.bf16.mxu0 0
    %2866 = vmatmul.mubr.bf16.gmra.mrb[0].mxu0 %v2828
    %v2867 = vpop.f32.mrb[0].mxu0
    %v2868 = vadd.f32 %v2800, %v2867
    %v2869 = vpop.f32.mrb[0].mxu0
    %v2870 = vpop.f32.mrb[0].mxu0
    %v2871 = vadd.f32 %v2805, %v2870
    %v2872 = vpop.f32.mrb[0].mxu0
    %2873 = vmatprep.mubr.bf16.mxu0 0
    %2874 = vmatmul.mubr.bf16.gmra.mrb[0].mxu0 %v2831
    %v2875 = vpop.f32.mrb[0].mxu0
    %v2876 = vadd.f32 %v2810, %v2875
    %v2877 = vpop.f32.mrb[0].mxu0
    %v2878 = vpop.f32.mrb[0].mxu0
    %v2879 = vadd.f32 %v2815, %v2878
    %v2880 = vpop.f32.mrb[0].mxu0
    %2881 = vdwg.mxu0
    %v2882 = vadd.f32 %v2680, %v2868
    %v2883 = vadd.f32 %v2681, %v2871
    %v2884 = vadd.f32 %v2682, %v2876
    %v2885 = vadd.f32 %v2683, %v2879
    %v2886 = vld [vmem:[%s11] sm:$0xf]
    %v2887 = vpack.c.bf16 %v2883, %v2882
    %v2888 = vpack.c.bf16 %v2885, %v2884
    %v2889 = vld [vmem:[%s12] sm:$0xff]
    %2891 = vset.pattern.permute.xlu0 0
    %2892 = vperm.xlu0 %2891, %v2889
    %v2893 = vpop.permute.xlu0 %2892
    %v2896 = vsel %vm204, %v2886, 0
    %2898 = vmatprep.subr.bf16.mxu0 0
    %2899 = vmatpush1.bf16.msra.mxu0 %v2887
    %2900 = vmatprep.subr.bf16.mxu0 0
    %2901 = vmatpush1.bf16.msra.mxu0 %v2888
    %2902 = vmatprep.subr.bf16.mxu0 0
    %2903 = vmatpush1.bf16.msra.mxu0 0
    %2904 = vmatprep.subr.bf16.mxu0 0
    %2905 = vmatpush1.bf16.msra.mxu0 0
    %2906 = vmatprep.subr.bf16.mxu0 0
    %2907 = vmatpush1.bf16.msra.mxu0 0
    %2908 = vmatprep.subr.bf16.mxu0 0
    %2909 = vmatpush1.bf16.msra.mxu0 0
    %2910 = vmatprep.subr.bf16.mxu0 0
    %2911 = vmatpush1.bf16.msra.mxu0 0
    %2912 = vmatprep.subr.bf16.mxu0 0
    %2913 = vmatpush1.bf16.msra.mxu0 0
    %2914 = vmatprep.subr.bf16.mxu0 0
    %2915 = vmatpush1.bf16.msra.mxu0 0
    %2916 = vmatprep.subr.bf16.mxu0 0
    %2917 = vmatpush1.bf16.msra.mxu0 0
    %2918 = vmatprep.subr.bf16.mxu0 0
    %2919 = vmatpush1.bf16.msra.mxu0 0
    %2920 = vmatprep.subr.bf16.mxu0 0
    %2921 = vmatpush1.bf16.msra.mxu0 0
    %2922 = vmatprep.subr.bf16.mxu0 0
    %2923 = vmatpush1.bf16.msra.mxu0 0
    %2924 = vmatprep.subr.bf16.mxu0 0
    %2925 = vmatpush1.bf16.msra.mxu0 0
    %2926 = vmatprep.subr.bf16.mxu0 0
    %2927 = vmatpush1.bf16.msra.mxu0 0
    %2928 = vmatprep.subr.bf16.mxu0 0
    %2929 = vmatpush1.bf16.msra.mxu0 0
    %2930 = vmatprep.mubr.bf16.mxu0 0
    %2931 = vmatmul.mubr.bf16.gmra.mrb[0].mxu0 %v2896
    %v2932 = vpop.f32.mrb[0].mxu0
    %v2933 = vadd.f32 %v2893, %v2932
    %v2934 = vpop.f32.mrb[0].mxu0
    %v2935 = vpop.f32.mrb[0].mxu0
    %v2936 = vpop.f32.mrb[0].mxu0
    %2937 = vdwg.mxu0
    %2938 = vst.msk [vmem:[#allocation2] sm:$0xff] %vm204, %v2933
    // Predicated region
    $region54: #{tpu_custom_call.1} parent=1 // pred_check
      _
    $region55: #{tpu_custom_call.1} parent=1 // pred_check_branch
      %2940 = sbr.rel (0) target = $region57
    $region56: #{tpu_custom_call.1} parent=1 // pred_region
      %s2942 = ssub.s32 128, 128
      %2943 = vsyncadd [#allocation3], %s2942
      %s2945 = sshll.u32 [#allocation2], 4
      %s2946 = int_to_ptr.vmem [resolvable:$true] %s2945
      %2948 = dma.vmem_to_hbm [thread:$0]  %s2946, 128, %s13, [#allocation3]
    $region57: #{tpu_custom_call.1} parent=1 // pred_fallthru
      _
    // Predicated region
    $region58: #{tpu_custom_call.1} parent=1 // pred_check
      _
    $region59: #{tpu_custom_call.1} parent=1 // pred_check_branch
      %2950 = sbr.rel (0) target = $region61
    $region60: #{tpu_custom_call.1} parent=1 // pred_region
      %2951 = dma.done [#allocation3], 128
    $region61: #{tpu_custom_call.1} parent=1 // pred_fallthru
      _
    %2952 = vsyncpa [#allocation3], 1

</llo_original>
